<compile_context>
chip_gen: v5e
topology: v5e:2x2
jax: 0.10.0
libtpu: 0.0.40
codegen_flags: <defaults>
</compile_context>

<pallas_src>
import functools
import math

import jax
import jax.numpy as jnp
from jax.experimental import pallas as pl
from jax.experimental.pallas import tpu as pltpu

_VMEM = pl.BlockSpec(memory_space=pltpu.MemorySpace.VMEM)


# ----------------------------- in-kernel math -------------------------------

def _stable_softplus(x):
    return jnp.maximum(x, 0.0) + jnp.log(1.0 + jnp.exp(-jnp.abs(x)))


def _mish(x):
    return x * jnp.tanh(_stable_softplus(x))


def _softmax_lastdim(x):
    x = x - jnp.max(x, axis=-1, keepdims=True)
    e = jnp.exp(x)
    return e / jnp.sum(e, axis=-1, keepdims=True)


def _layernorm(x, gamma, beta, eps=1e-5):
    mu = jnp.mean(x, axis=-1, keepdims=True)
    var = jnp.mean((x - mu) ** 2, axis=-1, keepdims=True)
    return (x - mu) * jax.lax.rsqrt(var + eps) * gamma + beta


def _dot_nt(a, b):
    """a @ b.T without materializing the transpose (contract last dims)."""
    return jax.lax.dot_general(a, b, (((1,), (1,)), ((), ())),
                               preferred_element_type=jnp.float32)


# ----------------------- fused MLP (encoder / decoder) ----------------------
# One pallas_call per 4-layer MLP: Linear+Mish x3, final Linear (Dropout is
# identity in eval mode).  Weights are bf16 (halves HBM weight traffic),
# activations and accumulation stay f32.  Optional noise input fuses
# Encoder2's additive Gaussian noise into the same kernel.

def _fused_mlp_kernel(*refs, num_layers, add_noise):
    x_ref = refs[0]
    o_ref = refs[-1]
    wb = refs[1:1 + 2 * num_layers]
    h = x_ref[...]
    for i in range(num_layers):
        w = wb[2 * i][...]
        b = wb[2 * i + 1][...]
        y = jnp.dot(h.astype(jnp.bfloat16), w,
                    preferred_element_type=jnp.float32) + b
        h = _mish(y) if i < num_layers - 1 else y
    if add_noise:
        h = h + refs[1 + 2 * num_layers][...]
    o_ref[...] = h


def fused_mlp(x, layers, extra_add=None, *, tile_rows=256):
    n, in_dim = x.shape
    out_dim = layers[-1][0].shape[1]
    tb = n if n <= tile_rows else tile_rows
    nb = pl.cdiv(n, tb)

    args = [x]
    in_specs = [pl.BlockSpec((tb, in_dim), lambda i: (i, 0))]
    for (w, b) in layers:
        args.append(w)
        in_specs.append(pl.BlockSpec(w.shape, lambda i: (0, 0)))
        args.append(b)
        in_specs.append(pl.BlockSpec(b.shape, lambda i: (0, 0)))
    add_noise = extra_add is not None
    if add_noise:
        args.append(extra_add)
        in_specs.append(pl.BlockSpec((tb, out_dim), lambda i: (i, 0)))

    kernel = functools.partial(_fused_mlp_kernel,
                               num_layers=len(layers), add_noise=add_noise)
    return pl.pallas_call(
        kernel,
        out_shape=jax.ShapeDtypeStruct((n, out_dim), jnp.float32),
        grid=(nb,),
        in_specs=in_specs,
        out_specs=pl.BlockSpec((tb, out_dim), lambda i: (i, 0)),
        compiler_params=pltpu.CompilerParams(
            dimension_semantics=("parallel",)),
    )(*args)


# -------------- fused VCF head: transformer + cluster + P -------------------
# TODO(synk): DiffFormerEncoderLayer definition unavailable; approximated as
# standard 1-head post-norm transformer encoder layers (attn + FFN + LN).

def _vcf_kernel(z_ref, wq_ref, wk_ref, wv_ref, wo_ref,
                w1_ref, b1_ref, w2_ref, b2_ref,
                g1_ref, be1_ref, g2_ref, be2_ref,
                cw_ref, cb_ref,
                feat_ref, cls_ref, p_ref, *, depth, scale):
    x = z_ref[...]
    for l in range(depth):
        xb = x.astype(jnp.bfloat16)
        q = jnp.dot(xb, wq_ref[l], preferred_element_type=jnp.float32)
        k = jnp.dot(xb, wk_ref[l], preferred_element_type=jnp.float32)
        v = jnp.dot(xb, wv_ref[l], preferred_element_type=jnp.float32)
        s = _dot_nt(q, k) * scale
        p = _softmax_lastdim(s)
        ctx = jnp.dot(p, v, preferred_element_type=jnp.float32)
        attn = jnp.dot(ctx.astype(jnp.bfloat16), wo_ref[l],
                       preferred_element_type=jnp.float32)
        h = _layernorm(x + attn, g1_ref[l], be1_ref[l])
        f = jnp.dot(h.astype(jnp.bfloat16), w1_ref[l],
                    preferred_element_type=jnp.float32) + b1_ref[l]
        f = jnp.maximum(f, 0.0)
        f = jnp.dot(f.astype(jnp.bfloat16), w2_ref[l],
                    preferred_element_type=jnp.float32) + b2_ref[l]
        x = _layernorm(h + f, g2_ref[l], be2_ref[l])
    feat_ref[...] = x
    logits = jnp.dot(x.astype(jnp.bfloat16), cw_ref[...],
                     preferred_element_type=jnp.float32) + cb_ref[...]
    cls = _softmax_lastdim(logits)
    cls_ref[...] = cls
    # target distribution P, fused in the same kernel
    w = cls * cls / jnp.sum(cls, axis=0, keepdims=True)
    p_ref[...] = w / jnp.sum(w, axis=1, keepdims=True)


def vcf_forward(zcat, params):
    tp = params["transformer"]
    depth = int(tp["wq"].shape[0])
    n, d = zcat.shape
    k = params["cluster_w"].shape[1]
    args = (zcat, tp["wq"], tp["wk"], tp["wv"], tp["wo"],
            tp["w1"], tp["b1"], tp["w2"], tp["b2"],
            tp["g1"], tp["be1"], tp["g2"], tp["be2"],
            params["cluster_w"], params["cluster_b"])
    kernel = functools.partial(_vcf_kernel, depth=depth,
                               scale=1.0 / math.sqrt(d))
    feat, cls, P = pl.pallas_call(
        kernel,
        out_shape=(jax.ShapeDtypeStruct((n, d), jnp.float32),
                   jax.ShapeDtypeStruct((n, k), jnp.float32),
                   jax.ShapeDtypeStruct((n, k), jnp.float32)),
        in_specs=[_VMEM] * len(args),
        out_specs=(_VMEM, _VMEM, _VMEM),
    )(*args)
    return feat, cls, P


# ---------------- fused soft assignment (Q and Q_drop per view) -------------

def _soft_assign_pair_kernel(z_ref, zd_ref, a_ref, q_ref, qd_ref, *, alpha):
    a = a_ref[...]
    a2t = jnp.sum(a * a, axis=-1, keepdims=True).T            # (1, K)

    def one(z):
        z2 = jnp.sum(z * z, axis=-1, keepdims=True)            # (N, 1)
        d2 = jnp.maximum(z2 + a2t - 2.0 * _dot_nt(z, a), 0.0)  # clamp fp cancel
        q = 1.0 / (1.0 + d2 / alpha)
        if alpha != 1.0:                                       # alpha==1 -> pow is identity
            q = q ** ((alpha + 1.0) / 2.0)
        return q / jnp.sum(q, axis=-1, keepdims=True)

    q_ref[...] = one(z_ref[...])
    qd_ref[...] = one(zd_ref[...])


def soft_assign_pair(z, z_drop, centers, alpha=1.0):
    n = z.shape[0]
    k = centers.shape[0]
    return pl.pallas_call(
        functools.partial(_soft_assign_pair_kernel, alpha=alpha),
        out_shape=(jax.ShapeDtypeStruct((n, k), jnp.float32),
                   jax.ShapeDtypeStruct((n, k), jnp.float32)),
        in_specs=[_VMEM, _VMEM, _VMEM],
        out_specs=(_VMEM, _VMEM),
    )(z, z_drop, centers)


# --------------------------- parameter construction -------------------------

def _init_linear(key, fan_in, fan_out):
    kw, kb = jax.random.split(key)
    bound = 1.0 / math.sqrt(fan_in)
    w = jax.random.uniform(kw, (fan_in, fan_out), jnp.float32, -bound, bound)
    b = jax.random.uniform(kb, (fan_out,), jnp.float32, -bound, bound)
    return w, b


def _init_mlp_padded(key, true_dims, pad_dims):
    """Linear stack at `true_dims`, zero-padded to 128-aligned `pad_dims`.
    Exactly equivalent math (padded rows/cols are zero and Mish(0)=0)."""
    keys = jax.random.split(key, len(true_dims) - 1)
    layers = []
    for i in range(len(true_dims) - 1):
        w, b = _init_linear(keys[i], true_dims[i], true_dims[i + 1])
        wp = jnp.zeros((pad_dims[i], pad_dims[i + 1]), jnp.float32)
        wp = wp.at[:true_dims[i], :true_dims[i + 1]].set(w)
        bp = jnp.zeros((pad_dims[i + 1],), jnp.float32)
        bp = bp.at[:true_dims[i + 1]].set(b)
        layers.append((wp.astype(jnp.bfloat16), bp.reshape(1, -1)))
    return layers


def _init_transformer_layer(key, d, hidden):
    ks = jax.random.split(key, 6)
    s = 1.0 / math.sqrt(d)
    u = lambda k, shape: jax.random.uniform(k, shape, jnp.float32, -s, s)
    w1, b1 = _init_linear(ks[4], d, hidden)
    w2, b2 = _init_linear(ks[5], hidden, d)
    return {
        "wq": u(ks[0], (d, d)).astype(jnp.bfloat16),
        "wk": u(ks[1], (d, d)).astype(jnp.bfloat16),
        "wv": u(ks[2], (d, d)).astype(jnp.bfloat16),
        "wo": u(ks[3], (d, d)).astype(jnp.bfloat16),
        "w1": w1.astype(jnp.bfloat16), "b1": b1.reshape(1, hidden),
        "w2": w2.astype(jnp.bfloat16), "b2": b2.reshape(1, d),
        "g1": jnp.ones((1, d), jnp.float32), "be1": jnp.zeros((1, d), jnp.float32),
        "g2": jnp.ones((1, d), jnp.float32), "be2": jnp.zeros((1, d), jnp.float32),
    }


def init_network(key, view, input_size, feature_dim_ls, class_num, depth):
    params = {"encoders": [], "encoders_drop": [], "decoders": [], "As": []}
    for v in range(view):
        key, k1, k2, k3, k4 = jax.random.split(key, 5)
        enc_true = [input_size[v], 500, 500, 2000, feature_dim_ls[v]]
        enc_pad = [input_size[v], 512, 512, 2048, feature_dim_ls[v]]
        dec_true = [feature_dim_ls[v], 2000, 500, 500, input_size[v]]
        dec_pad = [feature_dim_ls[v], 2048, 512, 512, input_size[v]]
        params["encoders"].append(_init_mlp_padded(k1, enc_true, enc_pad))
        params["encoders_drop"].append(_init_mlp_padded(k2, enc_true, enc_pad))
        params["decoders"].append(_init_mlp_padded(k3, dec_true, dec_pad))
        # xavier_normal_ for cluster centers A_v (kept f32)
        std = math.sqrt(2.0 / (class_num + feature_dim_ls[v]))
        params["As"].append(
            jax.random.normal(k4, (class_num, feature_dim_ls[v]), jnp.float32) * std)
    d = sum(feature_dim_ls)
    layer_dicts = []
    for _ in range(depth):
        key, kt = jax.random.split(key)
        layer_dicts.append(_init_transformer_layer(kt, d, 4 * d))
    params["transformer"] = {
        name: jnp.stack([ld[name] for ld in layer_dicts], axis=0)
        for name in layer_dicts[0]
    }
    key, kc = jax.random.split(key)
    cw, cb = _init_linear(kc, d, class_num)
    params["cluster_w"] = cw.astype(jnp.bfloat16)
    params["cluster_b"] = cb.reshape(1, class_num)
    return params


# -------------------------------- forward pass ------------------------------

def network_forward(params, X, noise, key, alpha=1.0, preTrain=False):
    view = len(X)
    Zs, X_hat, transform_Zs = [], [], []
    for v in range(view):
        Z = fused_mlp(X[v], params["encoders"][v])
        Zs.append(Z)
        X_hat.append(fused_mlp(Z, params["decoders"][v]))
    if preTrain:
        return X_hat
    for v in range(view):
        key, sub = jax.random.split(key)
        eps = jax.random.normal(sub, Zs[v].shape, jnp.float32) * noise
        Zd = fused_mlp(X[v], params["encoders_drop"][v], extra_add=eps)
        transform_Zs.append(Zd)

    Zcat = jnp.concatenate(Zs, axis=1)          # (N, sum(feature_dim_ls))
    feat, cls, P = vcf_forward(Zcat, params)

    Qs, Qs_drop = [], []
    for v in range(view):
        q, qd = soft_assign_pair(Zs[v], transform_Zs[v], params["As"][v], alpha)
        Qs.append(q)
        Qs_drop.append(qd)
    return X_hat, P, Qs, Qs_drop, cls, feat


# ------------------------------------ main -----------------------------------

if __name__ == "__main__":
    view = 2
    input_size = [32, 48]
    feature_dim_ls = [16, 16]
    class_num = 4
    depth = 1
    noise = 0.1
    batch = 8

    root = jax.random.PRNGKey(0)
    kp, kx0, kx1, kn = jax.random.split(root, 4)

    params = init_network(kp, view, input_size, feature_dim_ls, class_num, depth)
    X = [jax.random.normal(kx0, (batch, input_size[0]), jnp.float32),
         jax.random.normal(kx1, (batch, input_size[1]), jnp.float32)]

    X_hat, P, Qs, Qs_drop, cls, glb_feature = network_forward(
        params, X, noise, kn, alpha=1.0, preTrain=False)

    for t in X_hat + [P] + Qs + Qs_drop + [cls, glb_feature]:
        jax.block_until_ready(t)

    assert X_hat[0].shape == (batch, input_size[0])
    assert X_hat[1].shape == (batch, input_size[1])
    assert P.shape == (batch, class_num)
    assert cls.shape == (batch, class_num)
    assert Qs[0].shape == (batch, class_num)
    assert Qs_drop[1].shape == (batch, class_num)
    assert glb_feature.shape == (batch, sum(feature_dim_ls))

    print("KERNEL_OK")
</pallas_src>

<mosaic_0001>
module attributes {stable_mosaic.version = 11 : i64} {
  func.func @_fused_mlp_kernel(%arg0: i32, %arg1: memref<8x32xf32, #tpu.memory_space<vmem>>, %arg2: memref<32x512xbf16, #tpu.memory_space<vmem>>, %arg3: memref<1x512xf32, #tpu.memory_space<vmem>>, %arg4: memref<512x512xbf16, #tpu.memory_space<vmem>>, %arg5: memref<1x512xf32, #tpu.memory_space<vmem>>, %arg6: memref<512x2048xbf16, #tpu.memory_space<vmem>>, %arg7: memref<1x2048xf32, #tpu.memory_space<vmem>>, %arg8: memref<2048x16xbf16, #tpu.memory_space<vmem>>, %arg9: memref<1x16xf32, #tpu.memory_space<vmem>>, %arg10: memref<8x16xf32, #tpu.memory_space<vmem>>) attributes {dimension_semantics = [#tpu.dimension_semantics<parallel>], iteration_bounds = array<i64: 1>, scalar_prefetch = 0 : i64, scratch_operands = 0 : i64, tpu.core_type = #tpu.core_type<tc>, window_params = [{transform_indices = @transform_0, window_bounds = array<i64: 8, 32>}, {pipeline_mode = #tpu.pipeline_mode<synchronous>, transform_indices = @transform_1, window_bounds = array<i64: 32, 512>}, {pipeline_mode = #tpu.pipeline_mode<synchronous>, transform_indices = @transform_2, window_bounds = array<i64: 1, 512>}, {pipeline_mode = #tpu.pipeline_mode<synchronous>, transform_indices = @transform_3, window_bounds = array<i64: 512, 512>}, {pipeline_mode = #tpu.pipeline_mode<synchronous>, transform_indices = @transform_4, window_bounds = array<i64: 1, 512>}, {pipeline_mode = #tpu.pipeline_mode<synchronous>, transform_indices = @transform_5, window_bounds = array<i64: 512, 2048>}, {pipeline_mode = #tpu.pipeline_mode<synchronous>, transform_indices = @transform_6, window_bounds = array<i64: 1, 2048>}, {pipeline_mode = #tpu.pipeline_mode<synchronous>, transform_indices = @transform_7, window_bounds = array<i64: 2048, 16>}, {pipeline_mode = #tpu.pipeline_mode<synchronous>, transform_indices = @transform_8, window_bounds = array<i64: 1, 16>}, {transform_indices = @transform_9, window_bounds = array<i64: 8, 16>}]} {
    %c0 = arith.constant 0 : index
    %c0_0 = arith.constant 0 : index
    %0 = vector.load %arg1[%c0, %c0_0] : memref<8x32xf32, #tpu.memory_space<vmem>>, vector<8x32xf32>
    %c0_1 = arith.constant 0 : index
    %c0_2 = arith.constant 0 : index
    %1 = vector.load %arg2[%c0_1, %c0_2] : memref<32x512xbf16, #tpu.memory_space<vmem>>, vector<32x512xbf16>
    %c0_3 = arith.constant 0 : index
    %c0_4 = arith.constant 0 : index
    %2 = vector.load %arg3[%c0_3, %c0_4] : memref<1x512xf32, #tpu.memory_space<vmem>>, vector<1x512xf32>
    %3 = arith.truncf %0 : vector<8x32xf32> to vector<8x32xbf16>
    %cst = arith.constant dense<0.000000e+00> : vector<8x512xf32>
    %4 = tpu.matmul %3, %1, %cst {dimension_numbers = #tpu.dot_dimension_numbers<[1], [0], [0], [1], [0, 0, 1, 1], [], []>} : vector<8x32xbf16>, vector<32x512xbf16>, vector<8x512xf32> -> vector<8x512xf32>
    %5 = vector.broadcast %2 : vector<1x512xf32> to vector<8x512xf32>
    %6 = arith.addf %4, %5 : vector<8x512xf32>
    %cst_5 = arith.constant 0.000000e+00 : f32
    %7 = vector.broadcast %cst_5 : f32 to vector<8x512xf32>
    %8 = arith.maximumf %6, %7 : vector<8x512xf32>
    %9 = math.absf %6 : vector<8x512xf32>
    %cst_6 = arith.constant 0.000000e+00 : f32
    %10 = vector.broadcast %cst_6 : f32 to vector<8x512xf32>
    %11 = arith.subf %10, %9 : vector<8x512xf32>
    %12 = math.exp %11 : vector<8x512xf32>
    %cst_7 = arith.constant 1.000000e+00 : f32
    %13 = vector.broadcast %cst_7 : f32 to vector<8x512xf32>
    %14 = arith.addf %13, %12 : vector<8x512xf32>
    %15 = math.log %14 : vector<8x512xf32>
    %16 = arith.addf %8, %15 : vector<8x512xf32>
    %17 = math.tanh %16 : vector<8x512xf32>
    %18 = arith.mulf %6, %17 : vector<8x512xf32>
    %c0_8 = arith.constant 0 : index
    %c0_9 = arith.constant 0 : index
    %19 = vector.load %arg4[%c0_8, %c0_9] : memref<512x512xbf16, #tpu.memory_space<vmem>>, vector<512x512xbf16>
    %c0_10 = arith.constant 0 : index
    %c0_11 = arith.constant 0 : index
    %20 = vector.load %arg5[%c0_10, %c0_11] : memref<1x512xf32, #tpu.memory_space<vmem>>, vector<1x512xf32>
    %21 = arith.truncf %18 : vector<8x512xf32> to vector<8x512xbf16>
    %cst_12 = arith.constant dense<0.000000e+00> : vector<8x512xf32>
    %22 = tpu.matmul %21, %19, %cst_12 {dimension_numbers = #tpu.dot_dimension_numbers<[1], [0], [0], [1], [0, 0, 1, 1], [], []>} : vector<8x512xbf16>, vector<512x512xbf16>, vector<8x512xf32> -> vector<8x512xf32>
    %23 = vector.broadcast %20 : vector<1x512xf32> to vector<8x512xf32>
    %24 = arith.addf %22, %23 : vector<8x512xf32>
    %cst_13 = arith.constant 0.000000e+00 : f32
    %25 = vector.broadcast %cst_13 : f32 to vector<8x512xf32>
    %26 = arith.maximumf %24, %25 : vector<8x512xf32>
    %27 = math.absf %24 : vector<8x512xf32>
    %cst_14 = arith.constant 0.000000e+00 : f32
    %28 = vector.broadcast %cst_14 : f32 to vector<8x512xf32>
    %29 = arith.subf %28, %27 : vector<8x512xf32>
    %30 = math.exp %29 : vector<8x512xf32>
    %cst_15 = arith.constant 1.000000e+00 : f32
    %31 = vector.broadcast %cst_15 : f32 to vector<8x512xf32>
    %32 = arith.addf %31, %30 : vector<8x512xf32>
    %33 = math.log %32 : vector<8x512xf32>
    %34 = arith.addf %26, %33 : vector<8x512xf32>
    %35 = math.tanh %34 : vector<8x512xf32>
    %36 = arith.mulf %24, %35 : vector<8x512xf32>
    %c0_16 = arith.constant 0 : index
    %c0_17 = arith.constant 0 : index
    %37 = vector.load %arg6[%c0_16, %c0_17] : memref<512x2048xbf16, #tpu.memory_space<vmem>>, vector<512x2048xbf16>
    %c0_18 = arith.constant 0 : index
    %c0_19 = arith.constant 0 : index
    %38 = vector.load %arg7[%c0_18, %c0_19] : memref<1x2048xf32, #tpu.memory_space<vmem>>, vector<1x2048xf32>
    %39 = arith.truncf %36 : vector<8x512xf32> to vector<8x512xbf16>
    %cst_20 = arith.constant dense<0.000000e+00> : vector<8x2048xf32>
    %40 = tpu.matmul %39, %37, %cst_20 {dimension_numbers = #tpu.dot_dimension_numbers<[1], [0], [0], [1], [0, 0, 1, 1], [], []>} : vector<8x512xbf16>, vector<512x2048xbf16>, vector<8x2048xf32> -> vector<8x2048xf32>
    %41 = vector.broadcast %38 : vector<1x2048xf32> to vector<8x2048xf32>
    %42 = arith.addf %40, %41 : vector<8x2048xf32>
    %cst_21 = arith.constant 0.000000e+00 : f32
    %43 = vector.broadcast %cst_21 : f32 to vector<8x2048xf32>
    %44 = arith.maximumf %42, %43 : vector<8x2048xf32>
    %45 = math.absf %42 : vector<8x2048xf32>
    %cst_22 = arith.constant 0.000000e+00 : f32
    %46 = vector.broadcast %cst_22 : f32 to vector<8x2048xf32>
    %47 = arith.subf %46, %45 : vector<8x2048xf32>
    %48 = math.exp %47 : vector<8x2048xf32>
    %cst_23 = arith.constant 1.000000e+00 : f32
    %49 = vector.broadcast %cst_23 : f32 to vector<8x2048xf32>
    %50 = arith.addf %49, %48 : vector<8x2048xf32>
    %51 = math.log %50 : vector<8x2048xf32>
    %52 = arith.addf %44, %51 : vector<8x2048xf32>
    %53 = math.tanh %52 : vector<8x2048xf32>
    %54 = arith.mulf %42, %53 : vector<8x2048xf32>
    %c0_24 = arith.constant 0 : index
    %c0_25 = arith.constant 0 : index
    %55 = vector.load %arg8[%c0_24, %c0_25] : memref<2048x16xbf16, #tpu.memory_space<vmem>>, vector<2048x16xbf16>
    %c0_26 = arith.constant 0 : index
    %c0_27 = arith.constant 0 : index
    %56 = vector.load %arg9[%c0_26, %c0_27] : memref<1x16xf32, #tpu.memory_space<vmem>>, vector<1x16xf32>
    %57 = arith.truncf %54 : vector<8x2048xf32> to vector<8x2048xbf16>
    %cst_28 = arith.constant dense<0.000000e+00> : vector<8x16xf32>
    %58 = tpu.matmul %57, %55, %cst_28 {dimension_numbers = #tpu.dot_dimension_numbers<[1], [0], [0], [1], [0, 0, 1, 1], [], []>} : vector<8x2048xbf16>, vector<2048x16xbf16>, vector<8x16xf32> -> vector<8x16xf32>
    %59 = vector.broadcast %56 : vector<1x16xf32> to vector<8x16xf32>
    %60 = arith.addf %58, %59 : vector<8x16xf32>
    %c0_29 = arith.constant 0 : index
    %c0_30 = arith.constant 0 : index
    %61 = vector.load %arg10[%c0_29, %c0_30] : memref<8x16xf32, #tpu.memory_space<vmem>>, vector<8x16xf32>
    tpu.vector_store %arg10[%c0_29, %c0_30], %60 {strides = array<i32>} : memref<8x16xf32, #tpu.memory_space<vmem>>, vector<8x16xf32>,
    return
  }
  func.func @transform_0(%arg0: i32) -> (i32, i32) {
    %c0_i32 = arith.constant 0 : i32
    %c0_i32_0 = arith.constant 0 : i32
    return %arg0, %c0_i32 : i32, i32
  }
  func.func @transform_1(%arg0: i32) -> (i32, i32) {
    %c0_i32 = arith.constant 0 : i32
    %c0_i32_0 = arith.constant 0 : i32
    %c0_i32_1 = arith.constant 0 : i32
    return %c0_i32, %c0_i32_0 : i32, i32
  }
  func.func @transform_2(%arg0: i32) -> (i32, i32) {
    %c0_i32 = arith.constant 0 : i32
    %c0_i32_0 = arith.constant 0 : i32
    %c0_i32_1 = arith.constant 0 : i32
    return %c0_i32, %c0_i32_0 : i32, i32
  }
  func.func @transform_3(%arg0: i32) -> (i32, i32) {
    %c0_i32 = arith.constant 0 : i32
    %c0_i32_0 = arith.constant 0 : i32
    %c0_i32_1 = arith.constant 0 : i32
    return %c0_i32, %c0_i32_0 : i32, i32
  }
  func.func @transform_4(%arg0: i32) -> (i32, i32) {
    %c0_i32 = arith.constant 0 : i32
    %c0_i32_0 = arith.constant 0 : i32
    %c0_i32_1 = arith.constant 0 : i32
    return %c0_i32, %c0_i32_0 : i32, i32
  }
  func.func @transform_5(%arg0: i32) -> (i32, i32) {
    %c0_i32 = arith.constant 0 : i32
    %c0_i32_0 = arith.constant 0 : i32
    %c0_i32_1 = arith.constant 0 : i32
    return %c0_i32, %c0_i32_0 : i32, i32
  }
  func.func @transform_6(%arg0: i32) -> (i32, i32) {
    %c0_i32 = arith.constant 0 : i32
    %c0_i32_0 = arith.constant 0 : i32
    %c0_i32_1 = arith.constant 0 : i32
    return %c0_i32, %c0_i32_0 : i32, i32
  }
  func.func @transform_7(%arg0: i32) -> (i32, i32) {
    %c0_i32 = arith.constant 0 : i32
    %c0_i32_0 = arith.constant 0 : i32
    %c0_i32_1 = arith.constant 0 : i32
    return %c0_i32, %c0_i32_0 : i32, i32
  }
  func.func @transform_8(%arg0: i32) -> (i32, i32) {
    %c0_i32 = arith.constant 0 : i32
    %c0_i32_0 = arith.constant 0 : i32
    %c0_i32_1 = arith.constant 0 : i32
    return %c0_i32, %c0_i32_0 : i32, i32
  }
  func.func @transform_9(%arg0: i32) -> (i32, i32) {
    %c0_i32 = arith.constant 0 : i32
    %c0_i32_0 = arith.constant 0 : i32
    return %arg0, %c0_i32 : i32, i32
  }
}

</mosaic_0001>

<llo_original>
// kernel: tpu_custom_call.1
$region0: #{tpu_custom_call.1}
  #allocation0 [shape = 'u32[]', space=smem, size = 0x4, offset = 0x4, fixed_abs, tag = 'smem constant byte address 0x4 - core index']
  #allocation1 [shape = 'u32[72,128]{1,0:T(1,128)}', space=vmem, size = 0x9000, scoped, tag = 'internal scratch']
  %s0 = inlined_call_operand.hbm [shape: f32[8,32], index: 0, kind: input, shape index: {}]
  %s1 = inlined_call_operand.hbm [shape: bf16[32,512], index: 1, kind: input, shape index: {}]
  %s2 = inlined_call_operand.hbm [shape: f32[1,512], index: 2, kind: input, shape index: {}]
  %s3 = inlined_call_operand.hbm [shape: bf16[512,512], index: 3, kind: input, shape index: {}]
  %s4 = inlined_call_operand.hbm [shape: f32[1,512], index: 4, kind: input, shape index: {}]
  %s5 = inlined_call_operand.hbm [shape: bf16[512,2048], index: 5, kind: input, shape index: {}]
  %s6 = inlined_call_operand.hbm [shape: f32[1,2048], index: 6, kind: input, shape index: {}]
  %s7 = inlined_call_operand.vmem [shape: bf16[2048,16], index: 7, kind: input, shape index: {}]
  %s8 = inlined_call_operand.hbm [shape: f32[1,16], index: 8, kind: input, shape index: {}]
  %s9 = inlined_call_operand.hbm [shape: f32[8,16], index: 9, kind: output, shape index: {}]
  %s10 = sld [smem:[#allocation0]]
  $region78: #{tpu_custom_call.1} parent=0
    _
  %s12 = ssub.s32 1, %s10
  %s13 = scalar_select 0, %s12, %s10
  $region1: #{tpu_custom_call.1} parent=0
    #allocation2 [shape = 'u8[4096]{0}', space=vmem, size = 0x1000, scoped, tag = 'input window, operand 0, single buffered']
    #allocation3 [shape = 's32[1]{0}', space=sflag, size = 0x4, scoped, tag = 'scoped memory for tpu_custom_call.1']
    #allocation4 [shape = 's32[1]{0}', space=sflag, size = 0x4, scoped, tag = 'scoped memory for tpu_custom_call.1']
    #allocation5 [shape = 'u8[32768]{0}', space=vmem, size = 0x8000, scoped, tag = 'input window, operand 1, single buffered']
    #allocation6 [shape = 's32[1]{0}', space=sflag, size = 0x4, scoped, tag = 'scoped memory for tpu_custom_call.1']
    #allocation7 [shape = 'u8[2048]{0}', space=vmem, size = 0x800, scoped, tag = 'input window, operand 2, single buffered']
    #allocation8 [shape = 'u8[524288]{0}', space=vmem, size = 0x80000, scoped, tag = 'input window, operand 3, single buffered']
    #allocation9 [shape = 's32[1]{0}', space=sflag, size = 0x4, scoped, tag = 'scoped memory for tpu_custom_call.1']
    #allocation10 [shape = 'u8[2048]{0}', space=vmem, size = 0x800, scoped, tag = 'input window, operand 4, single buffered']
    #allocation11 [shape = 'u8[2097152]{0}', space=vmem, size = 0x200000, scoped, tag = 'input window, operand 5, single buffered']
    #allocation12 [shape = 's32[1]{0}', space=sflag, size = 0x4, scoped, tag = 'scoped memory for tpu_custom_call.1']
    #allocation13 [shape = 'u8[8192]{0}', space=vmem, size = 0x2000, scoped, tag = 'input window, operand 6, single buffered']
    #allocation14 [shape = 'u8[512]{0}', space=vmem, size = 0x400, scoped, tag = 'input window, operand 8, single buffered']
    #allocation15 [shape = 's32[1]{0}', space=sflag, size = 0x4, scoped, tag = 'scoped memory for tpu_custom_call.1']
    #allocation16 [shape = 'u8[4096]{0}', space=vmem, size = 0x1000, scoped, tag = 'output window, operand 0, single buffered']
    %14 = vsyncpa [#allocation3], 0
    %15 = vsyncpa [#allocation6], 0
    %16 = vsyncpa [#allocation9], 0
    %17 = vsyncpa [#allocation12], 0
    %18 = vsyncpa [#allocation15], 0
    %19 = vsyncpa [#allocation4], 0
    // Predicated region
    $region2: #{tpu_custom_call.1} parent=1 // pred_check
      _
    $region3: #{tpu_custom_call.1} parent=1 // pred_check_branch
      %21 = sbr.rel (0) target = $region5
    $region4: #{tpu_custom_call.1} parent=1 // pred_region
      %23 = vsyncadd [#allocation3], 0
      %s25 = sshll.u32 %s0, 4
      %s26 = int_to_ptr.hbm [resolvable:$true] %s25
      %s27 = sshll.u32 [#allocation2], 4
      %s28 = int_to_ptr.vmem [resolvable:$true] %s27
      %30 = dma.hbm_to_vmem [thread:$0]  %s26, 128, %s28, [#allocation3]
    $region5: #{tpu_custom_call.1} parent=1 // pred_fallthru
      _
    // Predicated region
    $region6: #{tpu_custom_call.1} parent=1 // pred_check
      _
    $region7: #{tpu_custom_call.1} parent=1 // pred_check_branch
      %32 = sbr.rel (0) target = $region9
    $region8: #{tpu_custom_call.1} parent=1 // pred_region
      %34 = vsyncadd [#allocation6], 0
      %s35 = sshll.u32 %s1, 4
      %s36 = int_to_ptr.hbm [resolvable:$true] %s35
      %s37 = sshll.u32 [#allocation5], 4
      %s38 = int_to_ptr.vmem [resolvable:$true] %s37
      %43 = dma.hbm_to_vmem [thread:$0]  %s36, 1024, %s38, [#allocation6], 256, 256, 16
    $region9: #{tpu_custom_call.1} parent=1 // pred_fallthru
      _
    // Predicated region
    $region10: #{tpu_custom_call.1} parent=1 // pred_check
      _
    $region11: #{tpu_custom_call.1} parent=1 // pred_check_branch
      %45 = sbr.rel (0) target = $region13
    $region12: #{tpu_custom_call.1} parent=1 // pred_region
      %47 = vsyncadd [#allocation6], 0
      %s49 = sshll.u32 %s2, 4
      %s50 = int_to_ptr.hbm [resolvable:$true] %s49
      %s51 = sshll.u32 [#allocation7], 4
      %s52 = int_to_ptr.vmem [resolvable:$true] %s51
      %54 = dma.hbm_to_vmem [thread:$0]  %s50, 64, %s52, [#allocation6]
    $region13: #{tpu_custom_call.1} parent=1 // pred_fallthru
      _
    // Predicated region
    $region14: #{tpu_custom_call.1} parent=1 // pred_check
      _
    $region15: #{tpu_custom_call.1} parent=1 // pred_check_branch
      %56 = sbr.rel (0) target = $region17
    $region16: #{tpu_custom_call.1} parent=1 // pred_region
      %58 = vsyncadd [#allocation9], 0
      %s59 = sshll.u32 %s3, 4
      %s60 = int_to_ptr.hbm [resolvable:$true] %s59
      %s61 = sshll.u32 [#allocation8], 4
      %s62 = int_to_ptr.vmem [resolvable:$true] %s61
      %67 = dma.hbm_to_vmem [thread:$0]  %s60, 16384, %s62, [#allocation9], 256, 256, 16
    $region17: #{tpu_custom_call.1} parent=1 // pred_fallthru
      _
    // Predicated region
    $region18: #{tpu_custom_call.1} parent=1 // pred_check
      _
    $region19: #{tpu_custom_call.1} parent=1 // pred_check_branch
      %69 = sbr.rel (0) target = $region21
    $region20: #{tpu_custom_call.1} parent=1 // pred_region
      %71 = vsyncadd [#allocation9], 0
      %s73 = sshll.u32 %s4, 4
      %s74 = int_to_ptr.hbm [resolvable:$true] %s73
      %s75 = sshll.u32 [#allocation10], 4
      %s76 = int_to_ptr.vmem [resolvable:$true] %s75
      %78 = dma.hbm_to_vmem [thread:$0]  %s74, 64, %s76, [#allocation9]
    $region21: #{tpu_custom_call.1} parent=1 // pred_fallthru
      _
    // Predicated region
    $region22: #{tpu_custom_call.1} parent=1 // pred_check
      _
    $region23: #{tpu_custom_call.1} parent=1 // pred_check_branch
      %80 = sbr.rel (0) target = $region25
    $region24: #{tpu_custom_call.1} parent=1 // pred_region
      %82 = vsyncadd [#allocation12], 0
      %s83 = sshll.u32 %s5, 4
      %s84 = int_to_ptr.hbm [resolvable:$true] %s83
      %s85 = sshll.u32 [#allocation11], 4
      %s86 = int_to_ptr.vmem [resolvable:$true] %s85
      %91 = dma.hbm_to_vmem [thread:$0]  %s84, 65536, %s86, [#allocation12], 1024, 1024, 64
    $region25: #{tpu_custom_call.1} parent=1 // pred_fallthru
      _
    // Predicated region
    $region26: #{tpu_custom_call.1} parent=1 // pred_check
      _
    $region27: #{tpu_custom_call.1} parent=1 // pred_check_branch
      %93 = sbr.rel (0) target = $region29
    $region28: #{tpu_custom_call.1} parent=1 // pred_region
      %95 = vsyncadd [#allocation12], 0
      %s97 = sshll.u32 %s6, 4
      %s98 = int_to_ptr.hbm [resolvable:$true] %s97
      %s99 = sshll.u32 [#allocation13], 4
      %s100 = int_to_ptr.vmem [resolvable:$true] %s99
      %102 = dma.hbm_to_vmem [thread:$0]  %s98, 256, %s100, [#allocation12]
    $region29: #{tpu_custom_call.1} parent=1 // pred_fallthru
      _
    // Predicated region
    $region30: #{tpu_custom_call.1} parent=1 // pred_check
      _
    $region31: #{tpu_custom_call.1} parent=1 // pred_check_branch
      %104 = sbr.rel (0) target = $region33
    $region32: #{tpu_custom_call.1} parent=1 // pred_region
      _
    $region33: #{tpu_custom_call.1} parent=1 // pred_fallthru
      _
    // Predicated region
    $region34: #{tpu_custom_call.1} parent=1 // pred_check
      _
    $region35: #{tpu_custom_call.1} parent=1 // pred_check_branch
      %106 = sbr.rel (0) target = $region37
    $region36: #{tpu_custom_call.1} parent=1 // pred_region
      %108 = vsyncadd [#allocation15], 0
      %s110 = sshll.u32 %s8, 4
      %s111 = int_to_ptr.hbm [resolvable:$true] %s110
      %s112 = sshll.u32 [#allocation14], 4
      %s113 = int_to_ptr.vmem [resolvable:$true] %s112
      %115 = dma.hbm_to_vmem [thread:$0]  %s111, 16, %s113, [#allocation15]
    $region37: #{tpu_custom_call.1} parent=1 // pred_fallthru
      _
    // Predicated region
    $region38: #{tpu_custom_call.1} parent=1 // pred_check
      _
    $region39: #{tpu_custom_call.1} parent=1 // pred_check_branch
      %117 = sbr.rel (0) target = $region41
    $region40: #{tpu_custom_call.1} parent=1 // pred_region
      %119 = dma.done [#allocation3], 128
    $region41: #{tpu_custom_call.1} parent=1 // pred_fallthru
      _
    // Predicated region
    $region42: #{tpu_custom_call.1} parent=1 // pred_check
      _
    $region43: #{tpu_custom_call.1} parent=1 // pred_check_branch
      %121 = sbr.rel (0) target = $region45
    $region44: #{tpu_custom_call.1} parent=1 // pred_region
      %123 = dma.done [#allocation6], 1024
    $region45: #{tpu_custom_call.1} parent=1 // pred_fallthru
      _
    // Predicated region
    $region46: #{tpu_custom_call.1} parent=1 // pred_check
      _
    $region47: #{tpu_custom_call.1} parent=1 // pred_check_branch
      %125 = sbr.rel (0) target = $region49
    $region48: #{tpu_custom_call.1} parent=1 // pred_region
      %127 = dma.done [#allocation6], 64
    $region49: #{tpu_custom_call.1} parent=1 // pred_fallthru
      _
    // Predicated region
    $region50: #{tpu_custom_call.1} parent=1 // pred_check
      _
    $region51: #{tpu_custom_call.1} parent=1 // pred_check_branch
      %129 = sbr.rel (0) target = $region53
    $region52: #{tpu_custom_call.1} parent=1 // pred_region
      %131 = dma.done [#allocation9], 16384
    $region53: #{tpu_custom_call.1} parent=1 // pred_fallthru
      _
    // Predicated region
    $region54: #{tpu_custom_call.1} parent=1 // pred_check
      _
    $region55: #{tpu_custom_call.1} parent=1 // pred_check_branch
      %133 = sbr.rel (0) target = $region57
    $region56: #{tpu_custom_call.1} parent=1 // pred_region
      %135 = dma.done [#allocation9], 64
    $region57: #{tpu_custom_call.1} parent=1 // pred_fallthru
      _
    // Predicated region
    $region58: #{tpu_custom_call.1} parent=1 // pred_check
      _
    $region59: #{tpu_custom_call.1} parent=1 // pred_check_branch
      %137 = sbr.rel (0) target = $region61
    $region60: #{tpu_custom_call.1} parent=1 // pred_region
      %139 = dma.done [#allocation12], 65536
    $region61: #{tpu_custom_call.1} parent=1 // pred_fallthru
      _
    // Predicated region
    $region62: #{tpu_custom_call.1} parent=1 // pred_check
      _
    $region63: #{tpu_custom_call.1} parent=1 // pred_check_branch
      %141 = sbr.rel (0) target = $region65
    $region64: #{tpu_custom_call.1} parent=1 // pred_region
      %143 = dma.done [#allocation12], 256
    $region65: #{tpu_custom_call.1} parent=1 // pred_fallthru
      _
    // Predicated region
    $region66: #{tpu_custom_call.1} parent=1 // pred_check
      _
    $region67: #{tpu_custom_call.1} parent=1 // pred_check_branch
      %145 = sbr.rel (0) target = $region69
    $region68: #{tpu_custom_call.1} parent=1 // pred_region
      %147 = dma.done [#allocation15], 16
    $region69: #{tpu_custom_call.1} parent=1 // pred_fallthru
      _
    %v149 = vld [vmem:[#allocation2] sm:$0xff]
    %v150 = vld [vmem:[#allocation5] sm:$0xff]
    %v151 = vld [vmem:[#allocation5 + $0x8] sm:$0xff]
    %v152 = vld [vmem:[#allocation5 + $0x10] sm:$0xff]
    %v153 = vld [vmem:[#allocation5 + $0x18] sm:$0xff]
    %v154 = vld [vmem:[#allocation5 + $0x20] sm:$0xff]
    %v155 = vld [vmem:[#allocation5 + $0x28] sm:$0xff]
    %v156 = vld [vmem:[#allocation5 + $0x30] sm:$0xff]
    %v157 = vld [vmem:[#allocation5 + $0x38] sm:$0xff]
    %v158 = vld [vmem:[#allocation7] sm:$0xf]
    %v159 = vpack.c.bf16 %v149, %v149
    %v161 = vperm.slane %v158, 0
    %v162 = vperm.slane %v158, 1
    %v163 = vperm.slane %v158, 2
    %v164 = vperm.slane %v158, 3
    %v177 = vunpack.c.l.b16 %v150
    %v178 = vunpack.c.h.b16 %v150
    %v179 = vunpack.c.l.b16 %v151
    %v180 = vunpack.c.h.b16 %v151
    %v181 = vunpack.c.l.b16 %v152
    %v182 = vunpack.c.h.b16 %v152
    %v183 = vunpack.c.l.b16 %v153
    %v184 = vunpack.c.h.b16 %v153
    %v185 = vunpack.c.l.b16 %v154
    %v186 = vunpack.c.h.b16 %v154
    %v187 = vunpack.c.l.b16 %v155
    %v188 = vunpack.c.h.b16 %v155
    %v189 = vunpack.c.l.b16 %v156
    %v190 = vunpack.c.h.b16 %v156
    %v191 = vunpack.c.l.b16 %v157
    %v192 = vunpack.c.h.b16 %v157
    %v193 = vpack.c.b16 %v181, %v177
    %v194 = vpack.c.b16 %v182, %v178
    %v195 = vpack.c.b16 %v183, %v179
    %v196 = vpack.c.b16 %v184, %v180
    %v197 = vpack.c.b16 %v189, %v185
    %v198 = vpack.c.b16 %v190, %v186
    %v199 = vpack.c.b16 %v191, %v187
    %v200 = vpack.c.b16 %v192, %v188
    %vm209 = vcmask 261120
    %v211 = vsel %vm209, %v159, 0
    %213 = vmatpush.bf16.msra.mxu0 0
    %214 = vmatpush.bf16.msra.mxu0 0
    %215 = vmatpush.bf16.msra.mxu0 0
    %216 = vmatpush.bf16.msra.mxu0 0
    %217 = vmatpush.bf16.msra.mxu0 0
    %218 = vmatpush.bf16.msra.mxu0 0
    %219 = vmatpush.bf16.msra.mxu0 %v197
    %220 = vmatpush.bf16.msra.mxu0 %v193
    %221 = vmatmul.bf16.gmra.mxu0 %v211
    %v222 = vpop.f32.mrf.mxu0
    %v223 = vadd.f32 %v161, %v222
    %v224 = vpop.f32.mrf.mxu0
    %225 = vdwg.mxu0
    %226 = vmatpush.bf16.msra.mxu0 0
    %227 = vmatpush.bf16.msra.mxu0 0
    %228 = vmatpush.bf16.msra.mxu0 0
    %229 = vmatpush.bf16.msra.mxu0 0
    %230 = vmatpush.bf16.msra.mxu0 0
    %231 = vmatpush.bf16.msra.mxu0 0
    %232 = vmatpush.bf16.msra.mxu0 %v198
    %233 = vmatpush.bf16.msra.mxu0 %v194
    %234 = vmatmul.bf16.gmra.mxu0 %v211
    %v235 = vpop.f32.mrf.mxu0
    %v236 = vadd.f32 %v162, %v235
    %v237 = vpop.f32.mrf.mxu0
    %238 = vdwg.mxu0
    %239 = vmatpush.bf16.msra.mxu0 0
    %240 = vmatpush.bf16.msra.mxu0 0
    %241 = vmatpush.bf16.msra.mxu0 0
    %242 = vmatpush.bf16.msra.mxu0 0
    %243 = vmatpush.bf16.msra.mxu0 0
    %244 = vmatpush.bf16.msra.mxu0 0
    %245 = vmatpush.bf16.msra.mxu0 %v199
    %246 = vmatpush.bf16.msra.mxu0 %v195
    %247 = vmatmul.bf16.gmra.mxu0 %v211
    %v248 = vpop.f32.mrf.mxu0
    %v249 = vadd.f32 %v163, %v248
    %v250 = vpop.f32.mrf.mxu0
    %251 = vdwg.mxu0
    %252 = vmatpush.bf16.msra.mxu0 0
    %253 = vmatpush.bf16.msra.mxu0 0
    %254 = vmatpush.bf16.msra.mxu0 0
    %255 = vmatpush.bf16.msra.mxu0 0
    %256 = vmatpush.bf16.msra.mxu0 0
    %257 = vmatpush.bf16.msra.mxu0 0
    %258 = vmatpush.bf16.msra.mxu0 %v200
    %259 = vmatpush.bf16.msra.mxu0 %v196
    %260 = vmatmul.bf16.gmra.mxu0 %v211
    %v261 = vpop.f32.mrf.mxu0
    %v262 = vadd.f32 %v164, %v261
    %v263 = vpop.f32.mrf.mxu0
    %264 = vdwg.mxu0
    %v265 = vmax.f32 %v223, 0.0
    %v266 = vmax.f32 %v236, 0.0
    %v267 = vmax.f32 %v249, 0.0
    %v268 = vmax.f32 %v262, 0.0
    %v269 = vand.u32 2147483647, %v223
    %v270 = vand.u32 2147483647, %v236
    %v271 = vand.u32 2147483647, %v249
    %v272 = vand.u32 2147483647, %v262
    %v273 = vsub.f32 0.0, %v269
    %v274 = vsub.f32 0.0, %v270
    %v275 = vsub.f32 0.0, %v271
    %v276 = vsub.f32 0.0, %v272
    %v277 = vmul.f32 %v273, 1.442695
    %v278 = vpow.pop %v277
    %v279 = vmul.f32 %v274, 1.442695
    %v280 = vpow.pop %v279
    %v281 = vmul.f32 %v275, 1.442695
    %v282 = vpow.pop %v281
    %v283 = vmul.f32 %v276, 1.442695
    %v284 = vpow.pop %v283
    %v285 = vadd.f32 %v278, 1.0
    %v286 = vadd.f32 %v280, 1.0
    %v287 = vadd.f32 %v282, 1.0
    %v288 = vadd.f32 %v284, 1.0
    %v289 = vlog2.pop %v285
    %v290 = vmul.f32 %v289, 0.6931472
    %v291 = vlog2.pop %v286
    %v292 = vmul.f32 %v291, 0.6931472
    %v293 = vlog2.pop %v287
    %v294 = vmul.f32 %v293, 0.6931472
    %v295 = vlog2.pop %v288
    %v296 = vmul.f32 %v295, 0.6931472
    %v297 = vadd.f32 %v265, %v290
    %v298 = vadd.f32 %v266, %v292
    %v299 = vadd.f32 %v267, %v294
    %v300 = vadd.f32 %v268, %v296
    %v301 = vtanh.pop %v297
    %v302 = vtanh.pop %v298
    %v303 = vtanh.pop %v299
    %v304 = vtanh.pop %v300
    %v305 = vmul.f32 %v223, %v301
    %v306 = vmul.f32 %v236, %v302
    %v307 = vmul.f32 %v249, %v303
    %v308 = vmul.f32 %v262, %v304
    %v309 = vld [vmem:[#allocation8] sm:$0xff]
    %v310 = vld [vmem:[#allocation8 + $0x8] sm:$0xff]
    %v311 = vld [vmem:[#allocation8 + $0x10] sm:$0xff]
    %v312 = vld [vmem:[#allocation8 + $0x18] sm:$0xff]
    %v313 = vld [vmem:[#allocation8 + $0x20] sm:$0xff]
    %v314 = vld [vmem:[#allocation8 + $0x28] sm:$0xff]
    %v315 = vld [vmem:[#allocation8 + $0x30] sm:$0xff]
    %v316 = vld [vmem:[#allocation8 + $0x38] sm:$0xff]
    %v317 = vld [vmem:[#allocation8 + $0x40] sm:$0xff]
    %v318 = vld [vmem:[#allocation8 + $0x48] sm:$0xff]
    %v319 = vld [vmem:[#allocation8 + $0x50] sm:$0xff]
    %v320 = vld [vmem:[#allocation8 + $0x58] sm:$0xff]
    %v321 = vld [vmem:[#allocation8 + $0x60] sm:$0xff]
    %v322 = vld [vmem:[#allocation8 + $0x68] sm:$0xff]
    %v323 = vld [vmem:[#allocation8 + $0x70] sm:$0xff]
    %v324 = vld [vmem:[#allocation8 + $0x78] sm:$0xff]
    %v325 = vld [vmem:[#allocation8 + $0x80] sm:$0xff]
    %v326 = vld [vmem:[#allocation8 + $0x88] sm:$0xff]
    %v327 = vld [vmem:[#allocation8 + $0x90] sm:$0xff]
    %v328 = vld [vmem:[#allocation8 + $0x98] sm:$0xff]
    %v329 = vld [vmem:[#allocation8 + $0xa0] sm:$0xff]
    %v330 = vld [vmem:[#allocation8 + $0xa8] sm:$0xff]
    %v331 = vld [vmem:[#allocation8 + $0xb0] sm:$0xff]
    %v332 = vld [vmem:[#allocation8 + $0xb8] sm:$0xff]
    %v333 = vld [vmem:[#allocation8 + $0xc0] sm:$0xff]
    %v334 = vld [vmem:[#allocation8 + $0xc8] sm:$0xff]
    %v335 = vld [vmem:[#allocation8 + $0xd0] sm:$0xff]
    %v336 = vld [vmem:[#allocation8 + $0xd8] sm:$0xff]
    %v337 = vld [vmem:[#allocation8 + $0xe0] sm:$0xff]
    %v338 = vld [vmem:[#allocation8 + $0xe8] sm:$0xff]
    %v339 = vld [vmem:[#allocation8 + $0xf0] sm:$0xff]
    %v340 = vld [vmem:[#allocation8 + $0xf8] sm:$0xff]
    %v341 = vld [vmem:[#allocation8 + $0x100] sm:$0xff]
    %v342 = vld [vmem:[#allocation8 + $0x108] sm:$0xff]
    %v343 = vld [vmem:[#allocation8 + $0x110] sm:$0xff]
    %v344 = vld [vmem:[#allocation8 + $0x118] sm:$0xff]
    %v345 = vld [vmem:[#allocation8 + $0x120] sm:$0xff]
    %v346 = vld [vmem:[#allocation8 + $0x128] sm:$0xff]
    %v347 = vld [vmem:[#allocation8 + $0x130] sm:$0xff]
    %v348 = vld [vmem:[#allocation8 + $0x138] sm:$0xff]
    %v349 = vld [vmem:[#allocation8 + $0x140] sm:$0xff]
    %v350 = vld [vmem:[#allocation8 + $0x148] sm:$0xff]
    %v351 = vld [vmem:[#allocation8 + $0x150] sm:$0xff]
    %v352 = vld [vmem:[#allocation8 + $0x158] sm:$0xff]
    %v353 = vld [vmem:[#allocation8 + $0x160] sm:$0xff]
    %v354 = vld [vmem:[#allocation8 + $0x168] sm:$0xff]
    %v355 = vld [vmem:[#allocation8 + $0x170] sm:$0xff]
    %v356 = vld [vmem:[#allocation8 + $0x178] sm:$0xff]
    %v357 = vld [vmem:[#allocation8 + $0x180] sm:$0xff]
    %v358 = vld [vmem:[#allocation8 + $0x188] sm:$0xff]
    %v359 = vld [vmem:[#allocation8 + $0x190] sm:$0xff]
    %v360 = vld [vmem:[#allocation8 + $0x198] sm:$0xff]
    %v361 = vld [vmem:[#allocation8 + $0x1a0] sm:$0xff]
    %v362 = vld [vmem:[#allocation8 + $0x1a8] sm:$0xff]
    %v363 = vld [vmem:[#allocation8 + $0x1b0] sm:$0xff]
    %v364 = vld [vmem:[#allocation8 + $0x1b8] sm:$0xff]
    %v365 = vld [vmem:[#allocation8 + $0x1c0] sm:$0xff]
    %v366 = vld [vmem:[#allocation8 + $0x1c8] sm:$0xff]
    %v367 = vld [vmem:[#allocation8 + $0x1d0] sm:$0xff]
    %v368 = vld [vmem:[#allocation8 + $0x1d8] sm:$0xff]
    %v369 = vld [vmem:[#allocation8 + $0x1e0] sm:$0xff]
    %v370 = vld [vmem:[#allocation8 + $0x1e8] sm:$0xff]
    %v371 = vld [vmem:[#allocation8 + $0x1f0] sm:$0xff]
    %v372 = vld [vmem:[#allocation8 + $0x1f8] sm:$0xff]
    %v373 = vld [vmem:[#allocation8 + $0x200] sm:$0xff]
    %v374 = vld [vmem:[#allocation8 + $0x208] sm:$0xff]
    %v375 = vld [vmem:[#allocation8 + $0x210] sm:$0xff]
    %v376 = vld [vmem:[#allocation8 + $0x218] sm:$0xff]
    %v377 = vld [vmem:[#allocation8 + $0x220] sm:$0xff]
    %v378 = vld [vmem:[#allocation8 + $0x228] sm:$0xff]
    %v379 = vld [vmem:[#allocation8 + $0x230] sm:$0xff]
    %v380 = vld [vmem:[#allocation8 + $0x238] sm:$0xff]
    %v381 = vld [vmem:[#allocation8 + $0x240] sm:$0xff]
    %v382 = vld [vmem:[#allocation8 + $0x248] sm:$0xff]
    %v383 = vld [vmem:[#allocation8 + $0x250] sm:$0xff]
    %v384 = vld [vmem:[#allocation8 + $0x258] sm:$0xff]
    %v385 = vld [vmem:[#allocation8 + $0x260] sm:$0xff]
    %v386 = vld [vmem:[#allocation8 + $0x268] sm:$0xff]
    %v387 = vld [vmem:[#allocation8 + $0x270] sm:$0xff]
    %v388 = vld [vmem:[#allocation8 + $0x278] sm:$0xff]
    %v389 = vld [vmem:[#allocation8 + $0x280] sm:$0xff]
    %v390 = vld [vmem:[#allocation8 + $0x288] sm:$0xff]
    %v391 = vld [vmem:[#allocation8 + $0x290] sm:$0xff]
    %v392 = vld [vmem:[#allocation8 + $0x298] sm:$0xff]
    %v393 = vld [vmem:[#allocation8 + $0x2a0] sm:$0xff]
    %v394 = vld [vmem:[#allocation8 + $0x2a8] sm:$0xff]
    %v395 = vld [vmem:[#allocation8 + $0x2b0] sm:$0xff]
    %v396 = vld [vmem:[#allocation8 + $0x2b8] sm:$0xff]
    %v397 = vld [vmem:[#allocation8 + $0x2c0] sm:$0xff]
    %v398 = vld [vmem:[#allocation8 + $0x2c8] sm:$0xff]
    %v399 = vld [vmem:[#allocation8 + $0x2d0] sm:$0xff]
    %v400 = vld [vmem:[#allocation8 + $0x2d8] sm:$0xff]
    %v401 = vld [vmem:[#allocation8 + $0x2e0] sm:$0xff]
    %v402 = vld [vmem:[#allocation8 + $0x2e8] sm:$0xff]
    %v403 = vld [vmem:[#allocation8 + $0x2f0] sm:$0xff]
    %v404 = vld [vmem:[#allocation8 + $0x2f8] sm:$0xff]
    %v405 = vld [vmem:[#allocation8 + $0x300] sm:$0xff]
    %v406 = vld [vmem:[#allocation8 + $0x308] sm:$0xff]
    %v407 = vld [vmem:[#allocation8 + $0x310] sm:$0xff]
    %v408 = vld [vmem:[#allocation8 + $0x318] sm:$0xff]
    %v409 = vld [vmem:[#allocation8 + $0x320] sm:$0xff]
    %v410 = vld [vmem:[#allocation8 + $0x328] sm:$0xff]
    %v411 = vld [vmem:[#allocation8 + $0x330] sm:$0xff]
    %v412 = vld [vmem:[#allocation8 + $0x338] sm:$0xff]
    %v413 = vld [vmem:[#allocation8 + $0x340] sm:$0xff]
    %v414 = vld [vmem:[#allocation8 + $0x348] sm:$0xff]
    %v415 = vld [vmem:[#allocation8 + $0x350] sm:$0xff]
    %v416 = vld [vmem:[#allocation8 + $0x358] sm:$0xff]
    %v417 = vld [vmem:[#allocation8 + $0x360] sm:$0xff]
    %v418 = vld [vmem:[#allocation8 + $0x368] sm:$0xff]
    %v419 = vld [vmem:[#allocation8 + $0x370] sm:$0xff]
    %v420 = vld [vmem:[#allocation8 + $0x378] sm:$0xff]
    %v421 = vld [vmem:[#allocation8 + $0x380] sm:$0xff]
    %v422 = vld [vmem:[#allocation8 + $0x388] sm:$0xff]
    %v423 = vld [vmem:[#allocation8 + $0x390] sm:$0xff]
    %v424 = vld [vmem:[#allocation8 + $0x398] sm:$0xff]
    %v425 = vld [vmem:[#allocation8 + $0x3a0] sm:$0xff]
    %v426 = vld [vmem:[#allocation8 + $0x3a8] sm:$0xff]
    %v427 = vld [vmem:[#allocation8 + $0x3b0] sm:$0xff]
    %v428 = vld [vmem:[#allocation8 + $0x3b8] sm:$0xff]
    %v429 = vld [vmem:[#allocation8 + $0x3c0] sm:$0xff]
    %v430 = vld [vmem:[#allocation8 + $0x3c8] sm:$0xff]
    %v431 = vld [vmem:[#allocation8 + $0x3d0] sm:$0xff]
    %v432 = vld [vmem:[#allocation8 + $0x3d8] sm:$0xff]
    %v433 = vld [vmem:[#allocation8 + $0x3e0] sm:$0xff]
    %v434 = vld [vmem:[#allocation8 + $0x3e8] sm:$0xff]
    %v435 = vld [vmem:[#allocation8 + $0x3f0] sm:$0xff]
    %v436 = vld [vmem:[#allocation8 + $0x3f8] sm:$0xff]
    %v437 = vld [vmem:[#allocation10] sm:$0xf]
    %v438 = vpack.c.bf16 %v305, %v305
    %v439 = vpack.c.bf16 %v306, %v306
    %v440 = vpack.c.bf16 %v307, %v307
    %v441 = vpack.c.bf16 %v308, %v308
    %v443 = vperm.slane %v437, 0
    %v444 = vperm.slane %v437, 1
    %v445 = vperm.slane %v437, 2
    %v446 = vperm.slane %v437, 3
    %v579 = vunpack.c.l.b16 %v309
    %v580 = vunpack.c.h.b16 %v309
    %v581 = vunpack.c.l.b16 %v310
    %v582 = vunpack.c.h.b16 %v310
    %v583 = vunpack.c.l.b16 %v311
    %v584 = vunpack.c.h.b16 %v311
    %v585 = vunpack.c.l.b16 %v312
    %v586 = vunpack.c.h.b16 %v312
    %v587 = vunpack.c.l.b16 %v313
    %v588 = vunpack.c.h.b16 %v313
    %v589 = vunpack.c.l.b16 %v314
    %v590 = vunpack.c.h.b16 %v314
    %v591 = vunpack.c.l.b16 %v315
    %v592 = vunpack.c.h.b16 %v315
    %v593 = vunpack.c.l.b16 %v316
    %v594 = vunpack.c.h.b16 %v316
    %v595 = vunpack.c.l.b16 %v317
    %v596 = vunpack.c.h.b16 %v317
    %v597 = vunpack.c.l.b16 %v318
    %v598 = vunpack.c.h.b16 %v318
    %v599 = vunpack.c.l.b16 %v319
    %v600 = vunpack.c.h.b16 %v319
    %v601 = vunpack.c.l.b16 %v320
    %v602 = vunpack.c.h.b16 %v320
    %v603 = vunpack.c.l.b16 %v321
    %v604 = vunpack.c.h.b16 %v321
    %v605 = vunpack.c.l.b16 %v322
    %v606 = vunpack.c.h.b16 %v322
    %v607 = vunpack.c.l.b16 %v323
    %v608 = vunpack.c.h.b16 %v323
    %v609 = vunpack.c.l.b16 %v324
    %v610 = vunpack.c.h.b16 %v324
    %v611 = vunpack.c.l.b16 %v325
    %v612 = vunpack.c.h.b16 %v325
    %v613 = vunpack.c.l.b16 %v326
    %v614 = vunpack.c.h.b16 %v326
    %v615 = vunpack.c.l.b16 %v327
    %v616 = vunpack.c.h.b16 %v327
    %v617 = vunpack.c.l.b16 %v328
    %v618 = vunpack.c.h.b16 %v328
    %v619 = vunpack.c.l.b16 %v329
    %v620 = vunpack.c.h.b16 %v329
    %v621 = vunpack.c.l.b16 %v330
    %v622 = vunpack.c.h.b16 %v330
    %v623 = vunpack.c.l.b16 %v331
    %v624 = vunpack.c.h.b16 %v331
    %v625 = vunpack.c.l.b16 %v332
    %v626 = vunpack.c.h.b16 %v332
    %v627 = vunpack.c.l.b16 %v333
    %v628 = vunpack.c.h.b16 %v333
    %v629 = vunpack.c.l.b16 %v334
    %v630 = vunpack.c.h.b16 %v334
    %v631 = vunpack.c.l.b16 %v335
    %v632 = vunpack.c.h.b16 %v335
    %v633 = vunpack.c.l.b16 %v336
    %v634 = vunpack.c.h.b16 %v336
    %v635 = vunpack.c.l.b16 %v337
    %v636 = vunpack.c.h.b16 %v337
    %v637 = vunpack.c.l.b16 %v338
    %v638 = vunpack.c.h.b16 %v338
    %v639 = vunpack.c.l.b16 %v339
    %v640 = vunpack.c.h.b16 %v339
    %v641 = vunpack.c.l.b16 %v340
    %v642 = vunpack.c.h.b16 %v340
    %v643 = vunpack.c.l.b16 %v341
    %v644 = vunpack.c.h.b16 %v341
    %v645 = vunpack.c.l.b16 %v342
    %v646 = vunpack.c.h.b16 %v342
    %v647 = vunpack.c.l.b16 %v343
    %v648 = vunpack.c.h.b16 %v343
    %v649 = vunpack.c.l.b16 %v344
    %v650 = vunpack.c.h.b16 %v344
    %v651 = vunpack.c.l.b16 %v345
    %v652 = vunpack.c.h.b16 %v345
    %v653 = vunpack.c.l.b16 %v346
    %v654 = vunpack.c.h.b16 %v346
    %v655 = vunpack.c.l.b16 %v347
    %v656 = vunpack.c.h.b16 %v347
    %v657 = vunpack.c.l.b16 %v348
    %v658 = vunpack.c.h.b16 %v348
    %v659 = vunpack.c.l.b16 %v349
    %v660 = vunpack.c.h.b16 %v349
    %v661 = vunpack.c.l.b16 %v350
    %v662 = vunpack.c.h.b16 %v350
    %v663 = vunpack.c.l.b16 %v351
    %v664 = vunpack.c.h.b16 %v351
    %v665 = vunpack.c.l.b16 %v352
    %v666 = vunpack.c.h.b16 %v352
    %v667 = vunpack.c.l.b16 %v353
    %v668 = vunpack.c.h.b16 %v353
    %v669 = vunpack.c.l.b16 %v354
    %v670 = vunpack.c.h.b16 %v354
    %v671 = vunpack.c.l.b16 %v355
    %v672 = vunpack.c.h.b16 %v355
    %v673 = vunpack.c.l.b16 %v356
    %v674 = vunpack.c.h.b16 %v356
    %v675 = vunpack.c.l.b16 %v357
    %v676 = vunpack.c.h.b16 %v357
    %v677 = vunpack.c.l.b16 %v358
    %v678 = vunpack.c.h.b16 %v358
    %v679 = vunpack.c.l.b16 %v359
    %v680 = vunpack.c.h.b16 %v359
    %v681 = vunpack.c.l.b16 %v360
    %v682 = vunpack.c.h.b16 %v360
    %v683 = vunpack.c.l.b16 %v361
    %v684 = vunpack.c.h.b16 %v361
    %v685 = vunpack.c.l.b16 %v362
    %v686 = vunpack.c.h.b16 %v362
    %v687 = vunpack.c.l.b16 %v363
    %v688 = vunpack.c.h.b16 %v363
    %v689 = vunpack.c.l.b16 %v364
    %v690 = vunpack.c.h.b16 %v364
    %v691 = vunpack.c.l.b16 %v365
    %v692 = vunpack.c.h.b16 %v365
    %v693 = vunpack.c.l.b16 %v366
    %v694 = vunpack.c.h.b16 %v366
    %v695 = vunpack.c.l.b16 %v367
    %v696 = vunpack.c.h.b16 %v367
    %v697 = vunpack.c.l.b16 %v368
    %v698 = vunpack.c.h.b16 %v368
    %v699 = vunpack.c.l.b16 %v369
    %v700 = vunpack.c.h.b16 %v369
    %v701 = vunpack.c.l.b16 %v370
    %v702 = vunpack.c.h.b16 %v370
    %v703 = vunpack.c.l.b16 %v371
    %v704 = vunpack.c.h.b16 %v371
    %v705 = vunpack.c.l.b16 %v372
    %v706 = vunpack.c.h.b16 %v372
    %v707 = vunpack.c.l.b16 %v373
    %v708 = vunpack.c.h.b16 %v373
    %v709 = vunpack.c.l.b16 %v374
    %v710 = vunpack.c.h.b16 %v374
    %v711 = vunpack.c.l.b16 %v375
    %v712 = vunpack.c.h.b16 %v375
    %v713 = vunpack.c.l.b16 %v376
    %v714 = vunpack.c.h.b16 %v376
    %v715 = vunpack.c.l.b16 %v377
    %v716 = vunpack.c.h.b16 %v377
    %v717 = vunpack.c.l.b16 %v378
    %v718 = vunpack.c.h.b16 %v378
    %v719 = vunpack.c.l.b16 %v379
    %v720 = vunpack.c.h.b16 %v379
    %v721 = vunpack.c.l.b16 %v380
    %v722 = vunpack.c.h.b16 %v380
    %v723 = vunpack.c.l.b16 %v381
    %v724 = vunpack.c.h.b16 %v381
    %v725 = vunpack.c.l.b16 %v382
    %v726 = vunpack.c.h.b16 %v382
    %v727 = vunpack.c.l.b16 %v383
    %v728 = vunpack.c.h.b16 %v383
    %v729 = vunpack.c.l.b16 %v384
    %v730 = vunpack.c.h.b16 %v384
    %v731 = vunpack.c.l.b16 %v385
    %v732 = vunpack.c.h.b16 %v385
    %v733 = vunpack.c.l.b16 %v386
    %v734 = vunpack.c.h.b16 %v386
    %v735 = vunpack.c.l.b16 %v387
    %v736 = vunpack.c.h.b16 %v387
    %v737 = vunpack.c.l.b16 %v388
    %v738 = vunpack.c.h.b16 %v388
    %v739 = vunpack.c.l.b16 %v389
    %v740 = vunpack.c.h.b16 %v389
    %v741 = vunpack.c.l.b16 %v390
    %v742 = vunpack.c.h.b16 %v390
    %v743 = vunpack.c.l.b16 %v391
    %v744 = vunpack.c.h.b16 %v391
    %v745 = vunpack.c.l.b16 %v392
    %v746 = vunpack.c.h.b16 %v392
    %v747 = vunpack.c.l.b16 %v393
    %v748 = vunpack.c.h.b16 %v393
    %v749 = vunpack.c.l.b16 %v394
    %v750 = vunpack.c.h.b16 %v394
    %v751 = vunpack.c.l.b16 %v395
    %v752 = vunpack.c.h.b16 %v395
    %v753 = vunpack.c.l.b16 %v396
    %v754 = vunpack.c.h.b16 %v396
    %v755 = vunpack.c.l.b16 %v397
    %v756 = vunpack.c.h.b16 %v397
    %v757 = vunpack.c.l.b16 %v398
    %v758 = vunpack.c.h.b16 %v398
    %v759 = vunpack.c.l.b16 %v399
    %v760 = vunpack.c.h.b16 %v399
    %v761 = vunpack.c.l.b16 %v400
    %v762 = vunpack.c.h.b16 %v400
    %v763 = vunpack.c.l.b16 %v401
    %v764 = vunpack.c.h.b16 %v401
    %v765 = vunpack.c.l.b16 %v402
    %v766 = vunpack.c.h.b16 %v402
    %v767 = vunpack.c.l.b16 %v403
    %v768 = vunpack.c.h.b16 %v403
    %v769 = vunpack.c.l.b16 %v404
    %v770 = vunpack.c.h.b16 %v404
    %v771 = vunpack.c.l.b16 %v405
    %v772 = vunpack.c.h.b16 %v405
    %v773 = vunpack.c.l.b16 %v406
    %v774 = vunpack.c.h.b16 %v406
    %v775 = vunpack.c.l.b16 %v407
    %v776 = vunpack.c.h.b16 %v407
    %v777 = vunpack.c.l.b16 %v408
    %v778 = vunpack.c.h.b16 %v408
    %v779 = vunpack.c.l.b16 %v409
    %v780 = vunpack.c.h.b16 %v409
    %v781 = vunpack.c.l.b16 %v410
    %v782 = vunpack.c.h.b16 %v410
    %v783 = vunpack.c.l.b16 %v411
    %v784 = vunpack.c.h.b16 %v411
    %v785 = vunpack.c.l.b16 %v412
    %v786 = vunpack.c.h.b16 %v412
    %v787 = vunpack.c.l.b16 %v413
    %v788 = vunpack.c.h.b16 %v413
    %v789 = vunpack.c.l.b16 %v414
    %v790 = vunpack.c.h.b16 %v414
    %v791 = vunpack.c.l.b16 %v415
    %v792 = vunpack.c.h.b16 %v415
    %v793 = vunpack.c.l.b16 %v416
    %v794 = vunpack.c.h.b16 %v416
    %v795 = vunpack.c.l.b16 %v417
    %v796 = vunpack.c.h.b16 %v417
    %v797 = vunpack.c.l.b16 %v418
    %v798 = vunpack.c.h.b16 %v418
    %v799 = vunpack.c.l.b16 %v419
    %v800 = vunpack.c.h.b16 %v419
    %v801 = vunpack.c.l.b16 %v420
    %v802 = vunpack.c.h.b16 %v420
    %v803 = vunpack.c.l.b16 %v421
    %v804 = vunpack.c.h.b16 %v421
    %v805 = vunpack.c.l.b16 %v422
    %v806 = vunpack.c.h.b16 %v422
    %v807 = vunpack.c.l.b16 %v423
    %v808 = vunpack.c.h.b16 %v423
    %v809 = vunpack.c.l.b16 %v424
    %v810 = vunpack.c.h.b16 %v424
    %v811 = vunpack.c.l.b16 %v425
    %v812 = vunpack.c.h.b16 %v425
    %v813 = vunpack.c.l.b16 %v426
    %v814 = vunpack.c.h.b16 %v426
    %v815 = vunpack.c.l.b16 %v427
    %v816 = vunpack.c.h.b16 %v427
    %v817 = vunpack.c.l.b16 %v428
    %v818 = vunpack.c.h.b16 %v428
    %v819 = vunpack.c.l.b16 %v429
    %v820 = vunpack.c.h.b16 %v429
    %v821 = vunpack.c.l.b16 %v430
    %v822 = vunpack.c.h.b16 %v430
    %v823 = vunpack.c.l.b16 %v431
    %v824 = vunpack.c.h.b16 %v431
    %v825 = vunpack.c.l.b16 %v432
    %v826 = vunpack.c.h.b16 %v432
    %v827 = vunpack.c.l.b16 %v433
    %v828 = vunpack.c.h.b16 %v433
    %v829 = vunpack.c.l.b16 %v434
    %v830 = vunpack.c.h.b16 %v434
    %v831 = vunpack.c.l.b16 %v435
    %v832 = vunpack.c.h.b16 %v435
    %v833 = vunpack.c.l.b16 %v436
    %v834 = vunpack.c.h.b16 %v436
    %v835 = vpack.c.b16 %v583, %v579
    %v836 = vpack.c.b16 %v584, %v580
    %v837 = vpack.c.b16 %v585, %v581
    %v838 = vpack.c.b16 %v586, %v582
    %v839 = vpack.c.b16 %v591, %v587
    %v840 = vpack.c.b16 %v592, %v588
    %v841 = vpack.c.b16 %v593, %v589
    %v842 = vpack.c.b16 %v594, %v590
    %v843 = vpack.c.b16 %v599, %v595
    %v844 = vpack.c.b16 %v600, %v596
    %v845 = vpack.c.b16 %v601, %v597
    %v846 = vpack.c.b16 %v602, %v598
    %v847 = vpack.c.b16 %v607, %v603
    %v848 = vpack.c.b16 %v608, %v604
    %v849 = vpack.c.b16 %v609, %v605
    %v850 = vpack.c.b16 %v610, %v606
    %v851 = vpack.c.b16 %v615, %v611
    %v852 = vpack.c.b16 %v616, %v612
    %v853 = vpack.c.b16 %v617, %v613
    %v854 = vpack.c.b16 %v618, %v614
    %v855 = vpack.c.b16 %v623, %v619
    %v856 = vpack.c.b16 %v624, %v620
    %v857 = vpack.c.b16 %v625, %v621
    %v858 = vpack.c.b16 %v626, %v622
    %v859 = vpack.c.b16 %v631, %v627
    %v860 = vpack.c.b16 %v632, %v628
    %v861 = vpack.c.b16 %v633, %v629
    %v862 = vpack.c.b16 %v634, %v630
    %v863 = vpack.c.b16 %v639, %v635
    %v864 = vpack.c.b16 %v640, %v636
    %v865 = vpack.c.b16 %v641, %v637
    %v866 = vpack.c.b16 %v642, %v638
    %v867 = vpack.c.b16 %v647, %v643
    %v868 = vpack.c.b16 %v648, %v644
    %v869 = vpack.c.b16 %v649, %v645
    %v870 = vpack.c.b16 %v650, %v646
    %v871 = vpack.c.b16 %v655, %v651
    %v872 = vpack.c.b16 %v656, %v652
    %v873 = vpack.c.b16 %v657, %v653
    %v874 = vpack.c.b16 %v658, %v654
    %v875 = vpack.c.b16 %v663, %v659
    %v876 = vpack.c.b16 %v664, %v660
    %v877 = vpack.c.b16 %v665, %v661
    %v878 = vpack.c.b16 %v666, %v662
    %v879 = vpack.c.b16 %v671, %v667
    %v880 = vpack.c.b16 %v672, %v668
    %v881 = vpack.c.b16 %v673, %v669
    %v882 = vpack.c.b16 %v674, %v670
    %v883 = vpack.c.b16 %v679, %v675
    %v884 = vpack.c.b16 %v680, %v676
    %v885 = vpack.c.b16 %v681, %v677
    %v886 = vpack.c.b16 %v682, %v678
    %v887 = vpack.c.b16 %v687, %v683
    %v888 = vpack.c.b16 %v688, %v684
    %v889 = vpack.c.b16 %v689, %v685
    %v890 = vpack.c.b16 %v690, %v686
    %v891 = vpack.c.b16 %v695, %v691
    %v892 = vpack.c.b16 %v696, %v692
    %v893 = vpack.c.b16 %v697, %v693
    %v894 = vpack.c.b16 %v698, %v694
    %v895 = vpack.c.b16 %v703, %v699
    %v896 = vpack.c.b16 %v704, %v700
    %v897 = vpack.c.b16 %v705, %v701
    %v898 = vpack.c.b16 %v706, %v702
    %v899 = vpack.c.b16 %v711, %v707
    %v900 = vpack.c.b16 %v712, %v708
    %v901 = vpack.c.b16 %v713, %v709
    %v902 = vpack.c.b16 %v714, %v710
    %v903 = vpack.c.b16 %v719, %v715
    %v904 = vpack.c.b16 %v720, %v716
    %v905 = vpack.c.b16 %v721, %v717
    %v906 = vpack.c.b16 %v722, %v718
    %v907 = vpack.c.b16 %v727, %v723
    %v908 = vpack.c.b16 %v728, %v724
    %v909 = vpack.c.b16 %v729, %v725
    %v910 = vpack.c.b16 %v730, %v726
    %v911 = vpack.c.b16 %v735, %v731
    %v912 = vpack.c.b16 %v736, %v732
    %v913 = vpack.c.b16 %v737, %v733
    %v914 = vpack.c.b16 %v738, %v734
    %v915 = vpack.c.b16 %v743, %v739
    %v916 = vpack.c.b16 %v744, %v740
    %v917 = vpack.c.b16 %v745, %v741
    %v918 = vpack.c.b16 %v746, %v742
    %v919 = vpack.c.b16 %v751, %v747
    %v920 = vpack.c.b16 %v752, %v748
    %v921 = vpack.c.b16 %v753, %v749
    %v922 = vpack.c.b16 %v754, %v750
    %v923 = vpack.c.b16 %v759, %v755
    %v924 = vpack.c.b16 %v760, %v756
    %v925 = vpack.c.b16 %v761, %v757
    %v926 = vpack.c.b16 %v762, %v758
    %v927 = vpack.c.b16 %v767, %v763
    %v928 = vpack.c.b16 %v768, %v764
    %v929 = vpack.c.b16 %v769, %v765
    %v930 = vpack.c.b16 %v770, %v766
    %v931 = vpack.c.b16 %v775, %v771
    %v932 = vpack.c.b16 %v776, %v772
    %v933 = vpack.c.b16 %v777, %v773
    %v934 = vpack.c.b16 %v778, %v774
    %v935 = vpack.c.b16 %v783, %v779
    %v936 = vpack.c.b16 %v784, %v780
    %v937 = vpack.c.b16 %v785, %v781
    %v938 = vpack.c.b16 %v786, %v782
    %v939 = vpack.c.b16 %v791, %v787
    %v940 = vpack.c.b16 %v792, %v788
    %v941 = vpack.c.b16 %v793, %v789
    %v942 = vpack.c.b16 %v794, %v790
    %v943 = vpack.c.b16 %v799, %v795
    %v944 = vpack.c.b16 %v800, %v796
    %v945 = vpack.c.b16 %v801, %v797
    %v946 = vpack.c.b16 %v802, %v798
    %v947 = vpack.c.b16 %v807, %v803
    %v948 = vpack.c.b16 %v808, %v804
    %v949 = vpack.c.b16 %v809, %v805
    %v950 = vpack.c.b16 %v810, %v806
    %v951 = vpack.c.b16 %v815, %v811
    %v952 = vpack.c.b16 %v816, %v812
    %v953 = vpack.c.b16 %v817, %v813
    %v954 = vpack.c.b16 %v818, %v814
    %v955 = vpack.c.b16 %v823, %v819
    %v956 = vpack.c.b16 %v824, %v820
    %v957 = vpack.c.b16 %v825, %v821
    %v958 = vpack.c.b16 %v826, %v822
    %v959 = vpack.c.b16 %v831, %v827
    %v960 = vpack.c.b16 %v832, %v828
    %v961 = vpack.c.b16 %v833, %v829
    %v962 = vpack.c.b16 %v834, %v830
    %1091 = vmatpush.bf16.msra.mxu0 %v863
    %1092 = vmatpush.bf16.msra.mxu0 %v859
    %1093 = vmatpush.bf16.msra.mxu0 %v855
    %1094 = vmatpush.bf16.msra.mxu0 %v851
    %1095 = vmatpush.bf16.msra.mxu0 %v847
    %1096 = vmatpush.bf16.msra.mxu0 %v843
    %1097 = vmatpush.bf16.msra.mxu0 %v839
    %1098 = vmatpush.bf16.msra.mxu0 %v835
    %1099 = vmatmul.bf16.gmra.mxu0 %v438
    %v1100 = vpop.f32.mrf.mxu0
    %v1101 = vadd.f32 %v443, %v1100
    %v1102 = vpop.f32.mrf.mxu0
    %1103 = vdwg.mxu0
    %1104 = vmatpush.bf16.msra.mxu0 %v895
    %1105 = vmatpush.bf16.msra.mxu0 %v891
    %1106 = vmatpush.bf16.msra.mxu0 %v887
    %1107 = vmatpush.bf16.msra.mxu0 %v883
    %1108 = vmatpush.bf16.msra.mxu0 %v879
    %1109 = vmatpush.bf16.msra.mxu0 %v875
    %1110 = vmatpush.bf16.msra.mxu0 %v871
    %1111 = vmatpush.bf16.msra.mxu0 %v867
    %1112 = vmatmul.bf16.gmra.mxu0 %v439
    %v1113 = vpop.f32.mrf.mxu0
    %v1114 = vadd.f32 %v1101, %v1113
    %v1115 = vpop.f32.mrf.mxu0
    %1116 = vdwg.mxu0
    %1117 = vmatpush.bf16.msra.mxu0 %v927
    %1118 = vmatpush.bf16.msra.mxu0 %v923
    %1119 = vmatpush.bf16.msra.mxu0 %v919
    %1120 = vmatpush.bf16.msra.mxu0 %v915
    %1121 = vmatpush.bf16.msra.mxu0 %v911
    %1122 = vmatpush.bf16.msra.mxu0 %v907
    %1123 = vmatpush.bf16.msra.mxu0 %v903
    %1124 = vmatpush.bf16.msra.mxu0 %v899
    %1125 = vmatmul.bf16.gmra.mxu0 %v440
    %v1126 = vpop.f32.mrf.mxu0
    %v1127 = vadd.f32 %v1114, %v1126
    %v1128 = vpop.f32.mrf.mxu0
    %1129 = vdwg.mxu0
    %1130 = vmatpush.bf16.msra.mxu0 %v959
    %1131 = vmatpush.bf16.msra.mxu0 %v955
    %1132 = vmatpush.bf16.msra.mxu0 %v951
    %1133 = vmatpush.bf16.msra.mxu0 %v947
    %1134 = vmatpush.bf16.msra.mxu0 %v943
    %1135 = vmatpush.bf16.msra.mxu0 %v939
    %1136 = vmatpush.bf16.msra.mxu0 %v935
    %1137 = vmatpush.bf16.msra.mxu0 %v931
    %1138 = vmatmul.bf16.gmra.mxu0 %v441
    %v1139 = vpop.f32.mrf.mxu0
    %v1140 = vadd.f32 %v1127, %v1139
    %v1141 = vpop.f32.mrf.mxu0
    %1142 = vdwg.mxu0
    %1143 = vmatpush.bf16.msra.mxu0 %v864
    %1144 = vmatpush.bf16.msra.mxu0 %v860
    %1145 = vmatpush.bf16.msra.mxu0 %v856
    %1146 = vmatpush.bf16.msra.mxu0 %v852
    %1147 = vmatpush.bf16.msra.mxu0 %v848
    %1148 = vmatpush.bf16.msra.mxu0 %v844
    %1149 = vmatpush.bf16.msra.mxu0 %v840
    %1150 = vmatpush.bf16.msra.mxu0 %v836
    %1151 = vmatmul.bf16.gmra.mxu0 %v438
    %v1152 = vpop.f32.mrf.mxu0
    %v1153 = vadd.f32 %v444, %v1152
    %v1154 = vpop.f32.mrf.mxu0
    %1155 = vdwg.mxu0
    %1156 = vmatpush.bf16.msra.mxu0 %v896
    %1157 = vmatpush.bf16.msra.mxu0 %v892
    %1158 = vmatpush.bf16.msra.mxu0 %v888
    %1159 = vmatpush.bf16.msra.mxu0 %v884
    %1160 = vmatpush.bf16.msra.mxu0 %v880
    %1161 = vmatpush.bf16.msra.mxu0 %v876
    %1162 = vmatpush.bf16.msra.mxu0 %v872
    %1163 = vmatpush.bf16.msra.mxu0 %v868
    %1164 = vmatmul.bf16.gmra.mxu0 %v439
    %v1165 = vpop.f32.mrf.mxu0
    %v1166 = vadd.f32 %v1153, %v1165
    %v1167 = vpop.f32.mrf.mxu0
    %1168 = vdwg.mxu0
    %1169 = vmatpush.bf16.msra.mxu0 %v928
    %1170 = vmatpush.bf16.msra.mxu0 %v924
    %1171 = vmatpush.bf16.msra.mxu0 %v920
    %1172 = vmatpush.bf16.msra.mxu0 %v916
    %1173 = vmatpush.bf16.msra.mxu0 %v912
    %1174 = vmatpush.bf16.msra.mxu0 %v908
    %1175 = vmatpush.bf16.msra.mxu0 %v904
    %1176 = vmatpush.bf16.msra.mxu0 %v900
    %1177 = vmatmul.bf16.gmra.mxu0 %v440
    %v1178 = vpop.f32.mrf.mxu0
    %v1179 = vadd.f32 %v1166, %v1178
    %v1180 = vpop.f32.mrf.mxu0
    %1181 = vdwg.mxu0
    %1182 = vmatpush.bf16.msra.mxu0 %v960
    %1183 = vmatpush.bf16.msra.mxu0 %v956
    %1184 = vmatpush.bf16.msra.mxu0 %v952
    %1185 = vmatpush.bf16.msra.mxu0 %v948
    %1186 = vmatpush.bf16.msra.mxu0 %v944
    %1187 = vmatpush.bf16.msra.mxu0 %v940
    %1188 = vmatpush.bf16.msra.mxu0 %v936
    %1189 = vmatpush.bf16.msra.mxu0 %v932
    %1190 = vmatmul.bf16.gmra.mxu0 %v441
    %v1191 = vpop.f32.mrf.mxu0
    %v1192 = vadd.f32 %v1179, %v1191
    %v1193 = vpop.f32.mrf.mxu0
    %1194 = vdwg.mxu0
    %1195 = vmatpush.bf16.msra.mxu0 %v865
    %1196 = vmatpush.bf16.msra.mxu0 %v861
    %1197 = vmatpush.bf16.msra.mxu0 %v857
    %1198 = vmatpush.bf16.msra.mxu0 %v853
    %1199 = vmatpush.bf16.msra.mxu0 %v849
    %1200 = vmatpush.bf16.msra.mxu0 %v845
    %1201 = vmatpush.bf16.msra.mxu0 %v841
    %1202 = vmatpush.bf16.msra.mxu0 %v837
    %1203 = vmatmul.bf16.gmra.mxu0 %v438
    %v1204 = vpop.f32.mrf.mxu0
    %v1205 = vadd.f32 %v445, %v1204
    %v1206 = vpop.f32.mrf.mxu0
    %1207 = vdwg.mxu0
    %1208 = vmatpush.bf16.msra.mxu0 %v897
    %1209 = vmatpush.bf16.msra.mxu0 %v893
    %1210 = vmatpush.bf16.msra.mxu0 %v889
    %1211 = vmatpush.bf16.msra.mxu0 %v885
    %1212 = vmatpush.bf16.msra.mxu0 %v881
    %1213 = vmatpush.bf16.msra.mxu0 %v877
    %1214 = vmatpush.bf16.msra.mxu0 %v873
    %1215 = vmatpush.bf16.msra.mxu0 %v869
    %1216 = vmatmul.bf16.gmra.mxu0 %v439
    %v1217 = vpop.f32.mrf.mxu0
    %v1218 = vadd.f32 %v1205, %v1217
    %v1219 = vpop.f32.mrf.mxu0
    %1220 = vdwg.mxu0
    %1221 = vmatpush.bf16.msra.mxu0 %v929
    %1222 = vmatpush.bf16.msra.mxu0 %v925
    %1223 = vmatpush.bf16.msra.mxu0 %v921
    %1224 = vmatpush.bf16.msra.mxu0 %v917
    %1225 = vmatpush.bf16.msra.mxu0 %v913
    %1226 = vmatpush.bf16.msra.mxu0 %v909
    %1227 = vmatpush.bf16.msra.mxu0 %v905
    %1228 = vmatpush.bf16.msra.mxu0 %v901
    %1229 = vmatmul.bf16.gmra.mxu0 %v440
    %v1230 = vpop.f32.mrf.mxu0
    %v1231 = vadd.f32 %v1218, %v1230
    %v1232 = vpop.f32.mrf.mxu0
    %1233 = vdwg.mxu0
    %1234 = vmatpush.bf16.msra.mxu0 %v961
    %1235 = vmatpush.bf16.msra.mxu0 %v957
    %1236 = vmatpush.bf16.msra.mxu0 %v953
    %1237 = vmatpush.bf16.msra.mxu0 %v949
    %1238 = vmatpush.bf16.msra.mxu0 %v945
    %1239 = vmatpush.bf16.msra.mxu0 %v941
    %1240 = vmatpush.bf16.msra.mxu0 %v937
    %1241 = vmatpush.bf16.msra.mxu0 %v933
    %1242 = vmatmul.bf16.gmra.mxu0 %v441
    %v1243 = vpop.f32.mrf.mxu0
    %v1244 = vadd.f32 %v1231, %v1243
    %v1245 = vpop.f32.mrf.mxu0
    %1246 = vdwg.mxu0
    %1247 = vmatpush.bf16.msra.mxu0 %v866
    %1248 = vmatpush.bf16.msra.mxu0 %v862
    %1249 = vmatpush.bf16.msra.mxu0 %v858
    %1250 = vmatpush.bf16.msra.mxu0 %v854
    %1251 = vmatpush.bf16.msra.mxu0 %v850
    %1252 = vmatpush.bf16.msra.mxu0 %v846
    %1253 = vmatpush.bf16.msra.mxu0 %v842
    %1254 = vmatpush.bf16.msra.mxu0 %v838
    %1255 = vmatmul.bf16.gmra.mxu0 %v438
    %v1256 = vpop.f32.mrf.mxu0
    %v1257 = vadd.f32 %v446, %v1256
    %v1258 = vpop.f32.mrf.mxu0
    %1259 = vdwg.mxu0
    %1260 = vmatpush.bf16.msra.mxu0 %v898
    %1261 = vmatpush.bf16.msra.mxu0 %v894
    %1262 = vmatpush.bf16.msra.mxu0 %v890
    %1263 = vmatpush.bf16.msra.mxu0 %v886
    %1264 = vmatpush.bf16.msra.mxu0 %v882
    %1265 = vmatpush.bf16.msra.mxu0 %v878
    %1266 = vmatpush.bf16.msra.mxu0 %v874
    %1267 = vmatpush.bf16.msra.mxu0 %v870
    %1268 = vmatmul.bf16.gmra.mxu0 %v439
    %v1269 = vpop.f32.mrf.mxu0
    %v1270 = vadd.f32 %v1257, %v1269
    %v1271 = vpop.f32.mrf.mxu0
    %1272 = vdwg.mxu0
    %1273 = vmatpush.bf16.msra.mxu0 %v930
    %1274 = vmatpush.bf16.msra.mxu0 %v926
    %1275 = vmatpush.bf16.msra.mxu0 %v922
    %1276 = vmatpush.bf16.msra.mxu0 %v918
    %1277 = vmatpush.bf16.msra.mxu0 %v914
    %1278 = vmatpush.bf16.msra.mxu0 %v910
    %1279 = vmatpush.bf16.msra.mxu0 %v906
    %1280 = vmatpush.bf16.msra.mxu0 %v902
    %1281 = vmatmul.bf16.gmra.mxu0 %v440
    %v1282 = vpop.f32.mrf.mxu0
    %v1283 = vadd.f32 %v1270, %v1282
    %v1284 = vpop.f32.mrf.mxu0
    %1285 = vdwg.mxu0
    %1286 = vmatpush.bf16.msra.mxu0 %v962
    %1287 = vmatpush.bf16.msra.mxu0 %v958
    %1288 = vmatpush.bf16.msra.mxu0 %v954
    %1289 = vmatpush.bf16.msra.mxu0 %v950
    %1290 = vmatpush.bf16.msra.mxu0 %v946
    %1291 = vmatpush.bf16.msra.mxu0 %v942
    %1292 = vmatpush.bf16.msra.mxu0 %v938
    %1293 = vmatpush.bf16.msra.mxu0 %v934
    %1294 = vmatmul.bf16.gmra.mxu0 %v441
    %v1295 = vpop.f32.mrf.mxu0
    %v1296 = vadd.f32 %v1283, %v1295
    %v1297 = vpop.f32.mrf.mxu0
    %1298 = vdwg.mxu0
    %v1299 = vmax.f32 %v1140, 0.0
    %v1300 = vmax.f32 %v1192, 0.0
    %v1301 = vmax.f32 %v1244, 0.0
    %v1302 = vmax.f32 %v1296, 0.0
    %v1303 = vand.u32 2147483647, %v1140
    %v1304 = vand.u32 2147483647, %v1192
    %v1305 = vand.u32 2147483647, %v1244
    %v1306 = vand.u32 2147483647, %v1296
    %v1307 = vsub.f32 0.0, %v1303
    %v1308 = vsub.f32 0.0, %v1304
    %v1309 = vsub.f32 0.0, %v1305
    %v1310 = vsub.f32 0.0, %v1306
    %v1311 = vmul.f32 %v1307, 1.442695
    %v1312 = vpow.pop %v1311
    %v1313 = vmul.f32 %v1308, 1.442695
    %v1314 = vpow.pop %v1313
    %v1315 = vmul.f32 %v1309, 1.442695
    %v1316 = vpow.pop %v1315
    %v1317 = vmul.f32 %v1310, 1.442695
    %v1318 = vpow.pop %v1317
    %v1319 = vadd.f32 %v1312, 1.0
    %v1320 = vadd.f32 %v1314, 1.0
    %v1321 = vadd.f32 %v1316, 1.0
    %v1322 = vadd.f32 %v1318, 1.0
    %v1323 = vlog2.pop %v1319
    %v1324 = vmul.f32 %v1323, 0.6931472
    %v1325 = vlog2.pop %v1320
    %v1326 = vmul.f32 %v1325, 0.6931472
    %v1327 = vlog2.pop %v1321
    %v1328 = vmul.f32 %v1327, 0.6931472
    %v1329 = vlog2.pop %v1322
    %v1330 = vmul.f32 %v1329, 0.6931472
    %v1331 = vadd.f32 %v1299, %v1324
    %v1332 = vadd.f32 %v1300, %v1326
    %v1333 = vadd.f32 %v1301, %v1328
    %v1334 = vadd.f32 %v1302, %v1330
    %v1335 = vtanh.pop %v1331
    %v1336 = vtanh.pop %v1332
    %v1337 = vtanh.pop %v1333
    %v1338 = vtanh.pop %v1334
    %v1339 = vmul.f32 %v1140, %v1335
    %v1340 = vmul.f32 %v1192, %v1336
    %v1341 = vmul.f32 %v1244, %v1337
    %v1342 = vmul.f32 %v1296, %v1338
    %v1343 = vld [vmem:[#allocation11] sm:$0xff]
    %v1344 = vld [vmem:[#allocation11 + $0x8] sm:$0xff]
    %v1345 = vld [vmem:[#allocation11 + $0x10] sm:$0xff]
    %v1346 = vld [vmem:[#allocation11 + $0x18] sm:$0xff]
    %v1347 = vld [vmem:[#allocation11 + $0x20] sm:$0xff]
    %v1348 = vld [vmem:[#allocation11 + $0x28] sm:$0xff]
    %v1349 = vld [vmem:[#allocation11 + $0x30] sm:$0xff]
    %v1350 = vld [vmem:[#allocation11 + $0x38] sm:$0xff]
    %v1351 = vld [vmem:[#allocation11 + $0x40] sm:$0xff]
    %v1352 = vld [vmem:[#allocation11 + $0x48] sm:$0xff]
    %v1353 = vld [vmem:[#allocation11 + $0x50] sm:$0xff]
    %v1354 = vld [vmem:[#allocation11 + $0x58] sm:$0xff]
    %v1355 = vld [vmem:[#allocation11 + $0x60] sm:$0xff]
    %v1356 = vld [vmem:[#allocation11 + $0x68] sm:$0xff]
    %v1357 = vld [vmem:[#allocation11 + $0x70] sm:$0xff]
    %v1358 = vld [vmem:[#allocation11 + $0x78] sm:$0xff]
    %v1359 = vld [vmem:[#allocation11 + $0x80] sm:$0xff]
    %v1360 = vld [vmem:[#allocation11 + $0x88] sm:$0xff]
    %v1361 = vld [vmem:[#allocation11 + $0x90] sm:$0xff]
    %v1362 = vld [vmem:[#allocation11 + $0x98] sm:$0xff]
    %v1363 = vld [vmem:[#allocation11 + $0xa0] sm:$0xff]
    %v1364 = vld [vmem:[#allocation11 + $0xa8] sm:$0xff]
    %v1365 = vld [vmem:[#allocation11 + $0xb0] sm:$0xff]
    %v1366 = vld [vmem:[#allocation11 + $0xb8] sm:$0xff]
    %v1367 = vld [vmem:[#allocation11 + $0xc0] sm:$0xff]
    %v1368 = vld [vmem:[#allocation11 + $0xc8] sm:$0xff]
    %v1369 = vld [vmem:[#allocation11 + $0xd0] sm:$0xff]
    %v1370 = vld [vmem:[#allocation11 + $0xd8] sm:$0xff]
    %v1371 = vld [vmem:[#allocation11 + $0xe0] sm:$0xff]
    %v1372 = vld [vmem:[#allocation11 + $0xe8] sm:$0xff]
    %v1373 = vld [vmem:[#allocation11 + $0xf0] sm:$0xff]
    %v1374 = vld [vmem:[#allocation11 + $0xf8] sm:$0xff]
    %v1375 = vld [vmem:[#allocation11 + $0x100] sm:$0xff]
    %v1376 = vld [vmem:[#allocation11 + $0x108] sm:$0xff]
    %v1377 = vld [vmem:[#allocation11 + $0x110] sm:$0xff]
    %v1378 = vld [vmem:[#allocation11 + $0x118] sm:$0xff]
    %v1379 = vld [vmem:[#allocation11 + $0x120] sm:$0xff]
    %v1380 = vld [vmem:[#allocation11 + $0x128] sm:$0xff]
    %v1381 = vld [vmem:[#allocation11 + $0x130] sm:$0xff]
    %v1382 = vld [vmem:[#allocation11 + $0x138] sm:$0xff]
    %v1383 = vld [vmem:[#allocation11 + $0x140] sm:$0xff]
    %v1384 = vld [vmem:[#allocation11 + $0x148] sm:$0xff]
    %v1385 = vld [vmem:[#allocation11 + $0x150] sm:$0xff]
    %v1386 = vld [vmem:[#allocation11 + $0x158] sm:$0xff]
    %v1387 = vld [vmem:[#allocation11 + $0x160] sm:$0xff]
    %v1388 = vld [vmem:[#allocation11 + $0x168] sm:$0xff]
    %v1389 = vld [vmem:[#allocation11 + $0x170] sm:$0xff]
    %v1390 = vld [vmem:[#allocation11 + $0x178] sm:$0xff]
    %v1391 = vld [vmem:[#allocation11 + $0x180] sm:$0xff]
    %v1392 = vld [vmem:[#allocation11 + $0x188] sm:$0xff]
    %v1393 = vld [vmem:[#allocation11 + $0x190] sm:$0xff]
    %v1394 = vld [vmem:[#allocation11 + $0x198] sm:$0xff]
    %v1395 = vld [vmem:[#allocation11 + $0x1a0] sm:$0xff]
    %v1396 = vld [vmem:[#allocation11 + $0x1a8] sm:$0xff]
    %v1397 = vld [vmem:[#allocation11 + $0x1b0] sm:$0xff]
    %v1398 = vld [vmem:[#allocation11 + $0x1b8] sm:$0xff]
    %v1399 = vld [vmem:[#allocation11 + $0x1c0] sm:$0xff]
    %v1400 = vld [vmem:[#allocation11 + $0x1c8] sm:$0xff]
    %v1401 = vld [vmem:[#allocation11 + $0x1d0] sm:$0xff]
    %v1402 = vld [vmem:[#allocation11 + $0x1d8] sm:$0xff]
    %v1403 = vld [vmem:[#allocation11 + $0x1e0] sm:$0xff]
    %v1404 = vld [vmem:[#allocation11 + $0x1e8] sm:$0xff]
    %v1405 = vld [vmem:[#allocation11 + $0x1f0] sm:$0xff]
    %v1406 = vld [vmem:[#allocation11 + $0x1f8] sm:$0xff]
    %v1407 = vld [vmem:[#allocation11 + $0x200] sm:$0xff]
    %v1408 = vld [vmem:[#allocation11 + $0x208] sm:$0xff]
    %v1409 = vld [vmem:[#allocation11 + $0x210] sm:$0xff]
    %v1410 = vld [vmem:[#allocation11 + $0x218] sm:$0xff]
    %v1411 = vld [vmem:[#allocation11 + $0x220] sm:$0xff]
    %v1412 = vld [vmem:[#allocation11 + $0x228] sm:$0xff]
    %v1413 = vld [vmem:[#allocation11 + $0x230] sm:$0xff]
    %v1414 = vld [vmem:[#allocation11 + $0x238] sm:$0xff]
    %v1415 = vld [vmem:[#allocation11 + $0x240] sm:$0xff]
    %v1416 = vld [vmem:[#allocation11 + $0x248] sm:$0xff]
    %v1417 = vld [vmem:[#allocation11 + $0x250] sm:$0xff]
    %v1418 = vld [vmem:[#allocation11 + $0x258] sm:$0xff]
    %v1419 = vld [vmem:[#allocation11 + $0x260] sm:$0xff]
    %v1420 = vld [vmem:[#allocation11 + $0x268] sm:$0xff]
    %v1421 = vld [vmem:[#allocation11 + $0x270] sm:$0xff]
    %v1422 = vld [vmem:[#allocation11 + $0x278] sm:$0xff]
    %v1423 = vld [vmem:[#allocation11 + $0x280] sm:$0xff]
    %v1424 = vld [vmem:[#allocation11 + $0x288] sm:$0xff]
    %v1425 = vld [vmem:[#allocation11 + $0x290] sm:$0xff]
    %v1426 = vld [vmem:[#allocation11 + $0x298] sm:$0xff]
    %v1427 = vld [vmem:[#allocation11 + $0x2a0] sm:$0xff]
    %v1428 = vld [vmem:[#allocation11 + $0x2a8] sm:$0xff]
    %v1429 = vld [vmem:[#allocation11 + $0x2b0] sm:$0xff]
    %v1430 = vld [vmem:[#allocation11 + $0x2b8] sm:$0xff]
    %v1431 = vld [vmem:[#allocation11 + $0x2c0] sm:$0xff]
    %v1432 = vld [vmem:[#allocation11 + $0x2c8] sm:$0xff]
    %v1433 = vld [vmem:[#allocation11 + $0x2d0] sm:$0xff]
    %v1434 = vld [vmem:[#allocation11 + $0x2d8] sm:$0xff]
    %v1435 = vld [vmem:[#allocation11 + $0x2e0] sm:$0xff]
    %v1436 = vld [vmem:[#allocation11 + $0x2e8] sm:$0xff]
    %v1437 = vld [vmem:[#allocation11 + $0x2f0] sm:$0xff]
    %v1438 = vld [vmem:[#allocation11 + $0x2f8] sm:$0xff]
    %v1439 = vld [vmem:[#allocation11 + $0x300] sm:$0xff]
    %v1440 = vld [vmem:[#allocation11 + $0x308] sm:$0xff]
    %v1441 = vld [vmem:[#allocation11 + $0x310] sm:$0xff]
    %v1442 = vld [vmem:[#allocation11 + $0x318] sm:$0xff]
    %v1443 = vld [vmem:[#allocation11 + $0x320] sm:$0xff]
    %v1444 = vld [vmem:[#allocation11 + $0x328] sm:$0xff]
    %v1445 = vld [vmem:[#allocation11 + $0x330] sm:$0xff]
    %v1446 = vld [vmem:[#allocation11 + $0x338] sm:$0xff]
    %v1447 = vld [vmem:[#allocation11 + $0x340] sm:$0xff]
    %v1448 = vld [vmem:[#allocation11 + $0x348] sm:$0xff]
    %v1449 = vld [vmem:[#allocation11 + $0x350] sm:$0xff]
    %v1450 = vld [vmem:[#allocation11 + $0x358] sm:$0xff]
    %v1451 = vld [vmem:[#allocation11 + $0x360] sm:$0xff]
    %v1452 = vld [vmem:[#allocation11 + $0x368] sm:$0xff]
    %v1453 = vld [vmem:[#allocation11 + $0x370] sm:$0xff]
    %v1454 = vld [vmem:[#allocation11 + $0x378] sm:$0xff]
    %v1455 = vld [vmem:[#allocation11 + $0x380] sm:$0xff]
    %v1456 = vld [vmem:[#allocation11 + $0x388] sm:$0xff]
    %v1457 = vld [vmem:[#allocation11 + $0x390] sm:$0xff]
    %v1458 = vld [vmem:[#allocation11 + $0x398] sm:$0xff]
    %v1459 = vld [vmem:[#allocation11 + $0x3a0] sm:$0xff]
    %v1460 = vld [vmem:[#allocation11 + $0x3a8] sm:$0xff]
    %v1461 = vld [vmem:[#allocation11 + $0x3b0] sm:$0xff]
    %v1462 = vld [vmem:[#allocation11 + $0x3b8] sm:$0xff]
    %v1463 = vld [vmem:[#allocation11 + $0x3c0] sm:$0xff]
    %v1464 = vld [vmem:[#allocation11 + $0x3c8] sm:$0xff]
    %v1465 = vld [vmem:[#allocation11 + $0x3d0] sm:$0xff]
    %v1466 = vld [vmem:[#allocation11 + $0x3d8] sm:$0xff]
    %v1467 = vld [vmem:[#allocation11 + $0x3e0] sm:$0xff]
    %v1468 = vld [vmem:[#allocation11 + $0x3e8] sm:$0xff]
    %v1469 = vld [vmem:[#allocation11 + $0x3f0] sm:$0xff]
    %v1470 = vld [vmem:[#allocation11 + $0x3f8] sm:$0xff]
    %v1471 = vld [vmem:[#allocation11 + $0x400] sm:$0xff]
    %v1472 = vld [vmem:[#allocation11 + $0x408] sm:$0xff]
    %v1473 = vld [vmem:[#allocation11 + $0x410] sm:$0xff]
    %v1474 = vld [vmem:[#allocation11 + $0x418] sm:$0xff]
    %v1475 = vld [vmem:[#allocation11 + $0x420] sm:$0xff]
    %v1476 = vld [vmem:[#allocation11 + $0x428] sm:$0xff]
    %v1477 = vld [vmem:[#allocation11 + $0x430] sm:$0xff]
    %v1478 = vld [vmem:[#allocation11 + $0x438] sm:$0xff]
    %v1479 = vld [vmem:[#allocation11 + $0x440] sm:$0xff]
    %v1480 = vld [vmem:[#allocation11 + $0x448] sm:$0xff]
    %v1481 = vld [vmem:[#allocation11 + $0x450] sm:$0xff]
    %v1482 = vld [vmem:[#allocation11 + $0x458] sm:$0xff]
    %v1483 = vld [vmem:[#allocation11 + $0x460] sm:$0xff]
    %v1484 = vld [vmem:[#allocation11 + $0x468] sm:$0xff]
    %v1485 = vld [vmem:[#allocation11 + $0x470] sm:$0xff]
    %v1486 = vld [vmem:[#allocation11 + $0x478] sm:$0xff]
    %v1487 = vld [vmem:[#allocation11 + $0x480] sm:$0xff]
    %v1488 = vld [vmem:[#allocation11 + $0x488] sm:$0xff]
    %v1489 = vld [vmem:[#allocation11 + $0x490] sm:$0xff]
    %v1490 = vld [vmem:[#allocation11 + $0x498] sm:$0xff]
    %v1491 = vld [vmem:[#allocation11 + $0x4a0] sm:$0xff]
    %v1492 = vld [vmem:[#allocation11 + $0x4a8] sm:$0xff]
    %v1493 = vld [vmem:[#allocation11 + $0x4b0] sm:$0xff]
    %v1494 = vld [vmem:[#allocation11 + $0x4b8] sm:$0xff]
    %v1495 = vld [vmem:[#allocation11 + $0x4c0] sm:$0xff]
    %v1496 = vld [vmem:[#allocation11 + $0x4c8] sm:$0xff]
    %v1497 = vld [vmem:[#allocation11 + $0x4d0] sm:$0xff]
    %v1498 = vld [vmem:[#allocation11 + $0x4d8] sm:$0xff]
    %v1499 = vld [vmem:[#allocation11 + $0x4e0] sm:$0xff]
    %v1500 = vld [vmem:[#allocation11 + $0x4e8] sm:$0xff]
    %v1501 = vld [vmem:[#allocation11 + $0x4f0] sm:$0xff]
    %v1502 = vld [vmem:[#allocation11 + $0x4f8] sm:$0xff]
    %v1503 = vld [vmem:[#allocation11 + $0x500] sm:$0xff]
    %v1504 = vld [vmem:[#allocation11 + $0x508] sm:$0xff]
    %v1505 = vld [vmem:[#allocation11 + $0x510] sm:$0xff]
    %v1506 = vld [vmem:[#allocation11 + $0x518] sm:$0xff]
    %v1507 = vld [vmem:[#allocation11 + $0x520] sm:$0xff]
    %v1508 = vld [vmem:[#allocation11 + $0x528] sm:$0xff]
    %v1509 = vld [vmem:[#allocation11 + $0x530] sm:$0xff]
    %v1510 = vld [vmem:[#allocation11 + $0x538] sm:$0xff]
    %v1511 = vld [vmem:[#allocation11 + $0x540] sm:$0xff]
    %v1512 = vld [vmem:[#allocation11 + $0x548] sm:$0xff]
    %v1513 = vld [vmem:[#allocation11 + $0x550] sm:$0xff]
    %v1514 = vld [vmem:[#allocation11 + $0x558] sm:$0xff]
    %v1515 = vld [vmem:[#allocation11 + $0x560] sm:$0xff]
    %v1516 = vld [vmem:[#allocation11 + $0x568] sm:$0xff]
    %v1517 = vld [vmem:[#allocation11 + $0x570] sm:$0xff]
    %v1518 = vld [vmem:[#allocation11 + $0x578] sm:$0xff]
    %v1519 = vld [vmem:[#allocation11 + $0x580] sm:$0xff]
    %v1520 = vld [vmem:[#allocation11 + $0x588] sm:$0xff]
    %v1521 = vld [vmem:[#allocation11 + $0x590] sm:$0xff]
    %v1522 = vld [vmem:[#allocation11 + $0x598] sm:$0xff]
    %v1523 = vld [vmem:[#allocation11 + $0x5a0] sm:$0xff]
    %v1524 = vld [vmem:[#allocation11 + $0x5a8] sm:$0xff]
    %v1525 = vld [vmem:[#allocation11 + $0x5b0] sm:$0xff]
    %v1526 = vld [vmem:[#allocation11 + $0x5b8] sm:$0xff]
    %v1527 = vld [vmem:[#allocation11 + $0x5c0] sm:$0xff]
    %v1528 = vld [vmem:[#allocation11 + $0x5c8] sm:$0xff]
    %v1529 = vld [vmem:[#allocation11 + $0x5d0] sm:$0xff]
    %v1530 = vld [vmem:[#allocation11 + $0x5d8] sm:$0xff]
    %v1531 = vld [vmem:[#allocation11 + $0x5e0] sm:$0xff]
    %v1532 = vld [vmem:[#allocation11 + $0x5e8] sm:$0xff]
    %v1533 = vld [vmem:[#allocation11 + $0x5f0] sm:$0xff]
    %v1534 = vld [vmem:[#allocation11 + $0x5f8] sm:$0xff]
    %v1535 = vld [vmem:[#allocation11 + $0x600] sm:$0xff]
    %v1536 = vld [vmem:[#allocation11 + $0x608] sm:$0xff]
    %v1537 = vld [vmem:[#allocation11 + $0x610] sm:$0xff]
    %v1538 = vld [vmem:[#allocation11 + $0x618] sm:$0xff]
    %v1539 = vld [vmem:[#allocation11 + $0x620] sm:$0xff]
    %v1540 = vld [vmem:[#allocation11 + $0x628] sm:$0xff]
    %v1541 = vld [vmem:[#allocation11 + $0x630] sm:$0xff]
    %v1542 = vld [vmem:[#allocation11 + $0x638] sm:$0xff]
    %v1543 = vld [vmem:[#allocation11 + $0x640] sm:$0xff]
    %v1544 = vld [vmem:[#allocation11 + $0x648] sm:$0xff]
    %v1545 = vld [vmem:[#allocation11 + $0x650] sm:$0xff]
    %v1546 = vld [vmem:[#allocation11 + $0x658] sm:$0xff]
    %v1547 = vld [vmem:[#allocation11 + $0x660] sm:$0xff]
    %v1548 = vld [vmem:[#allocation11 + $0x668] sm:$0xff]
    %v1549 = vld [vmem:[#allocation11 + $0x670] sm:$0xff]
    %v1550 = vld [vmem:[#allocation11 + $0x678] sm:$0xff]
    %v1551 = vld [vmem:[#allocation11 + $0x680] sm:$0xff]
    %v1552 = vld [vmem:[#allocation11 + $0x688] sm:$0xff]
    %v1553 = vld [vmem:[#allocation11 + $0x690] sm:$0xff]
    %v1554 = vld [vmem:[#allocation11 + $0x698] sm:$0xff]
    %v1555 = vld [vmem:[#allocation11 + $0x6a0] sm:$0xff]
    %v1556 = vld [vmem:[#allocation11 + $0x6a8] sm:$0xff]
    %v1557 = vld [vmem:[#allocation11 + $0x6b0] sm:$0xff]
    %v1558 = vld [vmem:[#allocation11 + $0x6b8] sm:$0xff]
    %v1559 = vld [vmem:[#allocation11 + $0x6c0] sm:$0xff]
    %v1560 = vld [vmem:[#allocation11 + $0x6c8] sm:$0xff]
    %v1561 = vld [vmem:[#allocation11 + $0x6d0] sm:$0xff]
    %v1562 = vld [vmem:[#allocation11 + $0x6d8] sm:$0xff]
    %v1563 = vld [vmem:[#allocation11 + $0x6e0] sm:$0xff]
    %v1564 = vld [vmem:[#allocation11 + $0x6e8] sm:$0xff]
    %v1565 = vld [vmem:[#allocation11 + $0x6f0] sm:$0xff]
    %v1566 = vld [vmem:[#allocation11 + $0x6f8] sm:$0xff]
    %v1567 = vld [vmem:[#allocation11 + $0x700] sm:$0xff]
    %v1568 = vld [vmem:[#allocation11 + $0x708] sm:$0xff]
    %v1569 = vld [vmem:[#allocation11 + $0x710] sm:$0xff]
    %v1570 = vld [vmem:[#allocation11 + $0x718] sm:$0xff]
    %v1571 = vld [vmem:[#allocation11 + $0x720] sm:$0xff]
    %v1572 = vld [vmem:[#allocation11 + $0x728] sm:$0xff]
    %v1573 = vld [vmem:[#allocation11 + $0x730] sm:$0xff]
    %v1574 = vld [vmem:[#allocation11 + $0x738] sm:$0xff]
    %v1575 = vld [vmem:[#allocation11 + $0x740] sm:$0xff]
    %v1576 = vld [vmem:[#allocation11 + $0x748] sm:$0xff]
    %v1577 = vld [vmem:[#allocation11 + $0x750] sm:$0xff]
    %v1578 = vld [vmem:[#allocation11 + $0x758] sm:$0xff]
    %v1579 = vld [vmem:[#allocation11 + $0x760] sm:$0xff]
    %v1580 = vld [vmem:[#allocation11 + $0x768] sm:$0xff]
    %v1581 = vld [vmem:[#allocation11 + $0x770] sm:$0xff]
    %v1582 = vld [vmem:[#allocation11 + $0x778] sm:$0xff]
    %v1583 = vld [vmem:[#allocation11 + $0x780] sm:$0xff]
    %v1584 = vld [vmem:[#allocation11 + $0x788] sm:$0xff]
    %v1585 = vld [vmem:[#allocation11 + $0x790] sm:$0xff]
    %v1586 = vld [vmem:[#allocation11 + $0x798] sm:$0xff]
    %v1587 = vld [vmem:[#allocation11 + $0x7a0] sm:$0xff]
    %v1588 = vld [vmem:[#allocation11 + $0x7a8] sm:$0xff]
    %v1589 = vld [vmem:[#allocation11 + $0x7b0] sm:$0xff]
    %v1590 = vld [vmem:[#allocation11 + $0x7b8] sm:$0xff]
    %v1591 = vld [vmem:[#allocation11 + $0x7c0] sm:$0xff]
    %v1592 = vld [vmem:[#allocation11 + $0x7c8] sm:$0xff]
    %v1593 = vld [vmem:[#allocation11 + $0x7d0] sm:$0xff]
    %v1594 = vld [vmem:[#allocation11 + $0x7d8] sm:$0xff]
    %v1595 = vld [vmem:[#allocation11 + $0x7e0] sm:$0xff]
    %v1596 = vld [vmem:[#allocation11 + $0x7e8] sm:$0xff]
    %v1597 = vld [vmem:[#allocation11 + $0x7f0] sm:$0xff]
    %v1598 = vld [vmem:[#allocation11 + $0x7f8] sm:$0xff]
    %v1599 = vld [vmem:[#allocation11 + $0x800] sm:$0xff]
    %v1600 = vld [vmem:[#allocation11 + $0x808] sm:$0xff]
    %v1601 = vld [vmem:[#allocation11 + $0x810] sm:$0xff]
    %v1602 = vld [vmem:[#allocation11 + $0x818] sm:$0xff]
    %v1603 = vld [vmem:[#allocation11 + $0x820] sm:$0xff]
    %v1604 = vld [vmem:[#allocation11 + $0x828] sm:$0xff]
    %v1605 = vld [vmem:[#allocation11 + $0x830] sm:$0xff]
    %v1606 = vld [vmem:[#allocation11 + $0x838] sm:$0xff]
    %v1607 = vld [vmem:[#allocation11 + $0x840] sm:$0xff]
    %v1608 = vld [vmem:[#allocation11 + $0x848] sm:$0xff]
    %v1609 = vld [vmem:[#allocation11 + $0x850] sm:$0xff]
    %v1610 = vld [vmem:[#allocation11 + $0x858] sm:$0xff]
    %v1611 = vld [vmem:[#allocation11 + $0x860] sm:$0xff]
    %v1612 = vld [vmem:[#allocation11 + $0x868] sm:$0xff]
    %v1613 = vld [vmem:[#allocation11 + $0x870] sm:$0xff]
    %v1614 = vld [vmem:[#allocation11 + $0x878] sm:$0xff]
    %v1615 = vld [vmem:[#allocation11 + $0x880] sm:$0xff]
    %v1616 = vld [vmem:[#allocation11 + $0x888] sm:$0xff]
    %v1617 = vld [vmem:[#allocation11 + $0x890] sm:$0xff]
    %v1618 = vld [vmem:[#allocation11 + $0x898] sm:$0xff]
    %v1619 = vld [vmem:[#allocation11 + $0x8a0] sm:$0xff]
    %v1620 = vld [vmem:[#allocation11 + $0x8a8] sm:$0xff]
    %v1621 = vld [vmem:[#allocation11 + $0x8b0] sm:$0xff]
    %v1622 = vld [vmem:[#allocation11 + $0x8b8] sm:$0xff]
    %v1623 = vld [vmem:[#allocation11 + $0x8c0] sm:$0xff]
    %v1624 = vld [vmem:[#allocation11 + $0x8c8] sm:$0xff]
    %v1625 = vld [vmem:[#allocation11 + $0x8d0] sm:$0xff]
    %v1626 = vld [vmem:[#allocation11 + $0x8d8] sm:$0xff]
    %v1627 = vld [vmem:[#allocation11 + $0x8e0] sm:$0xff]
    %v1628 = vld [vmem:[#allocation11 + $0x8e8] sm:$0xff]
    %v1629 = vld [vmem:[#allocation11 + $0x8f0] sm:$0xff]
    %v1630 = vld [vmem:[#allocation11 + $0x8f8] sm:$0xff]
    %v1631 = vld [vmem:[#allocation11 + $0x900] sm:$0xff]
    %v1632 = vld [vmem:[#allocation11 + $0x908] sm:$0xff]
    %v1633 = vld [vmem:[#allocation11 + $0x910] sm:$0xff]
    %v1634 = vld [vmem:[#allocation11 + $0x918] sm:$0xff]
    %v1635 = vld [vmem:[#allocation11 + $0x920] sm:$0xff]
    %v1636 = vld [vmem:[#allocation11 + $0x928] sm:$0xff]
    %v1637 = vld [vmem:[#allocation11 + $0x930] sm:$0xff]
    %v1638 = vld [vmem:[#allocation11 + $0x938] sm:$0xff]
    %v1639 = vld [vmem:[#allocation11 + $0x940] sm:$0xff]
    %v1640 = vld [vmem:[#allocation11 + $0x948] sm:$0xff]
    %v1641 = vld [vmem:[#allocation11 + $0x950] sm:$0xff]
    %v1642 = vld [vmem:[#allocation11 + $0x958] sm:$0xff]
    %v1643 = vld [vmem:[#allocation11 + $0x960] sm:$0xff]
    %v1644 = vld [vmem:[#allocation11 + $0x968] sm:$0xff]
    %v1645 = vld [vmem:[#allocation11 + $0x970] sm:$0xff]
    %v1646 = vld [vmem:[#allocation11 + $0x978] sm:$0xff]
    %v1647 = vld [vmem:[#allocation11 + $0x980] sm:$0xff]
    %v1648 = vld [vmem:[#allocation11 + $0x988] sm:$0xff]
    %v1649 = vld [vmem:[#allocation11 + $0x990] sm:$0xff]
    %v1650 = vld [vmem:[#allocation11 + $0x998] sm:$0xff]
    %v1651 = vld [vmem:[#allocation11 + $0x9a0] sm:$0xff]
    %v1652 = vld [vmem:[#allocation11 + $0x9a8] sm:$0xff]
    %v1653 = vld [vmem:[#allocation11 + $0x9b0] sm:$0xff]
    %v1654 = vld [vmem:[#allocation11 + $0x9b8] sm:$0xff]
    %v1655 = vld [vmem:[#allocation11 + $0x9c0] sm:$0xff]
    %v1656 = vld [vmem:[#allocation11 + $0x9c8] sm:$0xff]
    %v1657 = vld [vmem:[#allocation11 + $0x9d0] sm:$0xff]
    %v1658 = vld [vmem:[#allocation11 + $0x9d8] sm:$0xff]
    %v1659 = vld [vmem:[#allocation11 + $0x9e0] sm:$0xff]
    %v1660 = vld [vmem:[#allocation11 + $0x9e8] sm:$0xff]
    %v1661 = vld [vmem:[#allocation11 + $0x9f0] sm:$0xff]
    %v1662 = vld [vmem:[#allocation11 + $0x9f8] sm:$0xff]
    %v1663 = vld [vmem:[#allocation11 + $0xa00] sm:$0xff]
    %v1664 = vld [vmem:[#allocation11 + $0xa08] sm:$0xff]
    %v1665 = vld [vmem:[#allocation11 + $0xa10] sm:$0xff]
    %v1666 = vld [vmem:[#allocation11 + $0xa18] sm:$0xff]
    %v1667 = vld [vmem:[#allocation11 + $0xa20] sm:$0xff]
    %v1668 = vld [vmem:[#allocation11 + $0xa28] sm:$0xff]
    %v1669 = vld [vmem:[#allocation11 + $0xa30] sm:$0xff]
    %v1670 = vld [vmem:[#allocation11 + $0xa38] sm:$0xff]
    %v1671 = vld [vmem:[#allocation11 + $0xa40] sm:$0xff]
    %v1672 = vld [vmem:[#allocation11 + $0xa48] sm:$0xff]
    %v1673 = vld [vmem:[#allocation11 + $0xa50] sm:$0xff]
    %v1674 = vld [vmem:[#allocation11 + $0xa58] sm:$0xff]
    %v1675 = vld [vmem:[#allocation11 + $0xa60] sm:$0xff]
    %v1676 = vld [vmem:[#allocation11 + $0xa68] sm:$0xff]
    %v1677 = vld [vmem:[#allocation11 + $0xa70] sm:$0xff]
    %v1678 = vld [vmem:[#allocation11 + $0xa78] sm:$0xff]
    %v1679 = vld [vmem:[#allocation11 + $0xa80] sm:$0xff]
    %v1680 = vld [vmem:[#allocation11 + $0xa88] sm:$0xff]
    %v1681 = vld [vmem:[#allocation11 + $0xa90] sm:$0xff]
    %v1682 = vld [vmem:[#allocation11 + $0xa98] sm:$0xff]
    %v1683 = vld [vmem:[#allocation11 + $0xaa0] sm:$0xff]
    %v1684 = vld [vmem:[#allocation11 + $0xaa8] sm:$0xff]
    %v1685 = vld [vmem:[#allocation11 + $0xab0] sm:$0xff]
    %v1686 = vld [vmem:[#allocation11 + $0xab8] sm:$0xff]
    %v1687 = vld [vmem:[#allocation11 + $0xac0] sm:$0xff]
    %v1688 = vld [vmem:[#allocation11 + $0xac8] sm:$0xff]
    %v1689 = vld [vmem:[#allocation11 + $0xad0] sm:$0xff]
    %v1690 = vld [vmem:[#allocation11 + $0xad8] sm:$0xff]
    %v1691 = vld [vmem:[#allocation11 + $0xae0] sm:$0xff]
    %v1692 = vld [vmem:[#allocation11 + $0xae8] sm:$0xff]
    %v1693 = vld [vmem:[#allocation11 + $0xaf0] sm:$0xff]
    %v1694 = vld [vmem:[#allocation11 + $0xaf8] sm:$0xff]
    %v1695 = vld [vmem:[#allocation11 + $0xb00] sm:$0xff]
    %v1696 = vld [vmem:[#allocation11 + $0xb08] sm:$0xff]
    %v1697 = vld [vmem:[#allocation11 + $0xb10] sm:$0xff]
    %v1698 = vld [vmem:[#allocation11 + $0xb18] sm:$0xff]
    %v1699 = vld [vmem:[#allocation11 + $0xb20] sm:$0xff]
    %v1700 = vld [vmem:[#allocation11 + $0xb28] sm:$0xff]
    %v1701 = vld [vmem:[#allocation11 + $0xb30] sm:$0xff]
    %v1702 = vld [vmem:[#allocation11 + $0xb38] sm:$0xff]
    %v1703 = vld [vmem:[#allocation11 + $0xb40] sm:$0xff]
    %v1704 = vld [vmem:[#allocation11 + $0xb48] sm:$0xff]
    %v1705 = vld [vmem:[#allocation11 + $0xb50] sm:$0xff]
    %v1706 = vld [vmem:[#allocation11 + $0xb58] sm:$0xff]
    %v1707 = vld [vmem:[#allocation11 + $0xb60] sm:$0xff]
    %v1708 = vld [vmem:[#allocation11 + $0xb68] sm:$0xff]
    %v1709 = vld [vmem:[#allocation11 + $0xb70] sm:$0xff]
    %v1710 = vld [vmem:[#allocation11 + $0xb78] sm:$0xff]
    %v1711 = vld [vmem:[#allocation11 + $0xb80] sm:$0xff]
    %v1712 = vld [vmem:[#allocation11 + $0xb88] sm:$0xff]
    %v1713 = vld [vmem:[#allocation11 + $0xb90] sm:$0xff]
    %v1714 = vld [vmem:[#allocation11 + $0xb98] sm:$0xff]
    %v1715 = vld [vmem:[#allocation11 + $0xba0] sm:$0xff]
    %v1716 = vld [vmem:[#allocation11 + $0xba8] sm:$0xff]
    %v1717 = vld [vmem:[#allocation11 + $0xbb0] sm:$0xff]
    %v1718 = vld [vmem:[#allocation11 + $0xbb8] sm:$0xff]
    %v1719 = vld [vmem:[#allocation11 + $0xbc0] sm:$0xff]
    %v1720 = vld [vmem:[#allocation11 + $0xbc8] sm:$0xff]
    %v1721 = vld [vmem:[#allocation11 + $0xbd0] sm:$0xff]
    %v1722 = vld [vmem:[#allocation11 + $0xbd8] sm:$0xff]
    %v1723 = vld [vmem:[#allocation11 + $0xbe0] sm:$0xff]
    %v1724 = vld [vmem:[#allocation11 + $0xbe8] sm:$0xff]
    %v1725 = vld [vmem:[#allocation11 + $0xbf0] sm:$0xff]
    %v1726 = vld [vmem:[#allocation11 + $0xbf8] sm:$0xff]
    %v1727 = vld [vmem:[#allocation11 + $0xc00] sm:$0xff]
    %v1728 = vld [vmem:[#allocation11 + $0xc08] sm:$0xff]
    %v1729 = vld [vmem:[#allocation11 + $0xc10] sm:$0xff]
    %v1730 = vld [vmem:[#allocation11 + $0xc18] sm:$0xff]
    %v1731 = vld [vmem:[#allocation11 + $0xc20] sm:$0xff]
    %v1732 = vld [vmem:[#allocation11 + $0xc28] sm:$0xff]
    %v1733 = vld [vmem:[#allocation11 + $0xc30] sm:$0xff]
    %v1734 = vld [vmem:[#allocation11 + $0xc38] sm:$0xff]
    %v1735 = vld [vmem:[#allocation11 + $0xc40] sm:$0xff]
    %v1736 = vld [vmem:[#allocation11 + $0xc48] sm:$0xff]
    %v1737 = vld [vmem:[#allocation11 + $0xc50] sm:$0xff]
    %v1738 = vld [vmem:[#allocation11 + $0xc58] sm:$0xff]
    %v1739 = vld [vmem:[#allocation11 + $0xc60] sm:$0xff]
    %v1740 = vld [vmem:[#allocation11 + $0xc68] sm:$0xff]
    %v1741 = vld [vmem:[#allocation11 + $0xc70] sm:$0xff]
    %v1742 = vld [vmem:[#allocation11 + $0xc78] sm:$0xff]
    %v1743 = vld [vmem:[#allocation11 + $0xc80] sm:$0xff]
    %v1744 = vld [vmem:[#allocation11 + $0xc88] sm:$0xff]
    %v1745 = vld [vmem:[#allocation11 + $0xc90] sm:$0xff]
    %v1746 = vld [vmem:[#allocation11 + $0xc98] sm:$0xff]
    %v1747 = vld [vmem:[#allocation11 + $0xca0] sm:$0xff]
    %v1748 = vld [vmem:[#allocation11 + $0xca8] sm:$0xff]
    %v1749 = vld [vmem:[#allocation11 + $0xcb0] sm:$0xff]
    %v1750 = vld [vmem:[#allocation11 + $0xcb8] sm:$0xff]
    %v1751 = vld [vmem:[#allocation11 + $0xcc0] sm:$0xff]
    %v1752 = vld [vmem:[#allocation11 + $0xcc8] sm:$0xff]
    %v1753 = vld [vmem:[#allocation11 + $0xcd0] sm:$0xff]
    %v1754 = vld [vmem:[#allocation11 + $0xcd8] sm:$0xff]
    %v1755 = vld [vmem:[#allocation11 + $0xce0] sm:$0xff]
    %v1756 = vld [vmem:[#allocation11 + $0xce8] sm:$0xff]
    %v1757 = vld [vmem:[#allocation11 + $0xcf0] sm:$0xff]
    %v1758 = vld [vmem:[#allocation11 + $0xcf8] sm:$0xff]
    %v1759 = vld [vmem:[#allocation11 + $0xd00] sm:$0xff]
    %v1760 = vld [vmem:[#allocation11 + $0xd08] sm:$0xff]
    %v1761 = vld [vmem:[#allocation11 + $0xd10] sm:$0xff]
    %v1762 = vld [vmem:[#allocation11 + $0xd18] sm:$0xff]
    %v1763 = vld [vmem:[#allocation11 + $0xd20] sm:$0xff]
    %v1764 = vld [vmem:[#allocation11 + $0xd28] sm:$0xff]
    %v1765 = vld [vmem:[#allocation11 + $0xd30] sm:$0xff]
    %v1766 = vld [vmem:[#allocation11 + $0xd38] sm:$0xff]
    %v1767 = vld [vmem:[#allocation11 + $0xd40] sm:$0xff]
    %v1768 = vld [vmem:[#allocation11 + $0xd48] sm:$0xff]
    %v1769 = vld [vmem:[#allocation11 + $0xd50] sm:$0xff]
    %v1770 = vld [vmem:[#allocation11 + $0xd58] sm:$0xff]
    %v1771 = vld [vmem:[#allocation11 + $0xd60] sm:$0xff]
    %v1772 = vld [vmem:[#allocation11 + $0xd68] sm:$0xff]
    %v1773 = vld [vmem:[#allocation11 + $0xd70] sm:$0xff]
    %v1774 = vld [vmem:[#allocation11 + $0xd78] sm:$0xff]
    %v1775 = vld [vmem:[#allocation11 + $0xd80] sm:$0xff]
    %v1776 = vld [vmem:[#allocation11 + $0xd88] sm:$0xff]
    %v1777 = vld [vmem:[#allocation11 + $0xd90] sm:$0xff]
    %v1778 = vld [vmem:[#allocation11 + $0xd98] sm:$0xff]
    %v1779 = vld [vmem:[#allocation11 + $0xda0] sm:$0xff]
    %v1780 = vld [vmem:[#allocation11 + $0xda8] sm:$0xff]
    %v1781 = vld [vmem:[#allocation11 + $0xdb0] sm:$0xff]
    %v1782 = vld [vmem:[#allocation11 + $0xdb8] sm:$0xff]
    %v1783 = vld [vmem:[#allocation11 + $0xdc0] sm:$0xff]
    %v1784 = vld [vmem:[#allocation11 + $0xdc8] sm:$0xff]
    %v1785 = vld [vmem:[#allocation11 + $0xdd0] sm:$0xff]
    %v1786 = vld [vmem:[#allocation11 + $0xdd8] sm:$0xff]
    %v1787 = vld [vmem:[#allocation11 + $0xde0] sm:$0xff]
    %v1788 = vld [vmem:[#allocation11 + $0xde8] sm:$0xff]
    %v1789 = vld [vmem:[#allocation11 + $0xdf0] sm:$0xff]
    %v1790 = vld [vmem:[#allocation11 + $0xdf8] sm:$0xff]
    %v1791 = vld [vmem:[#allocation11 + $0xe00] sm:$0xff]
    %v1792 = vld [vmem:[#allocation11 + $0xe08] sm:$0xff]
    %v1793 = vld [vmem:[#allocation11 + $0xe10] sm:$0xff]
    %v1794 = vld [vmem:[#allocation11 + $0xe18] sm:$0xff]
    %v1795 = vld [vmem:[#allocation11 + $0xe20] sm:$0xff]
    %v1796 = vld [vmem:[#allocation11 + $0xe28] sm:$0xff]
    %v1797 = vld [vmem:[#allocation11 + $0xe30] sm:$0xff]
    %v1798 = vld [vmem:[#allocation11 + $0xe38] sm:$0xff]
    %v1799 = vld [vmem:[#allocation11 + $0xe40] sm:$0xff]
    %v1800 = vld [vmem:[#allocation11 + $0xe48] sm:$0xff]
    %v1801 = vld [vmem:[#allocation11 + $0xe50] sm:$0xff]
    %v1802 = vld [vmem:[#allocation11 + $0xe58] sm:$0xff]
    %v1803 = vld [vmem:[#allocation11 + $0xe60] sm:$0xff]
    %v1804 = vld [vmem:[#allocation11 + $0xe68] sm:$0xff]
    %v1805 = vld [vmem:[#allocation11 + $0xe70] sm:$0xff]
    %v1806 = vld [vmem:[#allocation11 + $0xe78] sm:$0xff]
    %v1807 = vld [vmem:[#allocation11 + $0xe80] sm:$0xff]
    %v1808 = vld [vmem:[#allocation11 + $0xe88] sm:$0xff]
    %v1809 = vld [vmem:[#allocation11 + $0xe90] sm:$0xff]
    %v1810 = vld [vmem:[#allocation11 + $0xe98] sm:$0xff]
    %v1811 = vld [vmem:[#allocation11 + $0xea0] sm:$0xff]
    %v1812 = vld [vmem:[#allocation11 + $0xea8] sm:$0xff]
    %v1813 = vld [vmem:[#allocation11 + $0xeb0] sm:$0xff]
    %v1814 = vld [vmem:[#allocation11 + $0xeb8] sm:$0xff]
    %v1815 = vld [vmem:[#allocation11 + $0xec0] sm:$0xff]
    %v1816 = vld [vmem:[#allocation11 + $0xec8] sm:$0xff]
    %v1817 = vld [vmem:[#allocation11 + $0xed0] sm:$0xff]
    %v1818 = vld [vmem:[#allocation11 + $0xed8] sm:$0xff]
    %v1819 = vld [vmem:[#allocation11 + $0xee0] sm:$0xff]
    %v1820 = vld [vmem:[#allocation11 + $0xee8] sm:$0xff]
    %v1821 = vld [vmem:[#allocation11 + $0xef0] sm:$0xff]
    %v1822 = vld [vmem:[#allocation11 + $0xef8] sm:$0xff]
    %v1823 = vld [vmem:[#allocation11 + $0xf00] sm:$0xff]
    %v1824 = vld [vmem:[#allocation11 + $0xf08] sm:$0xff]
    %v1825 = vld [vmem:[#allocation11 + $0xf10] sm:$0xff]
    %v1826 = vld [vmem:[#allocation11 + $0xf18] sm:$0xff]
    %v1827 = vld [vmem:[#allocation11 + $0xf20] sm:$0xff]
    %v1828 = vld [vmem:[#allocation11 + $0xf28] sm:$0xff]
    %v1829 = vld [vmem:[#allocation11 + $0xf30] sm:$0xff]
    %v1830 = vld [vmem:[#allocation11 + $0xf38] sm:$0xff]
    %v1831 = vld [vmem:[#allocation11 + $0xf40] sm:$0xff]
    %v1832 = vld [vmem:[#allocation11 + $0xf48] sm:$0xff]
    %v1833 = vld [vmem:[#allocation11 + $0xf50] sm:$0xff]
    %v1834 = vld [vmem:[#allocation11 + $0xf58] sm:$0xff]
    %v1835 = vld [vmem:[#allocation11 + $0xf60] sm:$0xff]
    %v1836 = vld [vmem:[#allocation11 + $0xf68] sm:$0xff]
    %v1837 = vld [vmem:[#allocation11 + $0xf70] sm:$0xff]
    %v1838 = vld [vmem:[#allocation11 + $0xf78] sm:$0xff]
    %v1839 = vld [vmem:[#allocation11 + $0xf80] sm:$0xff]
    %v1840 = vld [vmem:[#allocation11 + $0xf88] sm:$0xff]
    %v1841 = vld [vmem:[#allocation11 + $0xf90] sm:$0xff]
    %v1842 = vld [vmem:[#allocation11 + $0xf98] sm:$0xff]
    %v1843 = vld [vmem:[#allocation11 + $0xfa0] sm:$0xff]
    %v1844 = vld [vmem:[#allocation11 + $0xfa8] sm:$0xff]
    %v1845 = vld [vmem:[#allocation11 + $0xfb0] sm:$0xff]
    %v1846 = vld [vmem:[#allocation11 + $0xfb8] sm:$0xff]
    %v1847 = vld [vmem:[#allocation11 + $0xfc0] sm:$0xff]
    %v1848 = vld [vmem:[#allocation11 + $0xfc8] sm:$0xff]
    %v1849 = vld [vmem:[#allocation11 + $0xfd0] sm:$0xff]
    %v1850 = vld [vmem:[#allocation11 + $0xfd8] sm:$0xff]
    %v1851 = vld [vmem:[#allocation11 + $0xfe0] sm:$0xff]
    %v1852 = vld [vmem:[#allocation11 + $0xfe8] sm:$0xff]
    %v1853 = vld [vmem:[#allocation11 + $0xff0] sm:$0xff]
    %v1854 = vld [vmem:[#allocation11 + $0xff8] sm:$0xff]
    %v1855 = vld [vmem:[#allocation13] sm:$0xff]
    %v1856 = vld [vmem:[#allocation13 + $0x8] sm:$0xff]
    %v1857 = vpack.c.bf16 %v1339, %v1339
    %v1858 = vpack.c.bf16 %v1340, %v1340
    %v1859 = vpack.c.bf16 %v1341, %v1341
    %v1860 = vpack.c.bf16 %v1342, %v1342
    %v1863 = vperm.slane %v1855, 0
    %v1864 = vperm.slane %v1855, 1
    %v1865 = vperm.slane %v1855, 2
    %v1866 = vperm.slane %v1855, 3
    %v1867 = vperm.slane %v1855, 4
    %v1868 = vperm.slane %v1855, 5
    %v1869 = vperm.slane %v1855, 6
    %v1870 = vperm.slane %v1855, 7
    %v1871 = vperm.slane %v1856, 0
    %v1872 = vperm.slane %v1856, 1
    %v1873 = vperm.slane %v1856, 2
    %v1874 = vperm.slane %v1856, 3
    %v1875 = vperm.slane %v1856, 4
    %v1876 = vperm.slane %v1856, 5
    %v1877 = vperm.slane %v1856, 6
    %v1878 = vperm.slane %v1856, 7
    %v2407 = vunpack.c.l.b16 %v1343
    %v2408 = vunpack.c.h.b16 %v1343
    %v2409 = vunpack.c.l.b16 %v1344
    %v2410 = vunpack.c.h.b16 %v1344
    %v2411 = vunpack.c.l.b16 %v1345
    %v2412 = vunpack.c.h.b16 %v1345
    %v2413 = vunpack.c.l.b16 %v1346
    %v2414 = vunpack.c.h.b16 %v1346
    %v2415 = vunpack.c.l.b16 %v1347
    %v2416 = vunpack.c.h.b16 %v1347
    %v2417 = vunpack.c.l.b16 %v1348
    %v2418 = vunpack.c.h.b16 %v1348
    %v2419 = vunpack.c.l.b16 %v1349
    %v2420 = vunpack.c.h.b16 %v1349
    %v2421 = vunpack.c.l.b16 %v1350
    %v2422 = vunpack.c.h.b16 %v1350
    %v2423 = vunpack.c.l.b16 %v1351
    %v2424 = vunpack.c.h.b16 %v1351
    %v2425 = vunpack.c.l.b16 %v1352
    %v2426 = vunpack.c.h.b16 %v1352
    %v2427 = vunpack.c.l.b16 %v1353
    %v2428 = vunpack.c.h.b16 %v1353
    %v2429 = vunpack.c.l.b16 %v1354
    %v2430 = vunpack.c.h.b16 %v1354
    %v2431 = vunpack.c.l.b16 %v1355
    %v2432 = vunpack.c.h.b16 %v1355
    %v2433 = vunpack.c.l.b16 %v1356
    %v2434 = vunpack.c.h.b16 %v1356
    %v2435 = vunpack.c.l.b16 %v1357
    %v2436 = vunpack.c.h.b16 %v1357
    %v2437 = vunpack.c.l.b16 %v1358
    %v2438 = vunpack.c.h.b16 %v1358
    %v2439 = vunpack.c.l.b16 %v1359
    %v2440 = vunpack.c.h.b16 %v1359
    %v2441 = vunpack.c.l.b16 %v1360
    %v2442 = vunpack.c.h.b16 %v1360
    %v2443 = vunpack.c.l.b16 %v1361
    %v2444 = vunpack.c.h.b16 %v1361
    %v2445 = vunpack.c.l.b16 %v1362
    %v2446 = vunpack.c.h.b16 %v1362
    %v2447 = vunpack.c.l.b16 %v1363
    %v2448 = vunpack.c.h.b16 %v1363
    %v2449 = vunpack.c.l.b16 %v1364
    %v2450 = vunpack.c.h.b16 %v1364
    %v2451 = vunpack.c.l.b16 %v1365
    %v2452 = vunpack.c.h.b16 %v1365
    %v2453 = vunpack.c.l.b16 %v1366
    %v2454 = vunpack.c.h.b16 %v1366
    %v2455 = vunpack.c.l.b16 %v1367
    %v2456 = vunpack.c.h.b16 %v1367
    %v2457 = vunpack.c.l.b16 %v1368
    %v2458 = vunpack.c.h.b16 %v1368
    %v2459 = vunpack.c.l.b16 %v1369
    %v2460 = vunpack.c.h.b16 %v1369
    %v2461 = vunpack.c.l.b16 %v1370
    %v2462 = vunpack.c.h.b16 %v1370
    %v2463 = vunpack.c.l.b16 %v1371
    %v2464 = vunpack.c.h.b16 %v1371
    %v2465 = vunpack.c.l.b16 %v1372
    %v2466 = vunpack.c.h.b16 %v1372
    %v2467 = vunpack.c.l.b16 %v1373
    %v2468 = vunpack.c.h.b16 %v1373
    %v2469 = vunpack.c.l.b16 %v1374
    %v2470 = vunpack.c.h.b16 %v1374
    %v2471 = vunpack.c.l.b16 %v1375
    %v2472 = vunpack.c.h.b16 %v1375
    %v2473 = vunpack.c.l.b16 %v1376
    %v2474 = vunpack.c.h.b16 %v1376
    %v2475 = vunpack.c.l.b16 %v1377
    %v2476 = vunpack.c.h.b16 %v1377
    %v2477 = vunpack.c.l.b16 %v1378
    %v2478 = vunpack.c.h.b16 %v1378
    %v2479 = vunpack.c.l.b16 %v1379
    %v2480 = vunpack.c.h.b16 %v1379
    %v2481 = vunpack.c.l.b16 %v1380
    %v2482 = vunpack.c.h.b16 %v1380
    %v2483 = vunpack.c.l.b16 %v1381
    %v2484 = vunpack.c.h.b16 %v1381
    %v2485 = vunpack.c.l.b16 %v1382
    %v2486 = vunpack.c.h.b16 %v1382
    %v2487 = vunpack.c.l.b16 %v1383
    %v2488 = vunpack.c.h.b16 %v1383
    %v2489 = vunpack.c.l.b16 %v1384
    %v2490 = vunpack.c.h.b16 %v1384
    %v2491 = vunpack.c.l.b16 %v1385
    %v2492 = vunpack.c.h.b16 %v1385
    %v2493 = vunpack.c.l.b16 %v1386
    %v2494 = vunpack.c.h.b16 %v1386
    %v2495 = vunpack.c.l.b16 %v1387
    %v2496 = vunpack.c.h.b16 %v1387
    %v2497 = vunpack.c.l.b16 %v1388
    %v2498 = vunpack.c.h.b16 %v1388
    %v2499 = vunpack.c.l.b16 %v1389
    %v2500 = vunpack.c.h.b16 %v1389
    %v2501 = vunpack.c.l.b16 %v1390
    %v2502 = vunpack.c.h.b16 %v1390
    %v2503 = vunpack.c.l.b16 %v1391
    %v2504 = vunpack.c.h.b16 %v1391
    %v2505 = vunpack.c.l.b16 %v1392
    %v2506 = vunpack.c.h.b16 %v1392
    %v2507 = vunpack.c.l.b16 %v1393
    %v2508 = vunpack.c.h.b16 %v1393
    %v2509 = vunpack.c.l.b16 %v1394
    %v2510 = vunpack.c.h.b16 %v1394
    %v2511 = vunpack.c.l.b16 %v1395
    %v2512 = vunpack.c.h.b16 %v1395
    %v2513 = vunpack.c.l.b16 %v1396
    %v2514 = vunpack.c.h.b16 %v1396
    %v2515 = vunpack.c.l.b16 %v1397
    %v2516 = vunpack.c.h.b16 %v1397
    %v2517 = vunpack.c.l.b16 %v1398
    %v2518 = vunpack.c.h.b16 %v1398
    %v2519 = vunpack.c.l.b16 %v1399
    %v2520 = vunpack.c.h.b16 %v1399
    %v2521 = vunpack.c.l.b16 %v1400
    %v2522 = vunpack.c.h.b16 %v1400
    %v2523 = vunpack.c.l.b16 %v1401
    %v2524 = vunpack.c.h.b16 %v1401
    %v2525 = vunpack.c.l.b16 %v1402
    %v2526 = vunpack.c.h.b16 %v1402
    %v2527 = vunpack.c.l.b16 %v1403
    %v2528 = vunpack.c.h.b16 %v1403
    %v2529 = vunpack.c.l.b16 %v1404
    %v2530 = vunpack.c.h.b16 %v1404
    %v2531 = vunpack.c.l.b16 %v1405
    %v2532 = vunpack.c.h.b16 %v1405
    %v2533 = vunpack.c.l.b16 %v1406
    %v2534 = vunpack.c.h.b16 %v1406
    %v2535 = vunpack.c.l.b16 %v1407
    %v2536 = vunpack.c.h.b16 %v1407
    %v2537 = vunpack.c.l.b16 %v1408
    %v2538 = vunpack.c.h.b16 %v1408
    %v2539 = vunpack.c.l.b16 %v1409
    %v2540 = vunpack.c.h.b16 %v1409
    %v2541 = vunpack.c.l.b16 %v1410
    %v2542 = vunpack.c.h.b16 %v1410
    %v2543 = vunpack.c.l.b16 %v1411
    %v2544 = vunpack.c.h.b16 %v1411
    %v2545 = vunpack.c.l.b16 %v1412
    %v2546 = vunpack.c.h.b16 %v1412
    %v2547 = vunpack.c.l.b16 %v1413
    %v2548 = vunpack.c.h.b16 %v1413
    %v2549 = vunpack.c.l.b16 %v1414
    %v2550 = vunpack.c.h.b16 %v1414
    %v2551 = vunpack.c.l.b16 %v1415
    %v2552 = vunpack.c.h.b16 %v1415
    %v2553 = vunpack.c.l.b16 %v1416
    %v2554 = vunpack.c.h.b16 %v1416
    %v2555 = vunpack.c.l.b16 %v1417
    %v2556 = vunpack.c.h.b16 %v1417
    %v2557 = vunpack.c.l.b16 %v1418
    %v2558 = vunpack.c.h.b16 %v1418
    %v2559 = vunpack.c.l.b16 %v1419
    %v2560 = vunpack.c.h.b16 %v1419
    %v2561 = vunpack.c.l.b16 %v1420
    %v2562 = vunpack.c.h.b16 %v1420
    %v2563 = vunpack.c.l.b16 %v1421
    %v2564 = vunpack.c.h.b16 %v1421
    %v2565 = vunpack.c.l.b16 %v1422
    %v2566 = vunpack.c.h.b16 %v1422
    %v2567 = vunpack.c.l.b16 %v1423
    %v2568 = vunpack.c.h.b16 %v1423
    %v2569 = vunpack.c.l.b16 %v1424
    %v2570 = vunpack.c.h.b16 %v1424
    %v2571 = vunpack.c.l.b16 %v1425
    %v2572 = vunpack.c.h.b16 %v1425
    %v2573 = vunpack.c.l.b16 %v1426
    %v2574 = vunpack.c.h.b16 %v1426
    %v2575 = vunpack.c.l.b16 %v1427
    %v2576 = vunpack.c.h.b16 %v1427
    %v2577 = vunpack.c.l.b16 %v1428
    %v2578 = vunpack.c.h.b16 %v1428
    %v2579 = vunpack.c.l.b16 %v1429
    %v2580 = vunpack.c.h.b16 %v1429
    %v2581 = vunpack.c.l.b16 %v1430
    %v2582 = vunpack.c.h.b16 %v1430
    %v2583 = vunpack.c.l.b16 %v1431
    %v2584 = vunpack.c.h.b16 %v1431
    %v2585 = vunpack.c.l.b16 %v1432
    %v2586 = vunpack.c.h.b16 %v1432
    %v2587 = vunpack.c.l.b16 %v1433
    %v2588 = vunpack.c.h.b16 %v1433
    %v2589 = vunpack.c.l.b16 %v1434
    %v2590 = vunpack.c.h.b16 %v1434
    %v2591 = vunpack.c.l.b16 %v1435
    %v2592 = vunpack.c.h.b16 %v1435
    %v2593 = vunpack.c.l.b16 %v1436
    %v2594 = vunpack.c.h.b16 %v1436
    %v2595 = vunpack.c.l.b16 %v1437
    %v2596 = vunpack.c.h.b16 %v1437
    %v2597 = vunpack.c.l.b16 %v1438
    %v2598 = vunpack.c.h.b16 %v1438
    %v2599 = vunpack.c.l.b16 %v1439
    %v2600 = vunpack.c.h.b16 %v1439
    %v2601 = vunpack.c.l.b16 %v1440
    %v2602 = vunpack.c.h.b16 %v1440
    %v2603 = vunpack.c.l.b16 %v1441
    %v2604 = vunpack.c.h.b16 %v1441
    %v2605 = vunpack.c.l.b16 %v1442
    %v2606 = vunpack.c.h.b16 %v1442
    %v2607 = vunpack.c.l.b16 %v1443
    %v2608 = vunpack.c.h.b16 %v1443
    %v2609 = vunpack.c.l.b16 %v1444
    %v2610 = vunpack.c.h.b16 %v1444
    %v2611 = vunpack.c.l.b16 %v1445
    %v2612 = vunpack.c.h.b16 %v1445
    %v2613 = vunpack.c.l.b16 %v1446
    %v2614 = vunpack.c.h.b16 %v1446
    %v2615 = vunpack.c.l.b16 %v1447
    %v2616 = vunpack.c.h.b16 %v1447
    %v2617 = vunpack.c.l.b16 %v1448
    %v2618 = vunpack.c.h.b16 %v1448
    %v2619 = vunpack.c.l.b16 %v1449
    %v2620 = vunpack.c.h.b16 %v1449
    %v2621 = vunpack.c.l.b16 %v1450
    %v2622 = vunpack.c.h.b16 %v1450
    %v2623 = vunpack.c.l.b16 %v1451
    %v2624 = vunpack.c.h.b16 %v1451
    %v2625 = vunpack.c.l.b16 %v1452
    %v2626 = vunpack.c.h.b16 %v1452
    %v2627 = vunpack.c.l.b16 %v1453
    %v2628 = vunpack.c.h.b16 %v1453
    %v2629 = vunpack.c.l.b16 %v1454
    %v2630 = vunpack.c.h.b16 %v1454
    %v2631 = vunpack.c.l.b16 %v1455
    %v2632 = vunpack.c.h.b16 %v1455
    %v2633 = vunpack.c.l.b16 %v1456
    %v2634 = vunpack.c.h.b16 %v1456
    %v2635 = vunpack.c.l.b16 %v1457
    %v2636 = vunpack.c.h.b16 %v1457
    %v2637 = vunpack.c.l.b16 %v1458
    %v2638 = vunpack.c.h.b16 %v1458
    %v2639 = vunpack.c.l.b16 %v1459
    %v2640 = vunpack.c.h.b16 %v1459
    %v2641 = vunpack.c.l.b16 %v1460
    %v2642 = vunpack.c.h.b16 %v1460
    %v2643 = vunpack.c.l.b16 %v1461
    %v2644 = vunpack.c.h.b16 %v1461
    %v2645 = vunpack.c.l.b16 %v1462
    %v2646 = vunpack.c.h.b16 %v1462
    %v2647 = vunpack.c.l.b16 %v1463
    %v2648 = vunpack.c.h.b16 %v1463
    %v2649 = vunpack.c.l.b16 %v1464
    %v2650 = vunpack.c.h.b16 %v1464
    %v2651 = vunpack.c.l.b16 %v1465
    %v2652 = vunpack.c.h.b16 %v1465
    %v2653 = vunpack.c.l.b16 %v1466
    %v2654 = vunpack.c.h.b16 %v1466
    %v2655 = vunpack.c.l.b16 %v1467
    %v2656 = vunpack.c.h.b16 %v1467
    %v2657 = vunpack.c.l.b16 %v1468
    %v2658 = vunpack.c.h.b16 %v1468
    %v2659 = vunpack.c.l.b16 %v1469
    %v2660 = vunpack.c.h.b16 %v1469
    %v2661 = vunpack.c.l.b16 %v1470
    %v2662 = vunpack.c.h.b16 %v1470
    %v2663 = vunpack.c.l.b16 %v1471
    %v2664 = vunpack.c.h.b16 %v1471
    %v2665 = vunpack.c.l.b16 %v1472
    %v2666 = vunpack.c.h.b16 %v1472
    %v2667 = vunpack.c.l.b16 %v1473
    %v2668 = vunpack.c.h.b16 %v1473
    %v2669 = vunpack.c.l.b16 %v1474
    %v2670 = vunpack.c.h.b16 %v1474
    %v2671 = vunpack.c.l.b16 %v1475
    %v2672 = vunpack.c.h.b16 %v1475
    %v2673 = vunpack.c.l.b16 %v1476
    %v2674 = vunpack.c.h.b16 %v1476
    %v2675 = vunpack.c.l.b16 %v1477
    %v2676 = vunpack.c.h.b16 %v1477
    %v2677 = vunpack.c.l.b16 %v1478
    %v2678 = vunpack.c.h.b16 %v1478
    %v2679 = vunpack.c.l.b16 %v1479
    %v2680 = vunpack.c.h.b16 %v1479
    %v2681 = vunpack.c.l.b16 %v1480
    %v2682 = vunpack.c.h.b16 %v1480
    %v2683 = vunpack.c.l.b16 %v1481
    %v2684 = vunpack.c.h.b16 %v1481
    %v2685 = vunpack.c.l.b16 %v1482
    %v2686 = vunpack.c.h.b16 %v1482
    %v2687 = vunpack.c.l.b16 %v1483
    %v2688 = vunpack.c.h.b16 %v1483
    %v2689 = vunpack.c.l.b16 %v1484
    %v2690 = vunpack.c.h.b16 %v1484
    %v2691 = vunpack.c.l.b16 %v1485
    %v2692 = vunpack.c.h.b16 %v1485
    %v2693 = vunpack.c.l.b16 %v1486
    %v2694 = vunpack.c.h.b16 %v1486
    %v2695 = vunpack.c.l.b16 %v1487
    %v2696 = vunpack.c.h.b16 %v1487
    %v2697 = vunpack.c.l.b16 %v1488
    %v2698 = vunpack.c.h.b16 %v1488
    %v2699 = vunpack.c.l.b16 %v1489
    %v2700 = vunpack.c.h.b16 %v1489
    %v2701 = vunpack.c.l.b16 %v1490
    %v2702 = vunpack.c.h.b16 %v1490
    %v2703 = vunpack.c.l.b16 %v1491
    %v2704 = vunpack.c.h.b16 %v1491
    %v2705 = vunpack.c.l.b16 %v1492
    %v2706 = vunpack.c.h.b16 %v1492
    %v2707 = vunpack.c.l.b16 %v1493
    %v2708 = vunpack.c.h.b16 %v1493
    %v2709 = vunpack.c.l.b16 %v1494
    %v2710 = vunpack.c.h.b16 %v1494
    %v2711 = vunpack.c.l.b16 %v1495
    %v2712 = vunpack.c.h.b16 %v1495
    %v2713 = vunpack.c.l.b16 %v1496
    %v2714 = vunpack.c.h.b16 %v1496
    %v2715 = vunpack.c.l.b16 %v1497
    %v2716 = vunpack.c.h.b16 %v1497
    %v2717 = vunpack.c.l.b16 %v1498
    %v2718 = vunpack.c.h.b16 %v1498
    %v2719 = vunpack.c.l.b16 %v1499
    %v2720 = vunpack.c.h.b16 %v1499
    %v2721 = vunpack.c.l.b16 %v1500
    %v2722 = vunpack.c.h.b16 %v1500
    %v2723 = vunpack.c.l.b16 %v1501
    %v2724 = vunpack.c.h.b16 %v1501
    %v2725 = vunpack.c.l.b16 %v1502
    %v2726 = vunpack.c.h.b16 %v1502
    %v2727 = vunpack.c.l.b16 %v1503
    %v2728 = vunpack.c.h.b16 %v1503
    %v2729 = vunpack.c.l.b16 %v1504
    %v2730 = vunpack.c.h.b16 %v1504
    %v2731 = vunpack.c.l.b16 %v1505
    %v2732 = vunpack.c.h.b16 %v1505
    %v2733 = vunpack.c.l.b16 %v1506
    %v2734 = vunpack.c.h.b16 %v1506
    %v2735 = vunpack.c.l.b16 %v1507
    %v2736 = vunpack.c.h.b16 %v1507
    %v2737 = vunpack.c.l.b16 %v1508
    %v2738 = vunpack.c.h.b16 %v1508
    %v2739 = vunpack.c.l.b16 %v1509
    %v2740 = vunpack.c.h.b16 %v1509
    %v2741 = vunpack.c.l.b16 %v1510
    %v2742 = vunpack.c.h.b16 %v1510
    %v2743 = vunpack.c.l.b16 %v1511
    %v2744 = vunpack.c.h.b16 %v1511
    %v2745 = vunpack.c.l.b16 %v1512
    %v2746 = vunpack.c.h.b16 %v1512
    %v2747 = vunpack.c.l.b16 %v1513
    %v2748 = vunpack.c.h.b16 %v1513
    %v2749 = vunpack.c.l.b16 %v1514
    %v2750 = vunpack.c.h.b16 %v1514
    %v2751 = vunpack.c.l.b16 %v1515
    %v2752 = vunpack.c.h.b16 %v1515
    %v2753 = vunpack.c.l.b16 %v1516
    %v2754 = vunpack.c.h.b16 %v1516
    %v2755 = vunpack.c.l.b16 %v1517
    %v2756 = vunpack.c.h.b16 %v1517
    %v2757 = vunpack.c.l.b16 %v1518
    %v2758 = vunpack.c.h.b16 %v1518
    %v2759 = vunpack.c.l.b16 %v1519
    %v2760 = vunpack.c.h.b16 %v1519
    %v2761 = vunpack.c.l.b16 %v1520
    %v2762 = vunpack.c.h.b16 %v1520
    %v2763 = vunpack.c.l.b16 %v1521
    %v2764 = vunpack.c.h.b16 %v1521
    %v2765 = vunpack.c.l.b16 %v1522
    %v2766 = vunpack.c.h.b16 %v1522
    %v2767 = vunpack.c.l.b16 %v1523
    %v2768 = vunpack.c.h.b16 %v1523
    %v2769 = vunpack.c.l.b16 %v1524
    %v2770 = vunpack.c.h.b16 %v1524
    %v2771 = vunpack.c.l.b16 %v1525
    %v2772 = vunpack.c.h.b16 %v1525
    %v2773 = vunpack.c.l.b16 %v1526
    %v2774 = vunpack.c.h.b16 %v1526
    %v2775 = vunpack.c.l.b16 %v1527
    %v2776 = vunpack.c.h.b16 %v1527
    %v2777 = vunpack.c.l.b16 %v1528
    %v2778 = vunpack.c.h.b16 %v1528
    %v2779 = vunpack.c.l.b16 %v1529
    %v2780 = vunpack.c.h.b16 %v1529
    %v2781 = vunpack.c.l.b16 %v1530
    %v2782 = vunpack.c.h.b16 %v1530
    %v2783 = vunpack.c.l.b16 %v1531
    %v2784 = vunpack.c.h.b16 %v1531
    %v2785 = vunpack.c.l.b16 %v1532
    %v2786 = vunpack.c.h.b16 %v1532
    %v2787 = vunpack.c.l.b16 %v1533
    %v2788 = vunpack.c.h.b16 %v1533
    %v2789 = vunpack.c.l.b16 %v1534
    %v2790 = vunpack.c.h.b16 %v1534
    %v2791 = vunpack.c.l.b16 %v1535
    %v2792 = vunpack.c.h.b16 %v1535
    %v2793 = vunpack.c.l.b16 %v1536
    %v2794 = vunpack.c.h.b16 %v1536
    %v2795 = vunpack.c.l.b16 %v1537
    %v2796 = vunpack.c.h.b16 %v1537
    %v2797 = vunpack.c.l.b16 %v1538
    %v2798 = vunpack.c.h.b16 %v1538
    %v2799 = vunpack.c.l.b16 %v1539
    %v2800 = vunpack.c.h.b16 %v1539
    %v2801 = vunpack.c.l.b16 %v1540
    %v2802 = vunpack.c.h.b16 %v1540
    %v2803 = vunpack.c.l.b16 %v1541
    %v2804 = vunpack.c.h.b16 %v1541
    %v2805 = vunpack.c.l.b16 %v1542
    %v2806 = vunpack.c.h.b16 %v1542
    %v2807 = vunpack.c.l.b16 %v1543
    %v2808 = vunpack.c.h.b16 %v1543
    %v2809 = vunpack.c.l.b16 %v1544
    %v2810 = vunpack.c.h.b16 %v1544
    %v2811 = vunpack.c.l.b16 %v1545
    %v2812 = vunpack.c.h.b16 %v1545
    %v2813 = vunpack.c.l.b16 %v1546
    %v2814 = vunpack.c.h.b16 %v1546
    %v2815 = vunpack.c.l.b16 %v1547
    %v2816 = vunpack.c.h.b16 %v1547
    %v2817 = vunpack.c.l.b16 %v1548
    %v2818 = vunpack.c.h.b16 %v1548
    %v2819 = vunpack.c.l.b16 %v1549
    %v2820 = vunpack.c.h.b16 %v1549
    %v2821 = vunpack.c.l.b16 %v1550
    %v2822 = vunpack.c.h.b16 %v1550
    %v2823 = vunpack.c.l.b16 %v1551
    %v2824 = vunpack.c.h.b16 %v1551
    %v2825 = vunpack.c.l.b16 %v1552
    %v2826 = vunpack.c.h.b16 %v1552
    %v2827 = vunpack.c.l.b16 %v1553
    %v2828 = vunpack.c.h.b16 %v1553
    %v2829 = vunpack.c.l.b16 %v1554
    %v2830 = vunpack.c.h.b16 %v1554
    %v2831 = vunpack.c.l.b16 %v1555
    %v2832 = vunpack.c.h.b16 %v1555
    %v2833 = vunpack.c.l.b16 %v1556
    %v2834 = vunpack.c.h.b16 %v1556
    %v2835 = vunpack.c.l.b16 %v1557
    %v2836 = vunpack.c.h.b16 %v1557
    %v2837 = vunpack.c.l.b16 %v1558
    %v2838 = vunpack.c.h.b16 %v1558
    %v2839 = vunpack.c.l.b16 %v1559
    %v2840 = vunpack.c.h.b16 %v1559
    %v2841 = vunpack.c.l.b16 %v1560
    %v2842 = vunpack.c.h.b16 %v1560
    %v2843 = vunpack.c.l.b16 %v1561
    %v2844 = vunpack.c.h.b16 %v1561
    %v2845 = vunpack.c.l.b16 %v1562
    %v2846 = vunpack.c.h.b16 %v1562
    %v2847 = vunpack.c.l.b16 %v1563
    %v2848 = vunpack.c.h.b16 %v1563
    %v2849 = vunpack.c.l.b16 %v1564
    %v2850 = vunpack.c.h.b16 %v1564
    %v2851 = vunpack.c.l.b16 %v1565
    %v2852 = vunpack.c.h.b16 %v1565
    %v2853 = vunpack.c.l.b16 %v1566
    %v2854 = vunpack.c.h.b16 %v1566
    %v2855 = vunpack.c.l.b16 %v1567
    %v2856 = vunpack.c.h.b16 %v1567
    %v2857 = vunpack.c.l.b16 %v1568
    %v2858 = vunpack.c.h.b16 %v1568
    %v2859 = vunpack.c.l.b16 %v1569
    %v2860 = vunpack.c.h.b16 %v1569
    %v2861 = vunpack.c.l.b16 %v1570
    %v2862 = vunpack.c.h.b16 %v1570
    %v2863 = vunpack.c.l.b16 %v1571
    %v2864 = vunpack.c.h.b16 %v1571
    %v2865 = vunpack.c.l.b16 %v1572
    %v2866 = vunpack.c.h.b16 %v1572
    %v2867 = vunpack.c.l.b16 %v1573
    %v2868 = vunpack.c.h.b16 %v1573
    %v2869 = vunpack.c.l.b16 %v1574
    %v2870 = vunpack.c.h.b16 %v1574
    %v2871 = vunpack.c.l.b16 %v1575
    %v2872 = vunpack.c.h.b16 %v1575
    %v2873 = vunpack.c.l.b16 %v1576
    %v2874 = vunpack.c.h.b16 %v1576
    %v2875 = vunpack.c.l.b16 %v1577
    %v2876 = vunpack.c.h.b16 %v1577
    %v2877 = vunpack.c.l.b16 %v1578
    %v2878 = vunpack.c.h.b16 %v1578
    %v2879 = vunpack.c.l.b16 %v1579
    %v2880 = vunpack.c.h.b16 %v1579
    %v2881 = vunpack.c.l.b16 %v1580
    %v2882 = vunpack.c.h.b16 %v1580
    %v2883 = vunpack.c.l.b16 %v1581
    %v2884 = vunpack.c.h.b16 %v1581
    %v2885 = vunpack.c.l.b16 %v1582
    %v2886 = vunpack.c.h.b16 %v1582
    %v2887 = vunpack.c.l.b16 %v1583
    %v2888 = vunpack.c.h.b16 %v1583
    %v2889 = vunpack.c.l.b16 %v1584
    %v2890 = vunpack.c.h.b16 %v1584
    %v2891 = vunpack.c.l.b16 %v1585
    %v2892 = vunpack.c.h.b16 %v1585
    %v2893 = vunpack.c.l.b16 %v1586
    %v2894 = vunpack.c.h.b16 %v1586
    %v2895 = vunpack.c.l.b16 %v1587
    %v2896 = vunpack.c.h.b16 %v1587
    %v2897 = vunpack.c.l.b16 %v1588
    %v2898 = vunpack.c.h.b16 %v1588
    %v2899 = vunpack.c.l.b16 %v1589
    %v2900 = vunpack.c.h.b16 %v1589
    %v2901 = vunpack.c.l.b16 %v1590
    %v2902 = vunpack.c.h.b16 %v1590
    %v2903 = vunpack.c.l.b16 %v1591
    %v2904 = vunpack.c.h.b16 %v1591
    %v2905 = vunpack.c.l.b16 %v1592
    %v2906 = vunpack.c.h.b16 %v1592
    %v2907 = vunpack.c.l.b16 %v1593
    %v2908 = vunpack.c.h.b16 %v1593
    %v2909 = vunpack.c.l.b16 %v1594
    %v2910 = vunpack.c.h.b16 %v1594
    %v2911 = vunpack.c.l.b16 %v1595
    %v2912 = vunpack.c.h.b16 %v1595
    %v2913 = vunpack.c.l.b16 %v1596
    %v2914 = vunpack.c.h.b16 %v1596
    %v2915 = vunpack.c.l.b16 %v1597
    %v2916 = vunpack.c.h.b16 %v1597
    %v2917 = vunpack.c.l.b16 %v1598
    %v2918 = vunpack.c.h.b16 %v1598
    %v2919 = vunpack.c.l.b16 %v1599
    %v2920 = vunpack.c.h.b16 %v1599
    %v2921 = vunpack.c.l.b16 %v1600
    %v2922 = vunpack.c.h.b16 %v1600
    %v2923 = vunpack.c.l.b16 %v1601
    %v2924 = vunpack.c.h.b16 %v1601
    %v2925 = vunpack.c.l.b16 %v1602
    %v2926 = vunpack.c.h.b16 %v1602
    %v2927 = vunpack.c.l.b16 %v1603
    %v2928 = vunpack.c.h.b16 %v1603
    %v2929 = vunpack.c.l.b16 %v1604
    %v2930 = vunpack.c.h.b16 %v1604
    %v2931 = vunpack.c.l.b16 %v1605
    %v2932 = vunpack.c.h.b16 %v1605
    %v2933 = vunpack.c.l.b16 %v1606
    %v2934 = vunpack.c.h.b16 %v1606
    %v2935 = vunpack.c.l.b16 %v1607
    %v2936 = vunpack.c.h.b16 %v1607
    %v2937 = vunpack.c.l.b16 %v1608
    %v2938 = vunpack.c.h.b16 %v1608
    %v2939 = vunpack.c.l.b16 %v1609
    %v2940 = vunpack.c.h.b16 %v1609
    %v2941 = vunpack.c.l.b16 %v1610
    %v2942 = vunpack.c.h.b16 %v1610
    %v2943 = vunpack.c.l.b16 %v1611
    %v2944 = vunpack.c.h.b16 %v1611
    %v2945 = vunpack.c.l.b16 %v1612
    %v2946 = vunpack.c.h.b16 %v1612
    %v2947 = vunpack.c.l.b16 %v1613
    %v2948 = vunpack.c.h.b16 %v1613
    %v2949 = vunpack.c.l.b16 %v1614
    %v2950 = vunpack.c.h.b16 %v1614
    %v2951 = vunpack.c.l.b16 %v1615
    %v2952 = vunpack.c.h.b16 %v1615
    %v2953 = vunpack.c.l.b16 %v1616
    %v2954 = vunpack.c.h.b16 %v1616
    %v2955 = vunpack.c.l.b16 %v1617
    %v2956 = vunpack.c.h.b16 %v1617
    %v2957 = vunpack.c.l.b16 %v1618
    %v2958 = vunpack.c.h.b16 %v1618
    %v2959 = vunpack.c.l.b16 %v1619
    %v2960 = vunpack.c.h.b16 %v1619
    %v2961 = vunpack.c.l.b16 %v1620
    %v2962 = vunpack.c.h.b16 %v1620
    %v2963 = vunpack.c.l.b16 %v1621
    %v2964 = vunpack.c.h.b16 %v1621
    %v2965 = vunpack.c.l.b16 %v1622
    %v2966 = vunpack.c.h.b16 %v1622
    %v2967 = vunpack.c.l.b16 %v1623
    %v2968 = vunpack.c.h.b16 %v1623
    %v2969 = vunpack.c.l.b16 %v1624
    %v2970 = vunpack.c.h.b16 %v1624
    %v2971 = vunpack.c.l.b16 %v1625
    %v2972 = vunpack.c.h.b16 %v1625
    %v2973 = vunpack.c.l.b16 %v1626
    %v2974 = vunpack.c.h.b16 %v1626
    %v2975 = vunpack.c.l.b16 %v1627
    %v2976 = vunpack.c.h.b16 %v1627
    %v2977 = vunpack.c.l.b16 %v1628
    %v2978 = vunpack.c.h.b16 %v1628
    %v2979 = vunpack.c.l.b16 %v1629
    %v2980 = vunpack.c.h.b16 %v1629
    %v2981 = vunpack.c.l.b16 %v1630
    %v2982 = vunpack.c.h.b16 %v1630
    %v2983 = vunpack.c.l.b16 %v1631
    %v2984 = vunpack.c.h.b16 %v1631
    %v2985 = vunpack.c.l.b16 %v1632
    %v2986 = vunpack.c.h.b16 %v1632
    %v2987 = vunpack.c.l.b16 %v1633
    %v2988 = vunpack.c.h.b16 %v1633
    %v2989 = vunpack.c.l.b16 %v1634
    %v2990 = vunpack.c.h.b16 %v1634
    %v2991 = vunpack.c.l.b16 %v1635
    %v2992 = vunpack.c.h.b16 %v1635
    %v2993 = vunpack.c.l.b16 %v1636
    %v2994 = vunpack.c.h.b16 %v1636
    %v2995 = vunpack.c.l.b16 %v1637
    %v2996 = vunpack.c.h.b16 %v1637
    %v2997 = vunpack.c.l.b16 %v1638
    %v2998 = vunpack.c.h.b16 %v1638
    %v2999 = vunpack.c.l.b16 %v1639
    %v3000 = vunpack.c.h.b16 %v1639
    %v3001 = vunpack.c.l.b16 %v1640
    %v3002 = vunpack.c.h.b16 %v1640
    %v3003 = vunpack.c.l.b16 %v1641
    %v3004 = vunpack.c.h.b16 %v1641
    %v3005 = vunpack.c.l.b16 %v1642
    %v3006 = vunpack.c.h.b16 %v1642
    %v3007 = vunpack.c.l.b16 %v1643
    %v3008 = vunpack.c.h.b16 %v1643
    %v3009 = vunpack.c.l.b16 %v1644
    %v3010 = vunpack.c.h.b16 %v1644
    %v3011 = vunpack.c.l.b16 %v1645
    %v3012 = vunpack.c.h.b16 %v1645
    %v3013 = vunpack.c.l.b16 %v1646
    %v3014 = vunpack.c.h.b16 %v1646
    %v3015 = vunpack.c.l.b16 %v1647
    %v3016 = vunpack.c.h.b16 %v1647
    %v3017 = vunpack.c.l.b16 %v1648
    %v3018 = vunpack.c.h.b16 %v1648
    %v3019 = vunpack.c.l.b16 %v1649
    %v3020 = vunpack.c.h.b16 %v1649
    %v3021 = vunpack.c.l.b16 %v1650
    %v3022 = vunpack.c.h.b16 %v1650
    %v3023 = vunpack.c.l.b16 %v1651
    %v3024 = vunpack.c.h.b16 %v1651
    %v3025 = vunpack.c.l.b16 %v1652
    %v3026 = vunpack.c.h.b16 %v1652
    %v3027 = vunpack.c.l.b16 %v1653
    %v3028 = vunpack.c.h.b16 %v1653
    %v3029 = vunpack.c.l.b16 %v1654
    %v3030 = vunpack.c.h.b16 %v1654
    %v3031 = vunpack.c.l.b16 %v1655
    %v3032 = vunpack.c.h.b16 %v1655
    %v3033 = vunpack.c.l.b16 %v1656
    %v3034 = vunpack.c.h.b16 %v1656
    %v3035 = vunpack.c.l.b16 %v1657
    %v3036 = vunpack.c.h.b16 %v1657
    %v3037 = vunpack.c.l.b16 %v1658
    %v3038 = vunpack.c.h.b16 %v1658
    %v3039 = vunpack.c.l.b16 %v1659
    %v3040 = vunpack.c.h.b16 %v1659
    %v3041 = vunpack.c.l.b16 %v1660
    %v3042 = vunpack.c.h.b16 %v1660
    %v3043 = vunpack.c.l.b16 %v1661
    %v3044 = vunpack.c.h.b16 %v1661
    %v3045 = vunpack.c.l.b16 %v1662
    %v3046 = vunpack.c.h.b16 %v1662
    %v3047 = vunpack.c.l.b16 %v1663
    %v3048 = vunpack.c.h.b16 %v1663
    %v3049 = vunpack.c.l.b16 %v1664
    %v3050 = vunpack.c.h.b16 %v1664
    %v3051 = vunpack.c.l.b16 %v1665
    %v3052 = vunpack.c.h.b16 %v1665
    %v3053 = vunpack.c.l.b16 %v1666
    %v3054 = vunpack.c.h.b16 %v1666
    %v3055 = vunpack.c.l.b16 %v1667
    %v3056 = vunpack.c.h.b16 %v1667
    %v3057 = vunpack.c.l.b16 %v1668
    %v3058 = vunpack.c.h.b16 %v1668
    %v3059 = vunpack.c.l.b16 %v1669
    %v3060 = vunpack.c.h.b16 %v1669
    %v3061 = vunpack.c.l.b16 %v1670
    %v3062 = vunpack.c.h.b16 %v1670
    %v3063 = vunpack.c.l.b16 %v1671
    %v3064 = vunpack.c.h.b16 %v1671
    %v3065 = vunpack.c.l.b16 %v1672
    %v3066 = vunpack.c.h.b16 %v1672
    %v3067 = vunpack.c.l.b16 %v1673
    %v3068 = vunpack.c.h.b16 %v1673
    %v3069 = vunpack.c.l.b16 %v1674
    %v3070 = vunpack.c.h.b16 %v1674
    %v3071 = vunpack.c.l.b16 %v1675
    %v3072 = vunpack.c.h.b16 %v1675
    %v3073 = vunpack.c.l.b16 %v1676
    %v3074 = vunpack.c.h.b16 %v1676
    %v3075 = vunpack.c.l.b16 %v1677
    %v3076 = vunpack.c.h.b16 %v1677
    %v3077 = vunpack.c.l.b16 %v1678
    %v3078 = vunpack.c.h.b16 %v1678
    %v3079 = vunpack.c.l.b16 %v1679
    %v3080 = vunpack.c.h.b16 %v1679
    %v3081 = vunpack.c.l.b16 %v1680
    %v3082 = vunpack.c.h.b16 %v1680
    %v3083 = vunpack.c.l.b16 %v1681
    %v3084 = vunpack.c.h.b16 %v1681
    %v3085 = vunpack.c.l.b16 %v1682
    %v3086 = vunpack.c.h.b16 %v1682
    %v3087 = vunpack.c.l.b16 %v1683
    %v3088 = vunpack.c.h.b16 %v1683
    %v3089 = vunpack.c.l.b16 %v1684
    %v3090 = vunpack.c.h.b16 %v1684
    %v3091 = vunpack.c.l.b16 %v1685
    %v3092 = vunpack.c.h.b16 %v1685
    %v3093 = vunpack.c.l.b16 %v1686
    %v3094 = vunpack.c.h.b16 %v1686
    %v3095 = vunpack.c.l.b16 %v1687
    %v3096 = vunpack.c.h.b16 %v1687
    %v3097 = vunpack.c.l.b16 %v1688
    %v3098 = vunpack.c.h.b16 %v1688
    %v3099 = vunpack.c.l.b16 %v1689
    %v3100 = vunpack.c.h.b16 %v1689
    %v3101 = vunpack.c.l.b16 %v1690
    %v3102 = vunpack.c.h.b16 %v1690
    %v3103 = vunpack.c.l.b16 %v1691
    %v3104 = vunpack.c.h.b16 %v1691
    %v3105 = vunpack.c.l.b16 %v1692
    %v3106 = vunpack.c.h.b16 %v1692
    %v3107 = vunpack.c.l.b16 %v1693
    %v3108 = vunpack.c.h.b16 %v1693
    %v3109 = vunpack.c.l.b16 %v1694
    %v3110 = vunpack.c.h.b16 %v1694
    %v3111 = vunpack.c.l.b16 %v1695
    %v3112 = vunpack.c.h.b16 %v1695
    %v3113 = vunpack.c.l.b16 %v1696
    %v3114 = vunpack.c.h.b16 %v1696
    %v3115 = vunpack.c.l.b16 %v1697
    %v3116 = vunpack.c.h.b16 %v1697
    %v3117 = vunpack.c.l.b16 %v1698
    %v3118 = vunpack.c.h.b16 %v1698
    %v3119 = vunpack.c.l.b16 %v1699
    %v3120 = vunpack.c.h.b16 %v1699
    %v3121 = vunpack.c.l.b16 %v1700
    %v3122 = vunpack.c.h.b16 %v1700
    %v3123 = vunpack.c.l.b16 %v1701
    %v3124 = vunpack.c.h.b16 %v1701
    %v3125 = vunpack.c.l.b16 %v1702
    %v3126 = vunpack.c.h.b16 %v1702
    %v3127 = vunpack.c.l.b16 %v1703
    %v3128 = vunpack.c.h.b16 %v1703
    %v3129 = vunpack.c.l.b16 %v1704
    %v3130 = vunpack.c.h.b16 %v1704
    %v3131 = vunpack.c.l.b16 %v1705
    %v3132 = vunpack.c.h.b16 %v1705
    %v3133 = vunpack.c.l.b16 %v1706
    %v3134 = vunpack.c.h.b16 %v1706
    %v3135 = vunpack.c.l.b16 %v1707
    %v3136 = vunpack.c.h.b16 %v1707
    %v3137 = vunpack.c.l.b16 %v1708
    %v3138 = vunpack.c.h.b16 %v1708
    %v3139 = vunpack.c.l.b16 %v1709
    %v3140 = vunpack.c.h.b16 %v1709
    %v3141 = vunpack.c.l.b16 %v1710
    %v3142 = vunpack.c.h.b16 %v1710
    %v3143 = vunpack.c.l.b16 %v1711
    %v3144 = vunpack.c.h.b16 %v1711
    %v3145 = vunpack.c.l.b16 %v1712
    %v3146 = vunpack.c.h.b16 %v1712
    %v3147 = vunpack.c.l.b16 %v1713
    %v3148 = vunpack.c.h.b16 %v1713
    %v3149 = vunpack.c.l.b16 %v1714
    %v3150 = vunpack.c.h.b16 %v1714
    %v3151 = vunpack.c.l.b16 %v1715
    %v3152 = vunpack.c.h.b16 %v1715
    %v3153 = vunpack.c.l.b16 %v1716
    %v3154 = vunpack.c.h.b16 %v1716
    %v3155 = vunpack.c.l.b16 %v1717
    %v3156 = vunpack.c.h.b16 %v1717
    %v3157 = vunpack.c.l.b16 %v1718
    %v3158 = vunpack.c.h.b16 %v1718
    %v3159 = vunpack.c.l.b16 %v1719
    %v3160 = vunpack.c.h.b16 %v1719
    %v3161 = vunpack.c.l.b16 %v1720
    %v3162 = vunpack.c.h.b16 %v1720
    %v3163 = vunpack.c.l.b16 %v1721
    %v3164 = vunpack.c.h.b16 %v1721
    %v3165 = vunpack.c.l.b16 %v1722
    %v3166 = vunpack.c.h.b16 %v1722
    %v3167 = vunpack.c.l.b16 %v1723
    %v3168 = vunpack.c.h.b16 %v1723
    %v3169 = vunpack.c.l.b16 %v1724
    %v3170 = vunpack.c.h.b16 %v1724
    %v3171 = vunpack.c.l.b16 %v1725
    %v3172 = vunpack.c.h.b16 %v1725
    %v3173 = vunpack.c.l.b16 %v1726
    %v3174 = vunpack.c.h.b16 %v1726
    %v3175 = vunpack.c.l.b16 %v1727
    %v3176 = vunpack.c.h.b16 %v1727
    %v3177 = vunpack.c.l.b16 %v1728
    %v3178 = vunpack.c.h.b16 %v1728
    %v3179 = vunpack.c.l.b16 %v1729
    %v3180 = vunpack.c.h.b16 %v1729
    %v3181 = vunpack.c.l.b16 %v1730
    %v3182 = vunpack.c.h.b16 %v1730
    %v3183 = vunpack.c.l.b16 %v1731
    %v3184 = vunpack.c.h.b16 %v1731
    %v3185 = vunpack.c.l.b16 %v1732
    %v3186 = vunpack.c.h.b16 %v1732
    %v3187 = vunpack.c.l.b16 %v1733
    %v3188 = vunpack.c.h.b16 %v1733
    %v3189 = vunpack.c.l.b16 %v1734
    %v3190 = vunpack.c.h.b16 %v1734
    %v3191 = vunpack.c.l.b16 %v1735
    %v3192 = vunpack.c.h.b16 %v1735
    %v3193 = vunpack.c.l.b16 %v1736
    %v3194 = vunpack.c.h.b16 %v1736
    %v3195 = vunpack.c.l.b16 %v1737
    %v3196 = vunpack.c.h.b16 %v1737
    %v3197 = vunpack.c.l.b16 %v1738
    %v3198 = vunpack.c.h.b16 %v1738
    %v3199 = vunpack.c.l.b16 %v1739
    %v3200 = vunpack.c.h.b16 %v1739
    %v3201 = vunpack.c.l.b16 %v1740
    %v3202 = vunpack.c.h.b16 %v1740
    %v3203 = vunpack.c.l.b16 %v1741
    %v3204 = vunpack.c.h.b16 %v1741
    %v3205 = vunpack.c.l.b16 %v1742
    %v3206 = vunpack.c.h.b16 %v1742
    %v3207 = vunpack.c.l.b16 %v1743
    %v3208 = vunpack.c.h.b16 %v1743
    %v3209 = vunpack.c.l.b16 %v1744
    %v3210 = vunpack.c.h.b16 %v1744
    %v3211 = vunpack.c.l.b16 %v1745
    %v3212 = vunpack.c.h.b16 %v1745
    %v3213 = vunpack.c.l.b16 %v1746
    %v3214 = vunpack.c.h.b16 %v1746
    %v3215 = vunpack.c.l.b16 %v1747
    %v3216 = vunpack.c.h.b16 %v1747
    %v3217 = vunpack.c.l.b16 %v1748
    %v3218 = vunpack.c.h.b16 %v1748
    %v3219 = vunpack.c.l.b16 %v1749
    %v3220 = vunpack.c.h.b16 %v1749
    %v3221 = vunpack.c.l.b16 %v1750
    %v3222 = vunpack.c.h.b16 %v1750
    %v3223 = vunpack.c.l.b16 %v1751
    %v3224 = vunpack.c.h.b16 %v1751
    %v3225 = vunpack.c.l.b16 %v1752
    %v3226 = vunpack.c.h.b16 %v1752
    %v3227 = vunpack.c.l.b16 %v1753
    %v3228 = vunpack.c.h.b16 %v1753
    %v3229 = vunpack.c.l.b16 %v1754
    %v3230 = vunpack.c.h.b16 %v1754
    %v3231 = vunpack.c.l.b16 %v1755
    %v3232 = vunpack.c.h.b16 %v1755
    %v3233 = vunpack.c.l.b16 %v1756
    %v3234 = vunpack.c.h.b16 %v1756
    %v3235 = vunpack.c.l.b16 %v1757
    %v3236 = vunpack.c.h.b16 %v1757
    %v3237 = vunpack.c.l.b16 %v1758
    %v3238 = vunpack.c.h.b16 %v1758
    %v3239 = vunpack.c.l.b16 %v1759
    %v3240 = vunpack.c.h.b16 %v1759
    %v3241 = vunpack.c.l.b16 %v1760
    %v3242 = vunpack.c.h.b16 %v1760
    %v3243 = vunpack.c.l.b16 %v1761
    %v3244 = vunpack.c.h.b16 %v1761
    %v3245 = vunpack.c.l.b16 %v1762
    %v3246 = vunpack.c.h.b16 %v1762
    %v3247 = vunpack.c.l.b16 %v1763
    %v3248 = vunpack.c.h.b16 %v1763
    %v3249 = vunpack.c.l.b16 %v1764
    %v3250 = vunpack.c.h.b16 %v1764
    %v3251 = vunpack.c.l.b16 %v1765
    %v3252 = vunpack.c.h.b16 %v1765
    %v3253 = vunpack.c.l.b16 %v1766
    %v3254 = vunpack.c.h.b16 %v1766
    %v3255 = vunpack.c.l.b16 %v1767
    %v3256 = vunpack.c.h.b16 %v1767
    %v3257 = vunpack.c.l.b16 %v1768
    %v3258 = vunpack.c.h.b16 %v1768
    %v3259 = vunpack.c.l.b16 %v1769
    %v3260 = vunpack.c.h.b16 %v1769
    %v3261 = vunpack.c.l.b16 %v1770
    %v3262 = vunpack.c.h.b16 %v1770
    %v3263 = vunpack.c.l.b16 %v1771
    %v3264 = vunpack.c.h.b16 %v1771
    %v3265 = vunpack.c.l.b16 %v1772
    %v3266 = vunpack.c.h.b16 %v1772
    %v3267 = vunpack.c.l.b16 %v1773
    %v3268 = vunpack.c.h.b16 %v1773
    %v3269 = vunpack.c.l.b16 %v1774
    %v3270 = vunpack.c.h.b16 %v1774
    %v3271 = vunpack.c.l.b16 %v1775
    %v3272 = vunpack.c.h.b16 %v1775
    %v3273 = vunpack.c.l.b16 %v1776
    %v3274 = vunpack.c.h.b16 %v1776
    %v3275 = vunpack.c.l.b16 %v1777
    %v3276 = vunpack.c.h.b16 %v1777
    %v3277 = vunpack.c.l.b16 %v1778
    %v3278 = vunpack.c.h.b16 %v1778
    %v3279 = vunpack.c.l.b16 %v1779
    %v3280 = vunpack.c.h.b16 %v1779
    %v3281 = vunpack.c.l.b16 %v1780
    %v3282 = vunpack.c.h.b16 %v1780
    %v3283 = vunpack.c.l.b16 %v1781
    %v3284 = vunpack.c.h.b16 %v1781
    %v3285 = vunpack.c.l.b16 %v1782
    %v3286 = vunpack.c.h.b16 %v1782
    %v3287 = vunpack.c.l.b16 %v1783
    %v3288 = vunpack.c.h.b16 %v1783
    %v3289 = vunpack.c.l.b16 %v1784
    %v3290 = vunpack.c.h.b16 %v1784
    %v3291 = vunpack.c.l.b16 %v1785
    %v3292 = vunpack.c.h.b16 %v1785
    %v3293 = vunpack.c.l.b16 %v1786
    %v3294 = vunpack.c.h.b16 %v1786
    %v3295 = vunpack.c.l.b16 %v1787
    %v3296 = vunpack.c.h.b16 %v1787
    %v3297 = vunpack.c.l.b16 %v1788
    %v3298 = vunpack.c.h.b16 %v1788
    %v3299 = vunpack.c.l.b16 %v1789
    %v3300 = vunpack.c.h.b16 %v1789
    %v3301 = vunpack.c.l.b16 %v1790
    %v3302 = vunpack.c.h.b16 %v1790
    %v3303 = vunpack.c.l.b16 %v1791
    %v3304 = vunpack.c.h.b16 %v1791
    %v3305 = vunpack.c.l.b16 %v1792
    %v3306 = vunpack.c.h.b16 %v1792
    %v3307 = vunpack.c.l.b16 %v1793
    %v3308 = vunpack.c.h.b16 %v1793
    %v3309 = vunpack.c.l.b16 %v1794
    %v3310 = vunpack.c.h.b16 %v1794
    %v3311 = vunpack.c.l.b16 %v1795
    %v3312 = vunpack.c.h.b16 %v1795
    %v3313 = vunpack.c.l.b16 %v1796
    %v3314 = vunpack.c.h.b16 %v1796
    %v3315 = vunpack.c.l.b16 %v1797
    %v3316 = vunpack.c.h.b16 %v1797
    %v3317 = vunpack.c.l.b16 %v1798
    %v3318 = vunpack.c.h.b16 %v1798
    %v3319 = vunpack.c.l.b16 %v1799
    %v3320 = vunpack.c.h.b16 %v1799
    %v3321 = vunpack.c.l.b16 %v1800
    %v3322 = vunpack.c.h.b16 %v1800
    %v3323 = vunpack.c.l.b16 %v1801
    %v3324 = vunpack.c.h.b16 %v1801
    %v3325 = vunpack.c.l.b16 %v1802
    %v3326 = vunpack.c.h.b16 %v1802
    %v3327 = vunpack.c.l.b16 %v1803
    %v3328 = vunpack.c.h.b16 %v1803
    %v3329 = vunpack.c.l.b16 %v1804
    %v3330 = vunpack.c.h.b16 %v1804
    %v3331 = vunpack.c.l.b16 %v1805
    %v3332 = vunpack.c.h.b16 %v1805
    %v3333 = vunpack.c.l.b16 %v1806
    %v3334 = vunpack.c.h.b16 %v1806
    %v3335 = vunpack.c.l.b16 %v1807
    %v3336 = vunpack.c.h.b16 %v1807
    %v3337 = vunpack.c.l.b16 %v1808
    %v3338 = vunpack.c.h.b16 %v1808
    %v3339 = vunpack.c.l.b16 %v1809
    %v3340 = vunpack.c.h.b16 %v1809
    %v3341 = vunpack.c.l.b16 %v1810
    %v3342 = vunpack.c.h.b16 %v1810
    %v3343 = vunpack.c.l.b16 %v1811
    %v3344 = vunpack.c.h.b16 %v1811
    %v3345 = vunpack.c.l.b16 %v1812
    %v3346 = vunpack.c.h.b16 %v1812
    %v3347 = vunpack.c.l.b16 %v1813
    %v3348 = vunpack.c.h.b16 %v1813
    %v3349 = vunpack.c.l.b16 %v1814
    %v3350 = vunpack.c.h.b16 %v1814
    %v3351 = vunpack.c.l.b16 %v1815
    %v3352 = vunpack.c.h.b16 %v1815
    %v3353 = vunpack.c.l.b16 %v1816
    %v3354 = vunpack.c.h.b16 %v1816
    %v3355 = vunpack.c.l.b16 %v1817
    %v3356 = vunpack.c.h.b16 %v1817
    %v3357 = vunpack.c.l.b16 %v1818
    %v3358 = vunpack.c.h.b16 %v1818
    %v3359 = vunpack.c.l.b16 %v1819
    %v3360 = vunpack.c.h.b16 %v1819
    %v3361 = vunpack.c.l.b16 %v1820
    %v3362 = vunpack.c.h.b16 %v1820
    %v3363 = vunpack.c.l.b16 %v1821
    %v3364 = vunpack.c.h.b16 %v1821
    %v3365 = vunpack.c.l.b16 %v1822
    %v3366 = vunpack.c.h.b16 %v1822
    %v3367 = vunpack.c.l.b16 %v1823
    %v3368 = vunpack.c.h.b16 %v1823
    %v3369 = vunpack.c.l.b16 %v1824
    %v3370 = vunpack.c.h.b16 %v1824
    %v3371 = vunpack.c.l.b16 %v1825
    %v3372 = vunpack.c.h.b16 %v1825
    %v3373 = vunpack.c.l.b16 %v1826
    %v3374 = vunpack.c.h.b16 %v1826
    %v3375 = vunpack.c.l.b16 %v1827
    %v3376 = vunpack.c.h.b16 %v1827
    %v3377 = vunpack.c.l.b16 %v1828
    %v3378 = vunpack.c.h.b16 %v1828
    %v3379 = vunpack.c.l.b16 %v1829
    %v3380 = vunpack.c.h.b16 %v1829
    %v3381 = vunpack.c.l.b16 %v1830
    %v3382 = vunpack.c.h.b16 %v1830
    %v3383 = vunpack.c.l.b16 %v1831
    %v3384 = vunpack.c.h.b16 %v1831
    %v3385 = vunpack.c.l.b16 %v1832
    %v3386 = vunpack.c.h.b16 %v1832
    %v3387 = vunpack.c.l.b16 %v1833
    %v3388 = vunpack.c.h.b16 %v1833
    %v3389 = vunpack.c.l.b16 %v1834
    %v3390 = vunpack.c.h.b16 %v1834
    %v3391 = vunpack.c.l.b16 %v1835
    %v3392 = vunpack.c.h.b16 %v1835
    %v3393 = vunpack.c.l.b16 %v1836
    %v3394 = vunpack.c.h.b16 %v1836
    %v3395 = vunpack.c.l.b16 %v1837
    %v3396 = vunpack.c.h.b16 %v1837
    %v3397 = vunpack.c.l.b16 %v1838
    %v3398 = vunpack.c.h.b16 %v1838
    %v3399 = vunpack.c.l.b16 %v1839
    %v3400 = vunpack.c.h.b16 %v1839
    %v3401 = vunpack.c.l.b16 %v1840
    %v3402 = vunpack.c.h.b16 %v1840
    %v3403 = vunpack.c.l.b16 %v1841
    %v3404 = vunpack.c.h.b16 %v1841
    %v3405 = vunpack.c.l.b16 %v1842
    %v3406 = vunpack.c.h.b16 %v1842
    %v3407 = vunpack.c.l.b16 %v1843
    %v3408 = vunpack.c.h.b16 %v1843
    %v3409 = vunpack.c.l.b16 %v1844
    %v3410 = vunpack.c.h.b16 %v1844
    %v3411 = vunpack.c.l.b16 %v1845
    %v3412 = vunpack.c.h.b16 %v1845
    %v3413 = vunpack.c.l.b16 %v1846
    %v3414 = vunpack.c.h.b16 %v1846
    %v3415 = vunpack.c.l.b16 %v1847
    %v3416 = vunpack.c.h.b16 %v1847
    %v3417 = vunpack.c.l.b16 %v1848
    %v3418 = vunpack.c.h.b16 %v1848
    %v3419 = vunpack.c.l.b16 %v1849
    %v3420 = vunpack.c.h.b16 %v1849
    %v3421 = vunpack.c.l.b16 %v1850
    %v3422 = vunpack.c.h.b16 %v1850
    %v3423 = vunpack.c.l.b16 %v1851
    %v3424 = vunpack.c.h.b16 %v1851
    %v3425 = vunpack.c.l.b16 %v1852
    %v3426 = vunpack.c.h.b16 %v1852
    %v3427 = vunpack.c.l.b16 %v1853
    %v3428 = vunpack.c.h.b16 %v1853
    %v3429 = vunpack.c.l.b16 %v1854
    %v3430 = vunpack.c.h.b16 %v1854
    %v3431 = vpack.c.b16 %v2423, %v2407
    %v3432 = vpack.c.b16 %v2424, %v2408
    %v3433 = vpack.c.b16 %v2425, %v2409
    %v3434 = vpack.c.b16 %v2426, %v2410
    %v3435 = vpack.c.b16 %v2427, %v2411
    %v3436 = vpack.c.b16 %v2428, %v2412
    %v3437 = vpack.c.b16 %v2429, %v2413
    %v3438 = vpack.c.b16 %v2430, %v2414
    %v3439 = vpack.c.b16 %v2431, %v2415
    %v3440 = vpack.c.b16 %v2432, %v2416
    %v3441 = vpack.c.b16 %v2433, %v2417
    %v3442 = vpack.c.b16 %v2434, %v2418
    %v3443 = vpack.c.b16 %v2435, %v2419
    %v3444 = vpack.c.b16 %v2436, %v2420
    %v3445 = vpack.c.b16 %v2437, %v2421
    %v3446 = vpack.c.b16 %v2438, %v2422
    %v3447 = vpack.c.b16 %v2455, %v2439
    %v3448 = vpack.c.b16 %v2456, %v2440
    %v3449 = vpack.c.b16 %v2457, %v2441
    %v3450 = vpack.c.b16 %v2458, %v2442
    %v3451 = vpack.c.b16 %v2459, %v2443
    %v3452 = vpack.c.b16 %v2460, %v2444
    %v3453 = vpack.c.b16 %v2461, %v2445
    %v3454 = vpack.c.b16 %v2462, %v2446
    %v3455 = vpack.c.b16 %v2463, %v2447
    %v3456 = vpack.c.b16 %v2464, %v2448
    %v3457 = vpack.c.b16 %v2465, %v2449
    %v3458 = vpack.c.b16 %v2466, %v2450
    %v3459 = vpack.c.b16 %v2467, %v2451
    %v3460 = vpack.c.b16 %v2468, %v2452
    %v3461 = vpack.c.b16 %v2469, %v2453
    %v3462 = vpack.c.b16 %v2470, %v2454
    %v3463 = vpack.c.b16 %v2487, %v2471
    %v3464 = vpack.c.b16 %v2488, %v2472
    %v3465 = vpack.c.b16 %v2489, %v2473
    %v3466 = vpack.c.b16 %v2490, %v2474
    %v3467 = vpack.c.b16 %v2491, %v2475
    %v3468 = vpack.c.b16 %v2492, %v2476
    %v3469 = vpack.c.b16 %v2493, %v2477
    %v3470 = vpack.c.b16 %v2494, %v2478
    %v3471 = vpack.c.b16 %v2495, %v2479
    %v3472 = vpack.c.b16 %v2496, %v2480
    %v3473 = vpack.c.b16 %v2497, %v2481
    %v3474 = vpack.c.b16 %v2498, %v2482
    %v3475 = vpack.c.b16 %v2499, %v2483
    %v3476 = vpack.c.b16 %v2500, %v2484
    %v3477 = vpack.c.b16 %v2501, %v2485
    %v3478 = vpack.c.b16 %v2502, %v2486
    %v3479 = vpack.c.b16 %v2519, %v2503
    %v3480 = vpack.c.b16 %v2520, %v2504
    %v3481 = vpack.c.b16 %v2521, %v2505
    %v3482 = vpack.c.b16 %v2522, %v2506
    %v3483 = vpack.c.b16 %v2523, %v2507
    %v3484 = vpack.c.b16 %v2524, %v2508
    %v3485 = vpack.c.b16 %v2525, %v2509
    %v3486 = vpack.c.b16 %v2526, %v2510
    %v3487 = vpack.c.b16 %v2527, %v2511
    %v3488 = vpack.c.b16 %v2528, %v2512
    %v3489 = vpack.c.b16 %v2529, %v2513
    %v3490 = vpack.c.b16 %v2530, %v2514
    %v3491 = vpack.c.b16 %v2531, %v2515
    %v3492 = vpack.c.b16 %v2532, %v2516
    %v3493 = vpack.c.b16 %v2533, %v2517
    %v3494 = vpack.c.b16 %v2534, %v2518
    %v3495 = vpack.c.b16 %v2551, %v2535
    %v3496 = vpack.c.b16 %v2552, %v2536
    %v3497 = vpack.c.b16 %v2553, %v2537
    %v3498 = vpack.c.b16 %v2554, %v2538
    %v3499 = vpack.c.b16 %v2555, %v2539
    %v3500 = vpack.c.b16 %v2556, %v2540
    %v3501 = vpack.c.b16 %v2557, %v2541
    %v3502 = vpack.c.b16 %v2558, %v2542
    %v3503 = vpack.c.b16 %v2559, %v2543
    %v3504 = vpack.c.b16 %v2560, %v2544
    %v3505 = vpack.c.b16 %v2561, %v2545
    %v3506 = vpack.c.b16 %v2562, %v2546
    %v3507 = vpack.c.b16 %v2563, %v2547
    %v3508 = vpack.c.b16 %v2564, %v2548
    %v3509 = vpack.c.b16 %v2565, %v2549
    %v3510 = vpack.c.b16 %v2566, %v2550
    %v3511 = vpack.c.b16 %v2583, %v2567
    %v3512 = vpack.c.b16 %v2584, %v2568
    %v3513 = vpack.c.b16 %v2585, %v2569
    %v3514 = vpack.c.b16 %v2586, %v2570
    %v3515 = vpack.c.b16 %v2587, %v2571
    %v3516 = vpack.c.b16 %v2588, %v2572
    %v3517 = vpack.c.b16 %v2589, %v2573
    %v3518 = vpack.c.b16 %v2590, %v2574
    %v3519 = vpack.c.b16 %v2591, %v2575
    %v3520 = vpack.c.b16 %v2592, %v2576
    %v3521 = vpack.c.b16 %v2593, %v2577
    %v3522 = vpack.c.b16 %v2594, %v2578
    %v3523 = vpack.c.b16 %v2595, %v2579
    %v3524 = vpack.c.b16 %v2596, %v2580
    %v3525 = vpack.c.b16 %v2597, %v2581
    %v3526 = vpack.c.b16 %v2598, %v2582
    %v3527 = vpack.c.b16 %v2615, %v2599
    %v3528 = vpack.c.b16 %v2616, %v2600
    %v3529 = vpack.c.b16 %v2617, %v2601
    %v3530 = vpack.c.b16 %v2618, %v2602
    %v3531 = vpack.c.b16 %v2619, %v2603
    %v3532 = vpack.c.b16 %v2620, %v2604
    %v3533 = vpack.c.b16 %v2621, %v2605
    %v3534 = vpack.c.b16 %v2622, %v2606
    %v3535 = vpack.c.b16 %v2623, %v2607
    %v3536 = vpack.c.b16 %v2624, %v2608
    %v3537 = vpack.c.b16 %v2625, %v2609
    %v3538 = vpack.c.b16 %v2626, %v2610
    %v3539 = vpack.c.b16 %v2627, %v2611
    %v3540 = vpack.c.b16 %v2628, %v2612
    %v3541 = vpack.c.b16 %v2629, %v2613
    %v3542 = vpack.c.b16 %v2630, %v2614
    %v3543 = vpack.c.b16 %v2647, %v2631
    %v3544 = vpack.c.b16 %v2648, %v2632
    %v3545 = vpack.c.b16 %v2649, %v2633
    %v3546 = vpack.c.b16 %v2650, %v2634
    %v3547 = vpack.c.b16 %v2651, %v2635
    %v3548 = vpack.c.b16 %v2652, %v2636
    %v3549 = vpack.c.b16 %v2653, %v2637
    %v3550 = vpack.c.b16 %v2654, %v2638
    %v3551 = vpack.c.b16 %v2655, %v2639
    %v3552 = vpack.c.b16 %v2656, %v2640
    %v3553 = vpack.c.b16 %v2657, %v2641
    %v3554 = vpack.c.b16 %v2658, %v2642
    %v3555 = vpack.c.b16 %v2659, %v2643
    %v3556 = vpack.c.b16 %v2660, %v2644
    %v3557 = vpack.c.b16 %v2661, %v2645
    %v3558 = vpack.c.b16 %v2662, %v2646
    %v3559 = vpack.c.b16 %v2679, %v2663
    %v3560 = vpack.c.b16 %v2680, %v2664
    %v3561 = vpack.c.b16 %v2681, %v2665
    %v3562 = vpack.c.b16 %v2682, %v2666
    %v3563 = vpack.c.b16 %v2683, %v2667
    %v3564 = vpack.c.b16 %v2684, %v2668
    %v3565 = vpack.c.b16 %v2685, %v2669
    %v3566 = vpack.c.b16 %v2686, %v2670
    %v3567 = vpack.c.b16 %v2687, %v2671
    %v3568 = vpack.c.b16 %v2688, %v2672
    %v3569 = vpack.c.b16 %v2689, %v2673
    %v3570 = vpack.c.b16 %v2690, %v2674
    %v3571 = vpack.c.b16 %v2691, %v2675
    %v3572 = vpack.c.b16 %v2692, %v2676
    %v3573 = vpack.c.b16 %v2693, %v2677
    %v3574 = vpack.c.b16 %v2694, %v2678
    %v3575 = vpack.c.b16 %v2711, %v2695
    %v3576 = vpack.c.b16 %v2712, %v2696
    %v3577 = vpack.c.b16 %v2713, %v2697
    %v3578 = vpack.c.b16 %v2714, %v2698
    %v3579 = vpack.c.b16 %v2715, %v2699
    %v3580 = vpack.c.b16 %v2716, %v2700
    %v3581 = vpack.c.b16 %v2717, %v2701
    %v3582 = vpack.c.b16 %v2718, %v2702
    %v3583 = vpack.c.b16 %v2719, %v2703
    %v3584 = vpack.c.b16 %v2720, %v2704
    %v3585 = vpack.c.b16 %v2721, %v2705
    %v3586 = vpack.c.b16 %v2722, %v2706
    %v3587 = vpack.c.b16 %v2723, %v2707
    %v3588 = vpack.c.b16 %v2724, %v2708
    %v3589 = vpack.c.b16 %v2725, %v2709
    %v3590 = vpack.c.b16 %v2726, %v2710
    %v3591 = vpack.c.b16 %v2743, %v2727
    %v3592 = vpack.c.b16 %v2744, %v2728
    %v3593 = vpack.c.b16 %v2745, %v2729
    %v3594 = vpack.c.b16 %v2746, %v2730
    %v3595 = vpack.c.b16 %v2747, %v2731
    %v3596 = vpack.c.b16 %v2748, %v2732
    %v3597 = vpack.c.b16 %v2749, %v2733
    %v3598 = vpack.c.b16 %v2750, %v2734
    %v3599 = vpack.c.b16 %v2751, %v2735
    %v3600 = vpack.c.b16 %v2752, %v2736
    %v3601 = vpack.c.b16 %v2753, %v2737
    %v3602 = vpack.c.b16 %v2754, %v2738
    %v3603 = vpack.c.b16 %v2755, %v2739
    %v3604 = vpack.c.b16 %v2756, %v2740
    %v3605 = vpack.c.b16 %v2757, %v2741
    %v3606 = vpack.c.b16 %v2758, %v2742
    %v3607 = vpack.c.b16 %v2775, %v2759
    %v3608 = vpack.c.b16 %v2776, %v2760
    %v3609 = vpack.c.b16 %v2777, %v2761
    %v3610 = vpack.c.b16 %v2778, %v2762
    %v3611 = vpack.c.b16 %v2779, %v2763
    %v3612 = vpack.c.b16 %v2780, %v2764
    %v3613 = vpack.c.b16 %v2781, %v2765
    %v3614 = vpack.c.b16 %v2782, %v2766
    %v3615 = vpack.c.b16 %v2783, %v2767
    %v3616 = vpack.c.b16 %v2784, %v2768
    %v3617 = vpack.c.b16 %v2785, %v2769
    %v3618 = vpack.c.b16 %v2786, %v2770
    %v3619 = vpack.c.b16 %v2787, %v2771
    %v3620 = vpack.c.b16 %v2788, %v2772
    %v3621 = vpack.c.b16 %v2789, %v2773
    %v3622 = vpack.c.b16 %v2790, %v2774
    %v3623 = vpack.c.b16 %v2807, %v2791
    %v3624 = vpack.c.b16 %v2808, %v2792
    %v3625 = vpack.c.b16 %v2809, %v2793
    %v3626 = vpack.c.b16 %v2810, %v2794
    %v3627 = vpack.c.b16 %v2811, %v2795
    %v3628 = vpack.c.b16 %v2812, %v2796
    %v3629 = vpack.c.b16 %v2813, %v2797
    %v3630 = vpack.c.b16 %v2814, %v2798
    %v3631 = vpack.c.b16 %v2815, %v2799
    %v3632 = vpack.c.b16 %v2816, %v2800
    %v3633 = vpack.c.b16 %v2817, %v2801
    %v3634 = vpack.c.b16 %v2818, %v2802
    %v3635 = vpack.c.b16 %v2819, %v2803
    %v3636 = vpack.c.b16 %v2820, %v2804
    %v3637 = vpack.c.b16 %v2821, %v2805
    %v3638 = vpack.c.b16 %v2822, %v2806
    %v3639 = vpack.c.b16 %v2839, %v2823
    %v3640 = vpack.c.b16 %v2840, %v2824
    %v3641 = vpack.c.b16 %v2841, %v2825
    %v3642 = vpack.c.b16 %v2842, %v2826
    %v3643 = vpack.c.b16 %v2843, %v2827
    %v3644 = vpack.c.b16 %v2844, %v2828
    %v3645 = vpack.c.b16 %v2845, %v2829
    %v3646 = vpack.c.b16 %v2846, %v2830
    %v3647 = vpack.c.b16 %v2847, %v2831
    %v3648 = vpack.c.b16 %v2848, %v2832
    %v3649 = vpack.c.b16 %v2849, %v2833
    %v3650 = vpack.c.b16 %v2850, %v2834
    %v3651 = vpack.c.b16 %v2851, %v2835
    %v3652 = vpack.c.b16 %v2852, %v2836
    %v3653 = vpack.c.b16 %v2853, %v2837
    %v3654 = vpack.c.b16 %v2854, %v2838
    %v3655 = vpack.c.b16 %v2871, %v2855
    %v3656 = vpack.c.b16 %v2872, %v2856
    %v3657 = vpack.c.b16 %v2873, %v2857
    %v3658 = vpack.c.b16 %v2874, %v2858
    %v3659 = vpack.c.b16 %v2875, %v2859
    %v3660 = vpack.c.b16 %v2876, %v2860
    %v3661 = vpack.c.b16 %v2877, %v2861
    %v3662 = vpack.c.b16 %v2878, %v2862
    %v3663 = vpack.c.b16 %v2879, %v2863
    %v3664 = vpack.c.b16 %v2880, %v2864
    %v3665 = vpack.c.b16 %v2881, %v2865
    %v3666 = vpack.c.b16 %v2882, %v2866
    %v3667 = vpack.c.b16 %v2883, %v2867
    %v3668 = vpack.c.b16 %v2884, %v2868
    %v3669 = vpack.c.b16 %v2885, %v2869
    %v3670 = vpack.c.b16 %v2886, %v2870
    %v3671 = vpack.c.b16 %v2903, %v2887
    %v3672 = vpack.c.b16 %v2904, %v2888
    %v3673 = vpack.c.b16 %v2905, %v2889
    %v3674 = vpack.c.b16 %v2906, %v2890
    %v3675 = vpack.c.b16 %v2907, %v2891
    %v3676 = vpack.c.b16 %v2908, %v2892
    %v3677 = vpack.c.b16 %v2909, %v2893
    %v3678 = vpack.c.b16 %v2910, %v2894
    %v3679 = vpack.c.b16 %v2911, %v2895
    %v3680 = vpack.c.b16 %v2912, %v2896
    %v3681 = vpack.c.b16 %v2913, %v2897
    %v3682 = vpack.c.b16 %v2914, %v2898
    %v3683 = vpack.c.b16 %v2915, %v2899
    %v3684 = vpack.c.b16 %v2916, %v2900
    %v3685 = vpack.c.b16 %v2917, %v2901
    %v3686 = vpack.c.b16 %v2918, %v2902
    %v3687 = vpack.c.b16 %v2935, %v2919
    %v3688 = vpack.c.b16 %v2936, %v2920
    %v3689 = vpack.c.b16 %v2937, %v2921
    %v3690 = vpack.c.b16 %v2938, %v2922
    %v3691 = vpack.c.b16 %v2939, %v2923
    %v3692 = vpack.c.b16 %v2940, %v2924
    %v3693 = vpack.c.b16 %v2941, %v2925
    %v3694 = vpack.c.b16 %v2942, %v2926
    %v3695 = vpack.c.b16 %v2943, %v2927
    %v3696 = vpack.c.b16 %v2944, %v2928
    %v3697 = vpack.c.b16 %v2945, %v2929
    %v3698 = vpack.c.b16 %v2946, %v2930
    %v3699 = vpack.c.b16 %v2947, %v2931
    %v3700 = vpack.c.b16 %v2948, %v2932
    %v3701 = vpack.c.b16 %v2949, %v2933
    %v3702 = vpack.c.b16 %v2950, %v2934
    %v3703 = vpack.c.b16 %v2967, %v2951
    %v3704 = vpack.c.b16 %v2968, %v2952
    %v3705 = vpack.c.b16 %v2969, %v2953
    %v3706 = vpack.c.b16 %v2970, %v2954
    %v3707 = vpack.c.b16 %v2971, %v2955
    %v3708 = vpack.c.b16 %v2972, %v2956
    %v3709 = vpack.c.b16 %v2973, %v2957
    %v3710 = vpack.c.b16 %v2974, %v2958
    %v3711 = vpack.c.b16 %v2975, %v2959
    %v3712 = vpack.c.b16 %v2976, %v2960
    %v3713 = vpack.c.b16 %v2977, %v2961
    %v3714 = vpack.c.b16 %v2978, %v2962
    %v3715 = vpack.c.b16 %v2979, %v2963
    %v3716 = vpack.c.b16 %v2980, %v2964
    %v3717 = vpack.c.b16 %v2981, %v2965
    %v3718 = vpack.c.b16 %v2982, %v2966
    %v3719 = vpack.c.b16 %v2999, %v2983
    %v3720 = vpack.c.b16 %v3000, %v2984
    %v3721 = vpack.c.b16 %v3001, %v2985
    %v3722 = vpack.c.b16 %v3002, %v2986
    %v3723 = vpack.c.b16 %v3003, %v2987
    %v3724 = vpack.c.b16 %v3004, %v2988
    %v3725 = vpack.c.b16 %v3005, %v2989
    %v3726 = vpack.c.b16 %v3006, %v2990
    %v3727 = vpack.c.b16 %v3007, %v2991
    %v3728 = vpack.c.b16 %v3008, %v2992
    %v3729 = vpack.c.b16 %v3009, %v2993
    %v3730 = vpack.c.b16 %v3010, %v2994
    %v3731 = vpack.c.b16 %v3011, %v2995
    %v3732 = vpack.c.b16 %v3012, %v2996
    %v3733 = vpack.c.b16 %v3013, %v2997
    %v3734 = vpack.c.b16 %v3014, %v2998
    %v3735 = vpack.c.b16 %v3031, %v3015
    %v3736 = vpack.c.b16 %v3032, %v3016
    %v3737 = vpack.c.b16 %v3033, %v3017
    %v3738 = vpack.c.b16 %v3034, %v3018
    %v3739 = vpack.c.b16 %v3035, %v3019
    %v3740 = vpack.c.b16 %v3036, %v3020
    %v3741 = vpack.c.b16 %v3037, %v3021
    %v3742 = vpack.c.b16 %v3038, %v3022
    %v3743 = vpack.c.b16 %v3039, %v3023
    %v3744 = vpack.c.b16 %v3040, %v3024
    %v3745 = vpack.c.b16 %v3041, %v3025
    %v3746 = vpack.c.b16 %v3042, %v3026
    %v3747 = vpack.c.b16 %v3043, %v3027
    %v3748 = vpack.c.b16 %v3044, %v3028
    %v3749 = vpack.c.b16 %v3045, %v3029
    %v3750 = vpack.c.b16 %v3046, %v3030
    %v3751 = vpack.c.b16 %v3063, %v3047
    %v3752 = vpack.c.b16 %v3064, %v3048
    %v3753 = vpack.c.b16 %v3065, %v3049
    %v3754 = vpack.c.b16 %v3066, %v3050
    %v3755 = vpack.c.b16 %v3067, %v3051
    %v3756 = vpack.c.b16 %v3068, %v3052
    %v3757 = vpack.c.b16 %v3069, %v3053
    %v3758 = vpack.c.b16 %v3070, %v3054
    %v3759 = vpack.c.b16 %v3071, %v3055
    %v3760 = vpack.c.b16 %v3072, %v3056
    %v3761 = vpack.c.b16 %v3073, %v3057
    %v3762 = vpack.c.b16 %v3074, %v3058
    %v3763 = vpack.c.b16 %v3075, %v3059
    %v3764 = vpack.c.b16 %v3076, %v3060
    %v3765 = vpack.c.b16 %v3077, %v3061
    %v3766 = vpack.c.b16 %v3078, %v3062
    %v3767 = vpack.c.b16 %v3095, %v3079
    %v3768 = vpack.c.b16 %v3096, %v3080
    %v3769 = vpack.c.b16 %v3097, %v3081
    %v3770 = vpack.c.b16 %v3098, %v3082
    %v3771 = vpack.c.b16 %v3099, %v3083
    %v3772 = vpack.c.b16 %v3100, %v3084
    %v3773 = vpack.c.b16 %v3101, %v3085
    %v3774 = vpack.c.b16 %v3102, %v3086
    %v3775 = vpack.c.b16 %v3103, %v3087
    %v3776 = vpack.c.b16 %v3104, %v3088
    %v3777 = vpack.c.b16 %v3105, %v3089
    %v3778 = vpack.c.b16 %v3106, %v3090
    %v3779 = vpack.c.b16 %v3107, %v3091
    %v3780 = vpack.c.b16 %v3108, %v3092
    %v3781 = vpack.c.b16 %v3109, %v3093
    %v3782 = vpack.c.b16 %v3110, %v3094
    %v3783 = vpack.c.b16 %v3127, %v3111
    %v3784 = vpack.c.b16 %v3128, %v3112
    %v3785 = vpack.c.b16 %v3129, %v3113
    %v3786 = vpack.c.b16 %v3130, %v3114
    %v3787 = vpack.c.b16 %v3131, %v3115
    %v3788 = vpack.c.b16 %v3132, %v3116
    %v3789 = vpack.c.b16 %v3133, %v3117
    %v3790 = vpack.c.b16 %v3134, %v3118
    %v3791 = vpack.c.b16 %v3135, %v3119
    %v3792 = vpack.c.b16 %v3136, %v3120
    %v3793 = vpack.c.b16 %v3137, %v3121
    %v3794 = vpack.c.b16 %v3138, %v3122
    %v3795 = vpack.c.b16 %v3139, %v3123
    %v3796 = vpack.c.b16 %v3140, %v3124
    %v3797 = vpack.c.b16 %v3141, %v3125
    %v3798 = vpack.c.b16 %v3142, %v3126
    %v3799 = vpack.c.b16 %v3159, %v3143
    %v3800 = vpack.c.b16 %v3160, %v3144
    %v3801 = vpack.c.b16 %v3161, %v3145
    %v3802 = vpack.c.b16 %v3162, %v3146
    %v3803 = vpack.c.b16 %v3163, %v3147
    %v3804 = vpack.c.b16 %v3164, %v3148
    %v3805 = vpack.c.b16 %v3165, %v3149
    %v3806 = vpack.c.b16 %v3166, %v3150
    %v3807 = vpack.c.b16 %v3167, %v3151
    %v3808 = vpack.c.b16 %v3168, %v3152
    %v3809 = vpack.c.b16 %v3169, %v3153
    %v3810 = vpack.c.b16 %v3170, %v3154
    %v3811 = vpack.c.b16 %v3171, %v3155
    %v3812 = vpack.c.b16 %v3172, %v3156
    %v3813 = vpack.c.b16 %v3173, %v3157
    %v3814 = vpack.c.b16 %v3174, %v3158
    %v3815 = vpack.c.b16 %v3191, %v3175
    %v3816 = vpack.c.b16 %v3192, %v3176
    %v3817 = vpack.c.b16 %v3193, %v3177
    %v3818 = vpack.c.b16 %v3194, %v3178
    %v3819 = vpack.c.b16 %v3195, %v3179
    %v3820 = vpack.c.b16 %v3196, %v3180
    %v3821 = vpack.c.b16 %v3197, %v3181
    %v3822 = vpack.c.b16 %v3198, %v3182
    %v3823 = vpack.c.b16 %v3199, %v3183
    %v3824 = vpack.c.b16 %v3200, %v3184
    %v3825 = vpack.c.b16 %v3201, %v3185
    %v3826 = vpack.c.b16 %v3202, %v3186
    %v3827 = vpack.c.b16 %v3203, %v3187
    %v3828 = vpack.c.b16 %v3204, %v3188
    %v3829 = vpack.c.b16 %v3205, %v3189
    %v3830 = vpack.c.b16 %v3206, %v3190
    %v3831 = vpack.c.b16 %v3223, %v3207
    %v3832 = vpack.c.b16 %v3224, %v3208
    %v3833 = vpack.c.b16 %v3225, %v3209
    %v3834 = vpack.c.b16 %v3226, %v3210
    %v3835 = vpack.c.b16 %v3227, %v3211
    %v3836 = vpack.c.b16 %v3228, %v3212
    %v3837 = vpack.c.b16 %v3229, %v3213
    %v3838 = vpack.c.b16 %v3230, %v3214
    %v3839 = vpack.c.b16 %v3231, %v3215
    %v3840 = vpack.c.b16 %v3232, %v3216
    %v3841 = vpack.c.b16 %v3233, %v3217
    %v3842 = vpack.c.b16 %v3234, %v3218
    %v3843 = vpack.c.b16 %v3235, %v3219
    %v3844 = vpack.c.b16 %v3236, %v3220
    %v3845 = vpack.c.b16 %v3237, %v3221
    %v3846 = vpack.c.b16 %v3238, %v3222
    %v3847 = vpack.c.b16 %v3255, %v3239
    %v3848 = vpack.c.b16 %v3256, %v3240
    %v3849 = vpack.c.b16 %v3257, %v3241
    %v3850 = vpack.c.b16 %v3258, %v3242
    %v3851 = vpack.c.b16 %v3259, %v3243
    %v3852 = vpack.c.b16 %v3260, %v3244
    %v3853 = vpack.c.b16 %v3261, %v3245
    %v3854 = vpack.c.b16 %v3262, %v3246
    %v3855 = vpack.c.b16 %v3263, %v3247
    %v3856 = vpack.c.b16 %v3264, %v3248
    %v3857 = vpack.c.b16 %v3265, %v3249
    %v3858 = vpack.c.b16 %v3266, %v3250
    %v3859 = vpack.c.b16 %v3267, %v3251
    %v3860 = vpack.c.b16 %v3268, %v3252
    %v3861 = vpack.c.b16 %v3269, %v3253
    %v3862 = vpack.c.b16 %v3270, %v3254
    %v3863 = vpack.c.b16 %v3287, %v3271
    %v3864 = vpack.c.b16 %v3288, %v3272
    %v3865 = vpack.c.b16 %v3289, %v3273
    %v3866 = vpack.c.b16 %v3290, %v3274
    %v3867 = vpack.c.b16 %v3291, %v3275
    %v3868 = vpack.c.b16 %v3292, %v3276
    %v3869 = vpack.c.b16 %v3293, %v3277
    %v3870 = vpack.c.b16 %v3294, %v3278
    %v3871 = vpack.c.b16 %v3295, %v3279
    %v3872 = vpack.c.b16 %v3296, %v3280
    %v3873 = vpack.c.b16 %v3297, %v3281
    %v3874 = vpack.c.b16 %v3298, %v3282
    %v3875 = vpack.c.b16 %v3299, %v3283
    %v3876 = vpack.c.b16 %v3300, %v3284
    %v3877 = vpack.c.b16 %v3301, %v3285
    %v3878 = vpack.c.b16 %v3302, %v3286
    %v3879 = vpack.c.b16 %v3319, %v3303
    %v3880 = vpack.c.b16 %v3320, %v3304
    %v3881 = vpack.c.b16 %v3321, %v3305
    %v3882 = vpack.c.b16 %v3322, %v3306
    %v3883 = vpack.c.b16 %v3323, %v3307
    %v3884 = vpack.c.b16 %v3324, %v3308
    %v3885 = vpack.c.b16 %v3325, %v3309
    %v3886 = vpack.c.b16 %v3326, %v3310
    %v3887 = vpack.c.b16 %v3327, %v3311
    %v3888 = vpack.c.b16 %v3328, %v3312
    %v3889 = vpack.c.b16 %v3329, %v3313
    %v3890 = vpack.c.b16 %v3330, %v3314
    %v3891 = vpack.c.b16 %v3331, %v3315
    %v3892 = vpack.c.b16 %v3332, %v3316
    %v3893 = vpack.c.b16 %v3333, %v3317
    %v3894 = vpack.c.b16 %v3334, %v3318
    %v3895 = vpack.c.b16 %v3351, %v3335
    %v3896 = vpack.c.b16 %v3352, %v3336
    %v3897 = vpack.c.b16 %v3353, %v3337
    %v3898 = vpack.c.b16 %v3354, %v3338
    %v3899 = vpack.c.b16 %v3355, %v3339
    %v3900 = vpack.c.b16 %v3356, %v3340
    %v3901 = vpack.c.b16 %v3357, %v3341
    %v3902 = vpack.c.b16 %v3358, %v3342
    %v3903 = vpack.c.b16 %v3359, %v3343
    %v3904 = vpack.c.b16 %v3360, %v3344
    %v3905 = vpack.c.b16 %v3361, %v3345
    %v3906 = vpack.c.b16 %v3362, %v3346
    %v3907 = vpack.c.b16 %v3363, %v3347
    %v3908 = vpack.c.b16 %v3364, %v3348
    %v3909 = vpack.c.b16 %v3365, %v3349
    %v3910 = vpack.c.b16 %v3366, %v3350
    %v3911 = vpack.c.b16 %v3383, %v3367
    %v3912 = vpack.c.b16 %v3384, %v3368
    %v3913 = vpack.c.b16 %v3385, %v3369
    %v3914 = vpack.c.b16 %v3386, %v3370
    %v3915 = vpack.c.b16 %v3387, %v3371
    %v3916 = vpack.c.b16 %v3388, %v3372
    %v3917 = vpack.c.b16 %v3389, %v3373
    %v3918 = vpack.c.b16 %v3390, %v3374
    %v3919 = vpack.c.b16 %v3391, %v3375
    %v3920 = vpack.c.b16 %v3392, %v3376
    %v3921 = vpack.c.b16 %v3393, %v3377
    %v3922 = vpack.c.b16 %v3394, %v3378
    %v3923 = vpack.c.b16 %v3395, %v3379
    %v3924 = vpack.c.b16 %v3396, %v3380
    %v3925 = vpack.c.b16 %v3397, %v3381
    %v3926 = vpack.c.b16 %v3398, %v3382
    %v3927 = vpack.c.b16 %v3415, %v3399
    %v3928 = vpack.c.b16 %v3416, %v3400
    %v3929 = vpack.c.b16 %v3417, %v3401
    %v3930 = vpack.c.b16 %v3418, %v3402
    %v3931 = vpack.c.b16 %v3419, %v3403
    %v3932 = vpack.c.b16 %v3420, %v3404
    %v3933 = vpack.c.b16 %v3421, %v3405
    %v3934 = vpack.c.b16 %v3422, %v3406
    %v3935 = vpack.c.b16 %v3423, %v3407
    %v3936 = vpack.c.b16 %v3424, %v3408
    %v3937 = vpack.c.b16 %v3425, %v3409
    %v3938 = vpack.c.b16 %v3426, %v3410
    %v3939 = vpack.c.b16 %v3427, %v3411
    %v3940 = vpack.c.b16 %v3428, %v3412
    %v3941 = vpack.c.b16 %v3429, %v3413
    %v3942 = vpack.c.b16 %v3430, %v3414
    %4455 = vmatpush.bf16.msra.mxu0 %v3543
    %4456 = vmatpush.bf16.msra.mxu0 %v3527
    %4457 = vmatpush.bf16.msra.mxu0 %v3511
    %4458 = vmatpush.bf16.msra.mxu0 %v3495
    %4459 = vmatpush.bf16.msra.mxu0 %v3479
    %4460 = vmatpush.bf16.msra.mxu0 %v3463
    %4461 = vmatpush.bf16.msra.mxu0 %v3447
    %4462 = vmatpush.bf16.msra.mxu0 %v3431
    %4463 = vmatmul.bf16.gmra.mxu0 %v1857
    %v4464 = vpop.f32.mrf.mxu0
    %v4465 = vadd.f32 %v1863, %v4464
    %v4466 = vpop.f32.mrf.mxu0
    %4467 = vdwg.mxu0
    %4468 = vmatpush.bf16.msra.mxu0 %v3671
    %4469 = vmatpush.bf16.msra.mxu0 %v3655
    %4470 = vmatpush.bf16.msra.mxu0 %v3639
    %4471 = vmatpush.bf16.msra.mxu0 %v3623
    %4472 = vmatpush.bf16.msra.mxu0 %v3607
    %4473 = vmatpush.bf16.msra.mxu0 %v3591
    %4474 = vmatpush.bf16.msra.mxu0 %v3575
    %4475 = vmatpush.bf16.msra.mxu0 %v3559
    %4476 = vmatmul.bf16.gmra.mxu0 %v1858
    %v4477 = vpop.f32.mrf.mxu0
    %v4478 = vadd.f32 %v4465, %v4477
    %v4479 = vpop.f32.mrf.mxu0
    %4480 = vdwg.mxu0
    %4481 = vmatpush.bf16.msra.mxu0 %v3799
    %4482 = vmatpush.bf16.msra.mxu0 %v3783
    %4483 = vmatpush.bf16.msra.mxu0 %v3767
    %4484 = vmatpush.bf16.msra.mxu0 %v3751
    %4485 = vmatpush.bf16.msra.mxu0 %v3735
    %4486 = vmatpush.bf16.msra.mxu0 %v3719
    %4487 = vmatpush.bf16.msra.mxu0 %v3703
    %4488 = vmatpush.bf16.msra.mxu0 %v3687
    %4489 = vmatmul.bf16.gmra.mxu0 %v1859
    %v4490 = vpop.f32.mrf.mxu0
    %v4491 = vadd.f32 %v4478, %v4490
    %v4492 = vpop.f32.mrf.mxu0
    %4493 = vdwg.mxu0
    %4494 = vmatpush.bf16.msra.mxu0 %v3927
    %4495 = vmatpush.bf16.msra.mxu0 %v3911
    %4496 = vmatpush.bf16.msra.mxu0 %v3895
    %4497 = vmatpush.bf16.msra.mxu0 %v3879
    %4498 = vmatpush.bf16.msra.mxu0 %v3863
    %4499 = vmatpush.bf16.msra.mxu0 %v3847
    %4500 = vmatpush.bf16.msra.mxu0 %v3831
    %4501 = vmatpush.bf16.msra.mxu0 %v3815
    %4502 = vmatmul.bf16.gmra.mxu0 %v1860
    %v4503 = vpop.f32.mrf.mxu0
    %v4504 = vadd.f32 %v4491, %v4503
    %v4505 = vpop.f32.mrf.mxu0
    %4506 = vdwg.mxu0
    %4507 = vmatpush.bf16.msra.mxu0 %v3544
    %4508 = vmatpush.bf16.msra.mxu0 %v3528
    %4509 = vmatpush.bf16.msra.mxu0 %v3512
    %4510 = vmatpush.bf16.msra.mxu0 %v3496
    %4511 = vmatpush.bf16.msra.mxu0 %v3480
    %4512 = vmatpush.bf16.msra.mxu0 %v3464
    %4513 = vmatpush.bf16.msra.mxu0 %v3448
    %4514 = vmatpush.bf16.msra.mxu0 %v3432
    %4515 = vmatmul.bf16.gmra.mxu0 %v1857
    %v4516 = vpop.f32.mrf.mxu0
    %v4517 = vadd.f32 %v1864, %v4516
    %v4518 = vpop.f32.mrf.mxu0
    %4519 = vdwg.mxu0
    %4520 = vmatpush.bf16.msra.mxu0 %v3672
    %4521 = vmatpush.bf16.msra.mxu0 %v3656
    %4522 = vmatpush.bf16.msra.mxu0 %v3640
    %4523 = vmatpush.bf16.msra.mxu0 %v3624
    %4524 = vmatpush.bf16.msra.mxu0 %v3608
    %4525 = vmatpush.bf16.msra.mxu0 %v3592
    %4526 = vmatpush.bf16.msra.mxu0 %v3576
    %4527 = vmatpush.bf16.msra.mxu0 %v3560
    %4528 = vmatmul.bf16.gmra.mxu0 %v1858
    %v4529 = vpop.f32.mrf.mxu0
    %v4530 = vadd.f32 %v4517, %v4529
    %v4531 = vpop.f32.mrf.mxu0
    %4532 = vdwg.mxu0
    %4533 = vmatpush.bf16.msra.mxu0 %v3800
    %4534 = vmatpush.bf16.msra.mxu0 %v3784
    %4535 = vmatpush.bf16.msra.mxu0 %v3768
    %4536 = vmatpush.bf16.msra.mxu0 %v3752
    %4537 = vmatpush.bf16.msra.mxu0 %v3736
    %4538 = vmatpush.bf16.msra.mxu0 %v3720
    %4539 = vmatpush.bf16.msra.mxu0 %v3704
    %4540 = vmatpush.bf16.msra.mxu0 %v3688
    %4541 = vmatmul.bf16.gmra.mxu0 %v1859
    %v4542 = vpop.f32.mrf.mxu0
    %v4543 = vadd.f32 %v4530, %v4542
    %v4544 = vpop.f32.mrf.mxu0
    %4545 = vdwg.mxu0
    %4546 = vmatpush.bf16.msra.mxu0 %v3928
    %4547 = vmatpush.bf16.msra.mxu0 %v3912
    %4548 = vmatpush.bf16.msra.mxu0 %v3896
    %4549 = vmatpush.bf16.msra.mxu0 %v3880
    %4550 = vmatpush.bf16.msra.mxu0 %v3864
    %4551 = vmatpush.bf16.msra.mxu0 %v3848
    %4552 = vmatpush.bf16.msra.mxu0 %v3832
    %4553 = vmatpush.bf16.msra.mxu0 %v3816
    %4554 = vmatmul.bf16.gmra.mxu0 %v1860
    %v4555 = vpop.f32.mrf.mxu0
    %v4556 = vadd.f32 %v4543, %v4555
    %v4557 = vpop.f32.mrf.mxu0
    %4558 = vdwg.mxu0
    %4559 = vmatpush.bf16.msra.mxu0 %v3545
    %4560 = vmatpush.bf16.msra.mxu0 %v3529
    %4561 = vmatpush.bf16.msra.mxu0 %v3513
    %4562 = vmatpush.bf16.msra.mxu0 %v3497
    %4563 = vmatpush.bf16.msra.mxu0 %v3481
    %4564 = vmatpush.bf16.msra.mxu0 %v3465
    %4565 = vmatpush.bf16.msra.mxu0 %v3449
    %4566 = vmatpush.bf16.msra.mxu0 %v3433
    %4567 = vmatmul.bf16.gmra.mxu0 %v1857
    %v4568 = vpop.f32.mrf.mxu0
    %v4569 = vadd.f32 %v1865, %v4568
    %v4570 = vpop.f32.mrf.mxu0
    %4571 = vdwg.mxu0
    %4572 = vmatpush.bf16.msra.mxu0 %v3673
    %4573 = vmatpush.bf16.msra.mxu0 %v3657
    %4574 = vmatpush.bf16.msra.mxu0 %v3641
    %4575 = vmatpush.bf16.msra.mxu0 %v3625
    %4576 = vmatpush.bf16.msra.mxu0 %v3609
    %4577 = vmatpush.bf16.msra.mxu0 %v3593
    %4578 = vmatpush.bf16.msra.mxu0 %v3577
    %4579 = vmatpush.bf16.msra.mxu0 %v3561
    %4580 = vmatmul.bf16.gmra.mxu0 %v1858
    %v4581 = vpop.f32.mrf.mxu0
    %v4582 = vadd.f32 %v4569, %v4581
    %v4583 = vpop.f32.mrf.mxu0
    %4584 = vdwg.mxu0
    %4585 = vmatpush.bf16.msra.mxu0 %v3801
    %4586 = vmatpush.bf16.msra.mxu0 %v3785
    %4587 = vmatpush.bf16.msra.mxu0 %v3769
    %4588 = vmatpush.bf16.msra.mxu0 %v3753
    %4589 = vmatpush.bf16.msra.mxu0 %v3737
    %4590 = vmatpush.bf16.msra.mxu0 %v3721
    %4591 = vmatpush.bf16.msra.mxu0 %v3705
    %4592 = vmatpush.bf16.msra.mxu0 %v3689
    %4593 = vmatmul.bf16.gmra.mxu0 %v1859
    %v4594 = vpop.f32.mrf.mxu0
    %v4595 = vadd.f32 %v4582, %v4594
    %v4596 = vpop.f32.mrf.mxu0
    %4597 = vdwg.mxu0
    %4598 = vmatpush.bf16.msra.mxu0 %v3929
    %4599 = vmatpush.bf16.msra.mxu0 %v3913
    %4600 = vmatpush.bf16.msra.mxu0 %v3897
    %4601 = vmatpush.bf16.msra.mxu0 %v3881
    %4602 = vmatpush.bf16.msra.mxu0 %v3865
    %4603 = vmatpush.bf16.msra.mxu0 %v3849
    %4604 = vmatpush.bf16.msra.mxu0 %v3833
    %4605 = vmatpush.bf16.msra.mxu0 %v3817
    %4606 = vmatmul.bf16.gmra.mxu0 %v1860
    %v4607 = vpop.f32.mrf.mxu0
    %v4608 = vadd.f32 %v4595, %v4607
    %v4609 = vpop.f32.mrf.mxu0
    %4610 = vdwg.mxu0
    %4611 = vmatpush.bf16.msra.mxu0 %v3546
    %4612 = vmatpush.bf16.msra.mxu0 %v3530
    %4613 = vmatpush.bf16.msra.mxu0 %v3514
    %4614 = vmatpush.bf16.msra.mxu0 %v3498
    %4615 = vmatpush.bf16.msra.mxu0 %v3482
    %4616 = vmatpush.bf16.msra.mxu0 %v3466
    %4617 = vmatpush.bf16.msra.mxu0 %v3450
    %4618 = vmatpush.bf16.msra.mxu0 %v3434
    %4619 = vmatmul.bf16.gmra.mxu0 %v1857
    %v4620 = vpop.f32.mrf.mxu0
    %v4621 = vadd.f32 %v1866, %v4620
    %v4622 = vpop.f32.mrf.mxu0
    %4623 = vdwg.mxu0
    %4624 = vmatpush.bf16.msra.mxu0 %v3674
    %4625 = vmatpush.bf16.msra.mxu0 %v3658
    %4626 = vmatpush.bf16.msra.mxu0 %v3642
    %4627 = vmatpush.bf16.msra.mxu0 %v3626
    %4628 = vmatpush.bf16.msra.mxu0 %v3610
    %4629 = vmatpush.bf16.msra.mxu0 %v3594
    %4630 = vmatpush.bf16.msra.mxu0 %v3578
    %4631 = vmatpush.bf16.msra.mxu0 %v3562
    %4632 = vmatmul.bf16.gmra.mxu0 %v1858
    %v4633 = vpop.f32.mrf.mxu0
    %v4634 = vadd.f32 %v4621, %v4633
    %v4635 = vpop.f32.mrf.mxu0
    %4636 = vdwg.mxu0
    %4637 = vmatpush.bf16.msra.mxu0 %v3802
    %4638 = vmatpush.bf16.msra.mxu0 %v3786
    %4639 = vmatpush.bf16.msra.mxu0 %v3770
    %4640 = vmatpush.bf16.msra.mxu0 %v3754
    %4641 = vmatpush.bf16.msra.mxu0 %v3738
    %4642 = vmatpush.bf16.msra.mxu0 %v3722
    %4643 = vmatpush.bf16.msra.mxu0 %v3706
    %4644 = vmatpush.bf16.msra.mxu0 %v3690
    %4645 = vmatmul.bf16.gmra.mxu0 %v1859
    %v4646 = vpop.f32.mrf.mxu0
    %v4647 = vadd.f32 %v4634, %v4646
    %v4648 = vpop.f32.mrf.mxu0
    %4649 = vdwg.mxu0
    %4650 = vmatpush.bf16.msra.mxu0 %v3930
    %4651 = vmatpush.bf16.msra.mxu0 %v3914
    %4652 = vmatpush.bf16.msra.mxu0 %v3898
    %4653 = vmatpush.bf16.msra.mxu0 %v3882
    %4654 = vmatpush.bf16.msra.mxu0 %v3866
    %4655 = vmatpush.bf16.msra.mxu0 %v3850
    %4656 = vmatpush.bf16.msra.mxu0 %v3834
    %4657 = vmatpush.bf16.msra.mxu0 %v3818
    %4658 = vmatmul.bf16.gmra.mxu0 %v1860
    %v4659 = vpop.f32.mrf.mxu0
    %v4660 = vadd.f32 %v4647, %v4659
    %v4661 = vpop.f32.mrf.mxu0
    %4662 = vdwg.mxu0
    %4663 = vmatpush.bf16.msra.mxu0 %v3547
    %4664 = vmatpush.bf16.msra.mxu0 %v3531
    %4665 = vmatpush.bf16.msra.mxu0 %v3515
    %4666 = vmatpush.bf16.msra.mxu0 %v3499
    %4667 = vmatpush.bf16.msra.mxu0 %v3483
    %4668 = vmatpush.bf16.msra.mxu0 %v3467
    %4669 = vmatpush.bf16.msra.mxu0 %v3451
    %4670 = vmatpush.bf16.msra.mxu0 %v3435
    %4671 = vmatmul.bf16.gmra.mxu0 %v1857
    %v4672 = vpop.f32.mrf.mxu0
    %v4673 = vadd.f32 %v1867, %v4672
    %v4674 = vpop.f32.mrf.mxu0
    %4675 = vdwg.mxu0
    %4676 = vmatpush.bf16.msra.mxu0 %v3675
    %4677 = vmatpush.bf16.msra.mxu0 %v3659
    %4678 = vmatpush.bf16.msra.mxu0 %v3643
    %4679 = vmatpush.bf16.msra.mxu0 %v3627
    %4680 = vmatpush.bf16.msra.mxu0 %v3611
    %4681 = vmatpush.bf16.msra.mxu0 %v3595
    %4682 = vmatpush.bf16.msra.mxu0 %v3579
    %4683 = vmatpush.bf16.msra.mxu0 %v3563
    %4684 = vmatmul.bf16.gmra.mxu0 %v1858
    %v4685 = vpop.f32.mrf.mxu0
    %v4686 = vadd.f32 %v4673, %v4685
    %v4687 = vpop.f32.mrf.mxu0
    %4688 = vdwg.mxu0
    %4689 = vmatpush.bf16.msra.mxu0 %v3803
    %4690 = vmatpush.bf16.msra.mxu0 %v3787
    %4691 = vmatpush.bf16.msra.mxu0 %v3771
    %4692 = vmatpush.bf16.msra.mxu0 %v3755
    %4693 = vmatpush.bf16.msra.mxu0 %v3739
    %4694 = vmatpush.bf16.msra.mxu0 %v3723
    %4695 = vmatpush.bf16.msra.mxu0 %v3707
    %4696 = vmatpush.bf16.msra.mxu0 %v3691
    %4697 = vmatmul.bf16.gmra.mxu0 %v1859
    %v4698 = vpop.f32.mrf.mxu0
    %v4699 = vadd.f32 %v4686, %v4698
    %v4700 = vpop.f32.mrf.mxu0
    %4701 = vdwg.mxu0
    %4702 = vmatpush.bf16.msra.mxu0 %v3931
    %4703 = vmatpush.bf16.msra.mxu0 %v3915
    %4704 = vmatpush.bf16.msra.mxu0 %v3899
    %4705 = vmatpush.bf16.msra.mxu0 %v3883
    %4706 = vmatpush.bf16.msra.mxu0 %v3867
    %4707 = vmatpush.bf16.msra.mxu0 %v3851
    %4708 = vmatpush.bf16.msra.mxu0 %v3835
    %4709 = vmatpush.bf16.msra.mxu0 %v3819
    %4710 = vmatmul.bf16.gmra.mxu0 %v1860
    %v4711 = vpop.f32.mrf.mxu0
    %v4712 = vadd.f32 %v4699, %v4711
    %v4713 = vpop.f32.mrf.mxu0
    %4714 = vdwg.mxu0
    %4715 = vmatpush.bf16.msra.mxu0 %v3548
    %4716 = vmatpush.bf16.msra.mxu0 %v3532
    %4717 = vmatpush.bf16.msra.mxu0 %v3516
    %4718 = vmatpush.bf16.msra.mxu0 %v3500
    %4719 = vmatpush.bf16.msra.mxu0 %v3484
    %4720 = vmatpush.bf16.msra.mxu0 %v3468
    %4721 = vmatpush.bf16.msra.mxu0 %v3452
    %4722 = vmatpush.bf16.msra.mxu0 %v3436
    %4723 = vmatmul.bf16.gmra.mxu0 %v1857
    %v4724 = vpop.f32.mrf.mxu0
    %v4725 = vadd.f32 %v1868, %v4724
    %v4726 = vpop.f32.mrf.mxu0
    %4727 = vdwg.mxu0
    %4728 = vmatpush.bf16.msra.mxu0 %v3676
    %4729 = vmatpush.bf16.msra.mxu0 %v3660
    %4730 = vmatpush.bf16.msra.mxu0 %v3644
    %4731 = vmatpush.bf16.msra.mxu0 %v3628
    %4732 = vmatpush.bf16.msra.mxu0 %v3612
    %4733 = vmatpush.bf16.msra.mxu0 %v3596
    %4734 = vmatpush.bf16.msra.mxu0 %v3580
    %4735 = vmatpush.bf16.msra.mxu0 %v3564
    %4736 = vmatmul.bf16.gmra.mxu0 %v1858
    %v4737 = vpop.f32.mrf.mxu0
    %v4738 = vadd.f32 %v4725, %v4737
    %v4739 = vpop.f32.mrf.mxu0
    %4740 = vdwg.mxu0
    %4741 = vmatpush.bf16.msra.mxu0 %v3804
    %4742 = vmatpush.bf16.msra.mxu0 %v3788
    %4743 = vmatpush.bf16.msra.mxu0 %v3772
    %4744 = vmatpush.bf16.msra.mxu0 %v3756
    %4745 = vmatpush.bf16.msra.mxu0 %v3740
    %4746 = vmatpush.bf16.msra.mxu0 %v3724
    %4747 = vmatpush.bf16.msra.mxu0 %v3708
    %4748 = vmatpush.bf16.msra.mxu0 %v3692
    %4749 = vmatmul.bf16.gmra.mxu0 %v1859
    %v4750 = vpop.f32.mrf.mxu0
    %v4751 = vadd.f32 %v4738, %v4750
    %v4752 = vpop.f32.mrf.mxu0
    %4753 = vdwg.mxu0
    %4754 = vmatpush.bf16.msra.mxu0 %v3932
    %4755 = vmatpush.bf16.msra.mxu0 %v3916
    %4756 = vmatpush.bf16.msra.mxu0 %v3900
    %4757 = vmatpush.bf16.msra.mxu0 %v3884
    %4758 = vmatpush.bf16.msra.mxu0 %v3868
    %4759 = vmatpush.bf16.msra.mxu0 %v3852
    %4760 = vmatpush.bf16.msra.mxu0 %v3836
    %4761 = vmatpush.bf16.msra.mxu0 %v3820
    %4762 = vmatmul.bf16.gmra.mxu0 %v1860
    %v4763 = vpop.f32.mrf.mxu0
    %v4764 = vadd.f32 %v4751, %v4763
    %v4765 = vpop.f32.mrf.mxu0
    %4766 = vdwg.mxu0
    %4767 = vmatpush.bf16.msra.mxu0 %v3549
    %4768 = vmatpush.bf16.msra.mxu0 %v3533
    %4769 = vmatpush.bf16.msra.mxu0 %v3517
    %4770 = vmatpush.bf16.msra.mxu0 %v3501
    %4771 = vmatpush.bf16.msra.mxu0 %v3485
    %4772 = vmatpush.bf16.msra.mxu0 %v3469
    %4773 = vmatpush.bf16.msra.mxu0 %v3453
    %4774 = vmatpush.bf16.msra.mxu0 %v3437
    %4775 = vmatmul.bf16.gmra.mxu0 %v1857
    %v4776 = vpop.f32.mrf.mxu0
    %v4777 = vadd.f32 %v1869, %v4776
    %v4778 = vpop.f32.mrf.mxu0
    %4779 = vdwg.mxu0
    %4780 = vmatpush.bf16.msra.mxu0 %v3677
    %4781 = vmatpush.bf16.msra.mxu0 %v3661
    %4782 = vmatpush.bf16.msra.mxu0 %v3645
    %4783 = vmatpush.bf16.msra.mxu0 %v3629
    %4784 = vmatpush.bf16.msra.mxu0 %v3613
    %4785 = vmatpush.bf16.msra.mxu0 %v3597
    %4786 = vmatpush.bf16.msra.mxu0 %v3581
    %4787 = vmatpush.bf16.msra.mxu0 %v3565
    %4788 = vmatmul.bf16.gmra.mxu0 %v1858
    %v4789 = vpop.f32.mrf.mxu0
    %v4790 = vadd.f32 %v4777, %v4789
    %v4791 = vpop.f32.mrf.mxu0
    %4792 = vdwg.mxu0
    %4793 = vmatpush.bf16.msra.mxu0 %v3805
    %4794 = vmatpush.bf16.msra.mxu0 %v3789
    %4795 = vmatpush.bf16.msra.mxu0 %v3773
    %4796 = vmatpush.bf16.msra.mxu0 %v3757
    %4797 = vmatpush.bf16.msra.mxu0 %v3741
    %4798 = vmatpush.bf16.msra.mxu0 %v3725
    %4799 = vmatpush.bf16.msra.mxu0 %v3709
    %4800 = vmatpush.bf16.msra.mxu0 %v3693
    %4801 = vmatmul.bf16.gmra.mxu0 %v1859
    %v4802 = vpop.f32.mrf.mxu0
    %v4803 = vadd.f32 %v4790, %v4802
    %v4804 = vpop.f32.mrf.mxu0
    %4805 = vdwg.mxu0
    %4806 = vmatpush.bf16.msra.mxu0 %v3933
    %4807 = vmatpush.bf16.msra.mxu0 %v3917
    %4808 = vmatpush.bf16.msra.mxu0 %v3901
    %4809 = vmatpush.bf16.msra.mxu0 %v3885
    %4810 = vmatpush.bf16.msra.mxu0 %v3869
    %4811 = vmatpush.bf16.msra.mxu0 %v3853
    %4812 = vmatpush.bf16.msra.mxu0 %v3837
    %4813 = vmatpush.bf16.msra.mxu0 %v3821
    %4814 = vmatmul.bf16.gmra.mxu0 %v1860
    %v4815 = vpop.f32.mrf.mxu0
    %v4816 = vadd.f32 %v4803, %v4815
    %v4817 = vpop.f32.mrf.mxu0
    %4818 = vdwg.mxu0
    %4819 = vmatpush.bf16.msra.mxu0 %v3550
    %4820 = vmatpush.bf16.msra.mxu0 %v3534
    %4821 = vmatpush.bf16.msra.mxu0 %v3518
    %4822 = vmatpush.bf16.msra.mxu0 %v3502
    %4823 = vmatpush.bf16.msra.mxu0 %v3486
    %4824 = vmatpush.bf16.msra.mxu0 %v3470
    %4825 = vmatpush.bf16.msra.mxu0 %v3454
    %4826 = vmatpush.bf16.msra.mxu0 %v3438
    %4827 = vmatmul.bf16.gmra.mxu0 %v1857
    %v4828 = vpop.f32.mrf.mxu0
    %v4829 = vadd.f32 %v1870, %v4828
    %v4830 = vpop.f32.mrf.mxu0
    %4831 = vdwg.mxu0
    %4832 = vmatpush.bf16.msra.mxu0 %v3678
    %4833 = vmatpush.bf16.msra.mxu0 %v3662
    %4834 = vmatpush.bf16.msra.mxu0 %v3646
    %4835 = vmatpush.bf16.msra.mxu0 %v3630
    %4836 = vmatpush.bf16.msra.mxu0 %v3614
    %4837 = vmatpush.bf16.msra.mxu0 %v3598
    %4838 = vmatpush.bf16.msra.mxu0 %v3582
    %4839 = vmatpush.bf16.msra.mxu0 %v3566
    %4840 = vmatmul.bf16.gmra.mxu0 %v1858
    %v4841 = vpop.f32.mrf.mxu0
    %v4842 = vadd.f32 %v4829, %v4841
    %v4843 = vpop.f32.mrf.mxu0
    %4844 = vdwg.mxu0
    %4845 = vmatpush.bf16.msra.mxu0 %v3806
    %4846 = vmatpush.bf16.msra.mxu0 %v3790
    %4847 = vmatpush.bf16.msra.mxu0 %v3774
    %4848 = vmatpush.bf16.msra.mxu0 %v3758
    %4849 = vmatpush.bf16.msra.mxu0 %v3742
    %4850 = vmatpush.bf16.msra.mxu0 %v3726
    %4851 = vmatpush.bf16.msra.mxu0 %v3710
    %4852 = vmatpush.bf16.msra.mxu0 %v3694
    %4853 = vmatmul.bf16.gmra.mxu0 %v1859
    %v4854 = vpop.f32.mrf.mxu0
    %v4855 = vadd.f32 %v4842, %v4854
    %v4856 = vpop.f32.mrf.mxu0
    %4857 = vdwg.mxu0
    %4858 = vmatpush.bf16.msra.mxu0 %v3934
    %4859 = vmatpush.bf16.msra.mxu0 %v3918
    %4860 = vmatpush.bf16.msra.mxu0 %v3902
    %4861 = vmatpush.bf16.msra.mxu0 %v3886
    %4862 = vmatpush.bf16.msra.mxu0 %v3870
    %4863 = vmatpush.bf16.msra.mxu0 %v3854
    %4864 = vmatpush.bf16.msra.mxu0 %v3838
    %4865 = vmatpush.bf16.msra.mxu0 %v3822
    %4866 = vmatmul.bf16.gmra.mxu0 %v1860
    %v4867 = vpop.f32.mrf.mxu0
    %v4868 = vadd.f32 %v4855, %v4867
    %v4869 = vpop.f32.mrf.mxu0
    %4870 = vdwg.mxu0
    %4871 = vmatpush.bf16.msra.mxu0 %v3551
    %4872 = vmatpush.bf16.msra.mxu0 %v3535
    %4873 = vmatpush.bf16.msra.mxu0 %v3519
    %4874 = vmatpush.bf16.msra.mxu0 %v3503
    %4875 = vmatpush.bf16.msra.mxu0 %v3487
    %4876 = vmatpush.bf16.msra.mxu0 %v3471
    %4877 = vmatpush.bf16.msra.mxu0 %v3455
    %4878 = vmatpush.bf16.msra.mxu0 %v3439
    %4879 = vmatmul.bf16.gmra.mxu0 %v1857
    %v4880 = vpop.f32.mrf.mxu0
    %v4881 = vadd.f32 %v1871, %v4880
    %v4882 = vpop.f32.mrf.mxu0
    %4883 = vdwg.mxu0
    %4884 = vmatpush.bf16.msra.mxu0 %v3679
    %4885 = vmatpush.bf16.msra.mxu0 %v3663
    %4886 = vmatpush.bf16.msra.mxu0 %v3647
    %4887 = vmatpush.bf16.msra.mxu0 %v3631
    %4888 = vmatpush.bf16.msra.mxu0 %v3615
    %4889 = vmatpush.bf16.msra.mxu0 %v3599
    %4890 = vmatpush.bf16.msra.mxu0 %v3583
    %4891 = vmatpush.bf16.msra.mxu0 %v3567
    %4892 = vmatmul.bf16.gmra.mxu0 %v1858
    %v4893 = vpop.f32.mrf.mxu0
    %v4894 = vadd.f32 %v4881, %v4893
    %v4895 = vpop.f32.mrf.mxu0
    %4896 = vdwg.mxu0
    %4897 = vmatpush.bf16.msra.mxu0 %v3807
    %4898 = vmatpush.bf16.msra.mxu0 %v3791
    %4899 = vmatpush.bf16.msra.mxu0 %v3775
    %4900 = vmatpush.bf16.msra.mxu0 %v3759
    %4901 = vmatpush.bf16.msra.mxu0 %v3743
    %4902 = vmatpush.bf16.msra.mxu0 %v3727
    %4903 = vmatpush.bf16.msra.mxu0 %v3711
    %4904 = vmatpush.bf16.msra.mxu0 %v3695
    %4905 = vmatmul.bf16.gmra.mxu0 %v1859
    %v4906 = vpop.f32.mrf.mxu0
    %v4907 = vadd.f32 %v4894, %v4906
    %v4908 = vpop.f32.mrf.mxu0
    %4909 = vdwg.mxu0
    %4910 = vmatpush.bf16.msra.mxu0 %v3935
    %4911 = vmatpush.bf16.msra.mxu0 %v3919
    %4912 = vmatpush.bf16.msra.mxu0 %v3903
    %4913 = vmatpush.bf16.msra.mxu0 %v3887
    %4914 = vmatpush.bf16.msra.mxu0 %v3871
    %4915 = vmatpush.bf16.msra.mxu0 %v3855
    %4916 = vmatpush.bf16.msra.mxu0 %v3839
    %4917 = vmatpush.bf16.msra.mxu0 %v3823
    %4918 = vmatmul.bf16.gmra.mxu0 %v1860
    %v4919 = vpop.f32.mrf.mxu0
    %v4920 = vadd.f32 %v4907, %v4919
    %v4921 = vpop.f32.mrf.mxu0
    %4922 = vdwg.mxu0
    %4923 = vmatpush.bf16.msra.mxu0 %v3552
    %4924 = vmatpush.bf16.msra.mxu0 %v3536
    %4925 = vmatpush.bf16.msra.mxu0 %v3520
    %4926 = vmatpush.bf16.msra.mxu0 %v3504
    %4927 = vmatpush.bf16.msra.mxu0 %v3488
    %4928 = vmatpush.bf16.msra.mxu0 %v3472
    %4929 = vmatpush.bf16.msra.mxu0 %v3456
    %4930 = vmatpush.bf16.msra.mxu0 %v3440
    %4931 = vmatmul.bf16.gmra.mxu0 %v1857
    %v4932 = vpop.f32.mrf.mxu0
    %v4933 = vadd.f32 %v1872, %v4932
    %v4934 = vpop.f32.mrf.mxu0
    %4935 = vdwg.mxu0
    %4936 = vmatpush.bf16.msra.mxu0 %v3680
    %4937 = vmatpush.bf16.msra.mxu0 %v3664
    %4938 = vmatpush.bf16.msra.mxu0 %v3648
    %4939 = vmatpush.bf16.msra.mxu0 %v3632
    %4940 = vmatpush.bf16.msra.mxu0 %v3616
    %4941 = vmatpush.bf16.msra.mxu0 %v3600
    %4942 = vmatpush.bf16.msra.mxu0 %v3584
    %4943 = vmatpush.bf16.msra.mxu0 %v3568
    %4944 = vmatmul.bf16.gmra.mxu0 %v1858
    %v4945 = vpop.f32.mrf.mxu0
    %v4946 = vadd.f32 %v4933, %v4945
    %v4947 = vpop.f32.mrf.mxu0
    %4948 = vdwg.mxu0
    %4949 = vmatpush.bf16.msra.mxu0 %v3808
    %4950 = vmatpush.bf16.msra.mxu0 %v3792
    %4951 = vmatpush.bf16.msra.mxu0 %v3776
    %4952 = vmatpush.bf16.msra.mxu0 %v3760
    %4953 = vmatpush.bf16.msra.mxu0 %v3744
    %4954 = vmatpush.bf16.msra.mxu0 %v3728
    %4955 = vmatpush.bf16.msra.mxu0 %v3712
    %4956 = vmatpush.bf16.msra.mxu0 %v3696
    %4957 = vmatmul.bf16.gmra.mxu0 %v1859
    %v4958 = vpop.f32.mrf.mxu0
    %v4959 = vadd.f32 %v4946, %v4958
    %v4960 = vpop.f32.mrf.mxu0
    %4961 = vdwg.mxu0
    %4962 = vmatpush.bf16.msra.mxu0 %v3936
    %4963 = vmatpush.bf16.msra.mxu0 %v3920
    %4964 = vmatpush.bf16.msra.mxu0 %v3904
    %4965 = vmatpush.bf16.msra.mxu0 %v3888
    %4966 = vmatpush.bf16.msra.mxu0 %v3872
    %4967 = vmatpush.bf16.msra.mxu0 %v3856
    %4968 = vmatpush.bf16.msra.mxu0 %v3840
    %4969 = vmatpush.bf16.msra.mxu0 %v3824
    %4970 = vmatmul.bf16.gmra.mxu0 %v1860
    %v4971 = vpop.f32.mrf.mxu0
    %v4972 = vadd.f32 %v4959, %v4971
    %v4973 = vpop.f32.mrf.mxu0
    %4974 = vdwg.mxu0
    %4975 = vmatpush.bf16.msra.mxu0 %v3553
    %4976 = vmatpush.bf16.msra.mxu0 %v3537
    %4977 = vmatpush.bf16.msra.mxu0 %v3521
    %4978 = vmatpush.bf16.msra.mxu0 %v3505
    %4979 = vmatpush.bf16.msra.mxu0 %v3489
    %4980 = vmatpush.bf16.msra.mxu0 %v3473
    %4981 = vmatpush.bf16.msra.mxu0 %v3457
    %4982 = vmatpush.bf16.msra.mxu0 %v3441
    %4983 = vmatmul.bf16.gmra.mxu0 %v1857
    %v4984 = vpop.f32.mrf.mxu0
    %v4985 = vadd.f32 %v1873, %v4984
    %v4986 = vpop.f32.mrf.mxu0
    %4987 = vdwg.mxu0
    %4988 = vmatpush.bf16.msra.mxu0 %v3681
    %4989 = vmatpush.bf16.msra.mxu0 %v3665
    %4990 = vmatpush.bf16.msra.mxu0 %v3649
    %4991 = vmatpush.bf16.msra.mxu0 %v3633
    %4992 = vmatpush.bf16.msra.mxu0 %v3617
    %4993 = vmatpush.bf16.msra.mxu0 %v3601
    %4994 = vmatpush.bf16.msra.mxu0 %v3585
    %4995 = vmatpush.bf16.msra.mxu0 %v3569
    %4996 = vmatmul.bf16.gmra.mxu0 %v1858
    %v4997 = vpop.f32.mrf.mxu0
    %v4998 = vadd.f32 %v4985, %v4997
    %v4999 = vpop.f32.mrf.mxu0
    %5000 = vdwg.mxu0
    %5001 = vmatpush.bf16.msra.mxu0 %v3809
    %5002 = vmatpush.bf16.msra.mxu0 %v3793
    %5003 = vmatpush.bf16.msra.mxu0 %v3777
    %5004 = vmatpush.bf16.msra.mxu0 %v3761
    %5005 = vmatpush.bf16.msra.mxu0 %v3745
    %5006 = vmatpush.bf16.msra.mxu0 %v3729
    %5007 = vmatpush.bf16.msra.mxu0 %v3713
    %5008 = vmatpush.bf16.msra.mxu0 %v3697
    %5009 = vmatmul.bf16.gmra.mxu0 %v1859
    %v5010 = vpop.f32.mrf.mxu0
    %v5011 = vadd.f32 %v4998, %v5010
    %v5012 = vpop.f32.mrf.mxu0
    %5013 = vdwg.mxu0
    %5014 = vmatpush.bf16.msra.mxu0 %v3937
    %5015 = vmatpush.bf16.msra.mxu0 %v3921
    %5016 = vmatpush.bf16.msra.mxu0 %v3905
    %5017 = vmatpush.bf16.msra.mxu0 %v3889
    %5018 = vmatpush.bf16.msra.mxu0 %v3873
    %5019 = vmatpush.bf16.msra.mxu0 %v3857
    %5020 = vmatpush.bf16.msra.mxu0 %v3841
    %5021 = vmatpush.bf16.msra.mxu0 %v3825
    %5022 = vmatmul.bf16.gmra.mxu0 %v1860
    %v5023 = vpop.f32.mrf.mxu0
    %v5024 = vadd.f32 %v5011, %v5023
    %v5025 = vpop.f32.mrf.mxu0
    %5026 = vdwg.mxu0
    %5027 = vmatpush.bf16.msra.mxu0 %v3554
    %5028 = vmatpush.bf16.msra.mxu0 %v3538
    %5029 = vmatpush.bf16.msra.mxu0 %v3522
    %5030 = vmatpush.bf16.msra.mxu0 %v3506
    %5031 = vmatpush.bf16.msra.mxu0 %v3490
    %5032 = vmatpush.bf16.msra.mxu0 %v3474
    %5033 = vmatpush.bf16.msra.mxu0 %v3458
    %5034 = vmatpush.bf16.msra.mxu0 %v3442
    %5035 = vmatmul.bf16.gmra.mxu0 %v1857
    %v5036 = vpop.f32.mrf.mxu0
    %v5037 = vadd.f32 %v1874, %v5036
    %v5038 = vpop.f32.mrf.mxu0
    %5039 = vdwg.mxu0
    %5040 = vmatpush.bf16.msra.mxu0 %v3682
    %5041 = vmatpush.bf16.msra.mxu0 %v3666
    %5042 = vmatpush.bf16.msra.mxu0 %v3650
    %5043 = vmatpush.bf16.msra.mxu0 %v3634
    %5044 = vmatpush.bf16.msra.mxu0 %v3618
    %5045 = vmatpush.bf16.msra.mxu0 %v3602
    %5046 = vmatpush.bf16.msra.mxu0 %v3586
    %5047 = vmatpush.bf16.msra.mxu0 %v3570
    %5048 = vmatmul.bf16.gmra.mxu0 %v1858
    %v5049 = vpop.f32.mrf.mxu0
    %v5050 = vadd.f32 %v5037, %v5049
    %v5051 = vpop.f32.mrf.mxu0
    %5052 = vdwg.mxu0
    %5053 = vmatpush.bf16.msra.mxu0 %v3810
    %5054 = vmatpush.bf16.msra.mxu0 %v3794
    %5055 = vmatpush.bf16.msra.mxu0 %v3778
    %5056 = vmatpush.bf16.msra.mxu0 %v3762
    %5057 = vmatpush.bf16.msra.mxu0 %v3746
    %5058 = vmatpush.bf16.msra.mxu0 %v3730
    %5059 = vmatpush.bf16.msra.mxu0 %v3714
    %5060 = vmatpush.bf16.msra.mxu0 %v3698
    %5061 = vmatmul.bf16.gmra.mxu0 %v1859
    %v5062 = vpop.f32.mrf.mxu0
    %v5063 = vadd.f32 %v5050, %v5062
    %v5064 = vpop.f32.mrf.mxu0
    %5065 = vdwg.mxu0
    %5066 = vmatpush.bf16.msra.mxu0 %v3938
    %5067 = vmatpush.bf16.msra.mxu0 %v3922
    %5068 = vmatpush.bf16.msra.mxu0 %v3906
    %5069 = vmatpush.bf16.msra.mxu0 %v3890
    %5070 = vmatpush.bf16.msra.mxu0 %v3874
    %5071 = vmatpush.bf16.msra.mxu0 %v3858
    %5072 = vmatpush.bf16.msra.mxu0 %v3842
    %5073 = vmatpush.bf16.msra.mxu0 %v3826
    %5074 = vmatmul.bf16.gmra.mxu0 %v1860
    %v5075 = vpop.f32.mrf.mxu0
    %v5076 = vadd.f32 %v5063, %v5075
    %v5077 = vpop.f32.mrf.mxu0
    %5078 = vdwg.mxu0
    %5079 = vmatpush.bf16.msra.mxu0 %v3555
    %5080 = vmatpush.bf16.msra.mxu0 %v3539
    %5081 = vmatpush.bf16.msra.mxu0 %v3523
    %5082 = vmatpush.bf16.msra.mxu0 %v3507
    %5083 = vmatpush.bf16.msra.mxu0 %v3491
    %5084 = vmatpush.bf16.msra.mxu0 %v3475
    %5085 = vmatpush.bf16.msra.mxu0 %v3459
    %5086 = vmatpush.bf16.msra.mxu0 %v3443
    %5087 = vmatmul.bf16.gmra.mxu0 %v1857
    %v5088 = vpop.f32.mrf.mxu0
    %v5089 = vadd.f32 %v1875, %v5088
    %v5090 = vpop.f32.mrf.mxu0
    %5091 = vdwg.mxu0
    %5092 = vmatpush.bf16.msra.mxu0 %v3683
    %5093 = vmatpush.bf16.msra.mxu0 %v3667
    %5094 = vmatpush.bf16.msra.mxu0 %v3651
    %5095 = vmatpush.bf16.msra.mxu0 %v3635
    %5096 = vmatpush.bf16.msra.mxu0 %v3619
    %5097 = vmatpush.bf16.msra.mxu0 %v3603
    %5098 = vmatpush.bf16.msra.mxu0 %v3587
    %5099 = vmatpush.bf16.msra.mxu0 %v3571
    %5100 = vmatmul.bf16.gmra.mxu0 %v1858
    %v5101 = vpop.f32.mrf.mxu0
    %v5102 = vadd.f32 %v5089, %v5101
    %v5103 = vpop.f32.mrf.mxu0
    %5104 = vdwg.mxu0
    %5105 = vmatpush.bf16.msra.mxu0 %v3811
    %5106 = vmatpush.bf16.msra.mxu0 %v3795
    %5107 = vmatpush.bf16.msra.mxu0 %v3779
    %5108 = vmatpush.bf16.msra.mxu0 %v3763
    %5109 = vmatpush.bf16.msra.mxu0 %v3747
    %5110 = vmatpush.bf16.msra.mxu0 %v3731
    %5111 = vmatpush.bf16.msra.mxu0 %v3715
    %5112 = vmatpush.bf16.msra.mxu0 %v3699
    %5113 = vmatmul.bf16.gmra.mxu0 %v1859
    %v5114 = vpop.f32.mrf.mxu0
    %v5115 = vadd.f32 %v5102, %v5114
    %v5116 = vpop.f32.mrf.mxu0
    %5117 = vdwg.mxu0
    %5118 = vmatpush.bf16.msra.mxu0 %v3939
    %5119 = vmatpush.bf16.msra.mxu0 %v3923
    %5120 = vmatpush.bf16.msra.mxu0 %v3907
    %5121 = vmatpush.bf16.msra.mxu0 %v3891
    %5122 = vmatpush.bf16.msra.mxu0 %v3875
    %5123 = vmatpush.bf16.msra.mxu0 %v3859
    %5124 = vmatpush.bf16.msra.mxu0 %v3843
    %5125 = vmatpush.bf16.msra.mxu0 %v3827
    %5126 = vmatmul.bf16.gmra.mxu0 %v1860
    %v5127 = vpop.f32.mrf.mxu0
    %v5128 = vadd.f32 %v5115, %v5127
    %v5129 = vpop.f32.mrf.mxu0
    %5130 = vdwg.mxu0
    %5131 = vmatpush.bf16.msra.mxu0 %v3556
    %5132 = vmatpush.bf16.msra.mxu0 %v3540
    %5133 = vmatpush.bf16.msra.mxu0 %v3524
    %5134 = vmatpush.bf16.msra.mxu0 %v3508
    %5135 = vmatpush.bf16.msra.mxu0 %v3492
    %5136 = vmatpush.bf16.msra.mxu0 %v3476
    %5137 = vmatpush.bf16.msra.mxu0 %v3460
    %5138 = vmatpush.bf16.msra.mxu0 %v3444
    %5139 = vmatmul.bf16.gmra.mxu0 %v1857
    %v5140 = vpop.f32.mrf.mxu0
    %v5141 = vadd.f32 %v1876, %v5140
    %v5142 = vpop.f32.mrf.mxu0
    %5143 = vdwg.mxu0
    %5144 = vmatpush.bf16.msra.mxu0 %v3684
    %5145 = vmatpush.bf16.msra.mxu0 %v3668
    %5146 = vmatpush.bf16.msra.mxu0 %v3652
    %5147 = vmatpush.bf16.msra.mxu0 %v3636
    %5148 = vmatpush.bf16.msra.mxu0 %v3620
    %5149 = vmatpush.bf16.msra.mxu0 %v3604
    %5150 = vmatpush.bf16.msra.mxu0 %v3588
    %5151 = vmatpush.bf16.msra.mxu0 %v3572
    %5152 = vmatmul.bf16.gmra.mxu0 %v1858
    %v5153 = vpop.f32.mrf.mxu0
    %v5154 = vadd.f32 %v5141, %v5153
    %v5155 = vpop.f32.mrf.mxu0
    %5156 = vdwg.mxu0
    %5157 = vmatpush.bf16.msra.mxu0 %v3812
    %5158 = vmatpush.bf16.msra.mxu0 %v3796
    %5159 = vmatpush.bf16.msra.mxu0 %v3780
    %5160 = vmatpush.bf16.msra.mxu0 %v3764
    %5161 = vmatpush.bf16.msra.mxu0 %v3748
    %5162 = vmatpush.bf16.msra.mxu0 %v3732
    %5163 = vmatpush.bf16.msra.mxu0 %v3716
    %5164 = vmatpush.bf16.msra.mxu0 %v3700
    %5165 = vmatmul.bf16.gmra.mxu0 %v1859
    %v5166 = vpop.f32.mrf.mxu0
    %v5167 = vadd.f32 %v5154, %v5166
    %v5168 = vpop.f32.mrf.mxu0
    %5169 = vdwg.mxu0
    %5170 = vmatpush.bf16.msra.mxu0 %v3940
    %5171 = vmatpush.bf16.msra.mxu0 %v3924
    %5172 = vmatpush.bf16.msra.mxu0 %v3908
    %5173 = vmatpush.bf16.msra.mxu0 %v3892
    %5174 = vmatpush.bf16.msra.mxu0 %v3876
    %5175 = vmatpush.bf16.msra.mxu0 %v3860
    %5176 = vmatpush.bf16.msra.mxu0 %v3844
    %5177 = vmatpush.bf16.msra.mxu0 %v3828
    %5178 = vmatmul.bf16.gmra.mxu0 %v1860
    %v5179 = vpop.f32.mrf.mxu0
    %v5180 = vadd.f32 %v5167, %v5179
    %v5181 = vpop.f32.mrf.mxu0
    %5182 = vdwg.mxu0
    %5183 = vmatpush.bf16.msra.mxu0 %v3557
    %5184 = vmatpush.bf16.msra.mxu0 %v3541
    %5185 = vmatpush.bf16.msra.mxu0 %v3525
    %5186 = vmatpush.bf16.msra.mxu0 %v3509
    %5187 = vmatpush.bf16.msra.mxu0 %v3493
    %5188 = vmatpush.bf16.msra.mxu0 %v3477
    %5189 = vmatpush.bf16.msra.mxu0 %v3461
    %5190 = vmatpush.bf16.msra.mxu0 %v3445
    %5191 = vmatmul.bf16.gmra.mxu0 %v1857
    %v5192 = vpop.f32.mrf.mxu0
    %v5193 = vadd.f32 %v1877, %v5192
    %v5194 = vpop.f32.mrf.mxu0
    %5195 = vdwg.mxu0
    %5196 = vmatpush.bf16.msra.mxu0 %v3685
    %5197 = vmatpush.bf16.msra.mxu0 %v3669
    %5198 = vmatpush.bf16.msra.mxu0 %v3653
    %5199 = vmatpush.bf16.msra.mxu0 %v3637
    %5200 = vmatpush.bf16.msra.mxu0 %v3621
    %5201 = vmatpush.bf16.msra.mxu0 %v3605
    %5202 = vmatpush.bf16.msra.mxu0 %v3589
    %5203 = vmatpush.bf16.msra.mxu0 %v3573
    %5204 = vmatmul.bf16.gmra.mxu0 %v1858
    %v5205 = vpop.f32.mrf.mxu0
    %v5206 = vadd.f32 %v5193, %v5205
    %v5207 = vpop.f32.mrf.mxu0
    %5208 = vdwg.mxu0
    %5209 = vmatpush.bf16.msra.mxu0 %v3813
    %5210 = vmatpush.bf16.msra.mxu0 %v3797
    %5211 = vmatpush.bf16.msra.mxu0 %v3781
    %5212 = vmatpush.bf16.msra.mxu0 %v3765
    %5213 = vmatpush.bf16.msra.mxu0 %v3749
    %5214 = vmatpush.bf16.msra.mxu0 %v3733
    %5215 = vmatpush.bf16.msra.mxu0 %v3717
    %5216 = vmatpush.bf16.msra.mxu0 %v3701
    %5217 = vmatmul.bf16.gmra.mxu0 %v1859
    %v5218 = vpop.f32.mrf.mxu0
    %v5219 = vadd.f32 %v5206, %v5218
    %v5220 = vpop.f32.mrf.mxu0
    %5221 = vdwg.mxu0
    %5222 = vmatpush.bf16.msra.mxu0 %v3941
    %5223 = vmatpush.bf16.msra.mxu0 %v3925
    %5224 = vmatpush.bf16.msra.mxu0 %v3909
    %5225 = vmatpush.bf16.msra.mxu0 %v3893
    %5226 = vmatpush.bf16.msra.mxu0 %v3877
    %5227 = vmatpush.bf16.msra.mxu0 %v3861
    %5228 = vmatpush.bf16.msra.mxu0 %v3845
    %5229 = vmatpush.bf16.msra.mxu0 %v3829
    %5230 = vmatmul.bf16.gmra.mxu0 %v1860
    %v5231 = vpop.f32.mrf.mxu0
    %v5232 = vadd.f32 %v5219, %v5231
    %v5233 = vpop.f32.mrf.mxu0
    %5234 = vdwg.mxu0
    %5235 = vmatpush.bf16.msra.mxu0 %v3558
    %5236 = vmatpush.bf16.msra.mxu0 %v3542
    %5237 = vmatpush.bf16.msra.mxu0 %v3526
    %5238 = vmatpush.bf16.msra.mxu0 %v3510
    %5239 = vmatpush.bf16.msra.mxu0 %v3494
    %5240 = vmatpush.bf16.msra.mxu0 %v3478
    %5241 = vmatpush.bf16.msra.mxu0 %v3462
    %5242 = vmatpush.bf16.msra.mxu0 %v3446
    %5243 = vmatmul.bf16.gmra.mxu0 %v1857
    %v5244 = vpop.f32.mrf.mxu0
    %v5245 = vadd.f32 %v1878, %v5244
    %v5246 = vpop.f32.mrf.mxu0
    %5247 = vdwg.mxu0
    %5248 = vmatpush.bf16.msra.mxu0 %v3686
    %5249 = vmatpush.bf16.msra.mxu0 %v3670
    %5250 = vmatpush.bf16.msra.mxu0 %v3654
    %5251 = vmatpush.bf16.msra.mxu0 %v3638
    %5252 = vmatpush.bf16.msra.mxu0 %v3622
    %5253 = vmatpush.bf16.msra.mxu0 %v3606
    %5254 = vmatpush.bf16.msra.mxu0 %v3590
    %5255 = vmatpush.bf16.msra.mxu0 %v3574
    %5256 = vmatmul.bf16.gmra.mxu0 %v1858
    %v5257 = vpop.f32.mrf.mxu0
    %v5258 = vadd.f32 %v5245, %v5257
    %v5259 = vpop.f32.mrf.mxu0
    %5260 = vdwg.mxu0
    %5261 = vmatpush.bf16.msra.mxu0 %v3814
    %5262 = vmatpush.bf16.msra.mxu0 %v3798
    %5263 = vmatpush.bf16.msra.mxu0 %v3782
    %5264 = vmatpush.bf16.msra.mxu0 %v3766
    %5265 = vmatpush.bf16.msra.mxu0 %v3750
    %5266 = vmatpush.bf16.msra.mxu0 %v3734
    %5267 = vmatpush.bf16.msra.mxu0 %v3718
    %5268 = vmatpush.bf16.msra.mxu0 %v3702
    %5269 = vmatmul.bf16.gmra.mxu0 %v1859
    %v5270 = vpop.f32.mrf.mxu0
    %v5271 = vadd.f32 %v5258, %v5270
    %v5272 = vpop.f32.mrf.mxu0
    %5273 = vdwg.mxu0
    %5274 = vmatpush.bf16.msra.mxu0 %v3942
    %5275 = vmatpush.bf16.msra.mxu0 %v3926
    %5276 = vmatpush.bf16.msra.mxu0 %v3910
    %5277 = vmatpush.bf16.msra.mxu0 %v3894
    %5278 = vmatpush.bf16.msra.mxu0 %v3878
    %5279 = vmatpush.bf16.msra.mxu0 %v3862
    %5280 = vmatpush.bf16.msra.mxu0 %v3846
    %5281 = vmatpush.bf16.msra.mxu0 %v3830
    %5282 = vmatmul.bf16.gmra.mxu0 %v1860
    %v5283 = vpop.f32.mrf.mxu0
    %v5284 = vadd.f32 %v5271, %v5283
    %v5285 = vpop.f32.mrf.mxu0
    %5286 = vdwg.mxu0
    %v5287 = vmax.f32 %v4504, 0.0
    %v5288 = vmax.f32 %v4556, 0.0
    %v5289 = vmax.f32 %v4608, 0.0
    %v5290 = vmax.f32 %v4660, 0.0
    %v5291 = vmax.f32 %v4712, 0.0
    %v5292 = vmax.f32 %v4764, 0.0
    %v5293 = vmax.f32 %v4816, 0.0
    %v5294 = vmax.f32 %v4868, 0.0
    %v5295 = vmax.f32 %v4920, 0.0
    %v5296 = vmax.f32 %v4972, 0.0
    %v5297 = vmax.f32 %v5024, 0.0
    %v5298 = vmax.f32 %v5076, 0.0
    %v5299 = vmax.f32 %v5128, 0.0
    %v5300 = vmax.f32 %v5180, 0.0
    %v5301 = vmax.f32 %v5232, 0.0
    %v5302 = vmax.f32 %v5284, 0.0
    %v5303 = vand.u32 2147483647, %v4504
    %v5304 = vand.u32 2147483647, %v4556
    %v5305 = vand.u32 2147483647, %v4608
    %v5306 = vand.u32 2147483647, %v4660
    %v5307 = vand.u32 2147483647, %v4712
    %v5308 = vand.u32 2147483647, %v4764
    %v5309 = vand.u32 2147483647, %v4816
    %v5310 = vand.u32 2147483647, %v4868
    %v5311 = vand.u32 2147483647, %v4920
    %v5312 = vand.u32 2147483647, %v4972
    %v5313 = vand.u32 2147483647, %v5024
    %v5314 = vand.u32 2147483647, %v5076
    %v5315 = vand.u32 2147483647, %v5128
    %v5316 = vand.u32 2147483647, %v5180
    %v5317 = vand.u32 2147483647, %v5232
    %v5318 = vand.u32 2147483647, %v5284
    %v5319 = vsub.f32 0.0, %v5303
    %v5320 = vsub.f32 0.0, %v5304
    %v5321 = vsub.f32 0.0, %v5305
    %v5322 = vsub.f32 0.0, %v5306
    %v5323 = vsub.f32 0.0, %v5307
    %v5324 = vsub.f32 0.0, %v5308
    %v5325 = vsub.f32 0.0, %v5309
    %v5326 = vsub.f32 0.0, %v5310
    %v5327 = vsub.f32 0.0, %v5311
    %v5328 = vsub.f32 0.0, %v5312
    %v5329 = vsub.f32 0.0, %v5313
    %v5330 = vsub.f32 0.0, %v5314
    %v5331 = vsub.f32 0.0, %v5315
    %v5332 = vsub.f32 0.0, %v5316
    %v5333 = vsub.f32 0.0, %v5317
    %v5334 = vsub.f32 0.0, %v5318
    %v5335 = vmul.f32 %v5319, 1.442695
    %v5336 = vpow.pop %v5335
    %v5337 = vmul.f32 %v5320, 1.442695
    %v5338 = vpow.pop %v5337
    %v5339 = vmul.f32 %v5321, 1.442695
    %v5340 = vpow.pop %v5339
    %v5341 = vmul.f32 %v5322, 1.442695
    %v5342 = vpow.pop %v5341
    %v5343 = vmul.f32 %v5323, 1.442695
    %v5344 = vpow.pop %v5343
    %v5345 = vmul.f32 %v5324, 1.442695
    %v5346 = vpow.pop %v5345
    %v5347 = vmul.f32 %v5325, 1.442695
    %v5348 = vpow.pop %v5347
    %v5349 = vmul.f32 %v5326, 1.442695
    %v5350 = vpow.pop %v5349
    %v5351 = vmul.f32 %v5327, 1.442695
    %v5352 = vpow.pop %v5351
    %v5353 = vmul.f32 %v5328, 1.442695
    %v5354 = vpow.pop %v5353
    %v5355 = vmul.f32 %v5329, 1.442695
    %v5356 = vpow.pop %v5355
    %v5357 = vmul.f32 %v5330, 1.442695
    %v5358 = vpow.pop %v5357
    %v5359 = vmul.f32 %v5331, 1.442695
    %v5360 = vpow.pop %v5359
    %v5361 = vmul.f32 %v5332, 1.442695
    %v5362 = vpow.pop %v5361
    %v5363 = vmul.f32 %v5333, 1.442695
    %v5364 = vpow.pop %v5363
    %v5365 = vmul.f32 %v5334, 1.442695
    %v5366 = vpow.pop %v5365
    %v5367 = vadd.f32 %v5336, 1.0
    %v5368 = vadd.f32 %v5338, 1.0
    %v5369 = vadd.f32 %v5340, 1.0
    %v5370 = vadd.f32 %v5342, 1.0
    %v5371 = vadd.f32 %v5344, 1.0
    %v5372 = vadd.f32 %v5346, 1.0
    %v5373 = vadd.f32 %v5348, 1.0
    %v5374 = vadd.f32 %v5350, 1.0
    %v5375 = vadd.f32 %v5352, 1.0
    %v5376 = vadd.f32 %v5354, 1.0
    %v5377 = vadd.f32 %v5356, 1.0
    %v5378 = vadd.f32 %v5358, 1.0
    %v5379 = vadd.f32 %v5360, 1.0
    %v5380 = vadd.f32 %v5362, 1.0
    %v5381 = vadd.f32 %v5364, 1.0
    %v5382 = vadd.f32 %v5366, 1.0
    %v5383 = vlog2.pop %v5367
    %v5384 = vmul.f32 %v5383, 0.6931472
    %v5385 = vlog2.pop %v5368
    %v5386 = vmul.f32 %v5385, 0.6931472
    %v5387 = vlog2.pop %v5369
    %v5388 = vmul.f32 %v5387, 0.6931472
    %v5389 = vlog2.pop %v5370
    %v5390 = vmul.f32 %v5389, 0.6931472
    %v5391 = vlog2.pop %v5371
    %v5392 = vmul.f32 %v5391, 0.6931472
    %v5393 = vlog2.pop %v5372
    %v5394 = vmul.f32 %v5393, 0.6931472
    %v5395 = vlog2.pop %v5373
    %v5396 = vmul.f32 %v5395, 0.6931472
    %v5397 = vlog2.pop %v5374
    %v5398 = vmul.f32 %v5397, 0.6931472
    %v5399 = vlog2.pop %v5375
    %v5400 = vmul.f32 %v5399, 0.6931472
    %v5401 = vlog2.pop %v5376
    %v5402 = vmul.f32 %v5401, 0.6931472
    %v5403 = vlog2.pop %v5377
    %v5404 = vmul.f32 %v5403, 0.6931472
    %v5405 = vlog2.pop %v5378
    %v5406 = vmul.f32 %v5405, 0.6931472
    %v5407 = vlog2.pop %v5379
    %v5408 = vmul.f32 %v5407, 0.6931472
    %v5409 = vlog2.pop %v5380
    %v5410 = vmul.f32 %v5409, 0.6931472
    %v5411 = vlog2.pop %v5381
    %v5412 = vmul.f32 %v5411, 0.6931472
    %v5413 = vlog2.pop %v5382
    %v5414 = vmul.f32 %v5413, 0.6931472
    %v5415 = vadd.f32 %v5287, %v5384
    %v5416 = vadd.f32 %v5288, %v5386
    %v5417 = vadd.f32 %v5289, %v5388
    %v5418 = vadd.f32 %v5290, %v5390
    %v5419 = vadd.f32 %v5291, %v5392
    %v5420 = vadd.f32 %v5292, %v5394
    %v5421 = vadd.f32 %v5293, %v5396
    %v5422 = vadd.f32 %v5294, %v5398
    %v5423 = vadd.f32 %v5295, %v5400
    %v5424 = vadd.f32 %v5296, %v5402
    %v5425 = vadd.f32 %v5297, %v5404
    %v5426 = vadd.f32 %v5298, %v5406
    %v5427 = vadd.f32 %v5299, %v5408
    %v5428 = vadd.f32 %v5300, %v5410
    %v5429 = vadd.f32 %v5301, %v5412
    %v5430 = vadd.f32 %v5302, %v5414
    %v5431 = vtanh.pop %v5415
    %v5432 = vtanh.pop %v5416
    %v5433 = vtanh.pop %v5417
    %v5434 = vtanh.pop %v5418
    %v5435 = vtanh.pop %v5419
    %v5436 = vtanh.pop %v5420
    %v5437 = vtanh.pop %v5421
    %v5438 = vtanh.pop %v5422
    %v5439 = vtanh.pop %v5423
    %v5440 = vtanh.pop %v5424
    %v5441 = vtanh.pop %v5425
    %v5442 = vtanh.pop %v5426
    %v5443 = vtanh.pop %v5427
    %v5444 = vtanh.pop %v5428
    %v5445 = vtanh.pop %v5429
    %v5446 = vtanh.pop %v5430
    %v5447 = vmul.f32 %v4504, %v5431
    %v5448 = vmul.f32 %v4556, %v5432
    %v5449 = vmul.f32 %v4608, %v5433
    %v5450 = vmul.f32 %v4660, %v5434
    %v5451 = vmul.f32 %v4712, %v5435
    %v5452 = vmul.f32 %v4764, %v5436
    %v5453 = vmul.f32 %v4816, %v5437
    %v5454 = vmul.f32 %v4868, %v5438
    %v5455 = vmul.f32 %v4920, %v5439
    %v5456 = vmul.f32 %v4972, %v5440
    %v5457 = vmul.f32 %v5024, %v5441
    %v5458 = vmul.f32 %v5076, %v5442
    %v5459 = vmul.f32 %v5128, %v5443
    %v5460 = vmul.f32 %v5180, %v5444
    %v5461 = vmul.f32 %v5232, %v5445
    %v5462 = vmul.f32 %v5284, %v5446
    %v5463 = vld [vmem:[%s7] sm:$0xf]
    %v5464 = vld [vmem:[%s7 + $0x4] sm:$0xf]
    %v5465 = vld [vmem:[%s7 + $0x8] sm:$0xf]
    %v5466 = vld [vmem:[%s7 + $0xc] sm:$0xf]
    %v5467 = vld [vmem:[%s7 + $0x10] sm:$0xf]
    %v5468 = vld [vmem:[%s7 + $0x14] sm:$0xf]
    %v5469 = vld [vmem:[%s7 + $0x18] sm:$0xf]
    %v5470 = vld [vmem:[%s7 + $0x1c] sm:$0xf]
    %v5471 = vld [vmem:[%s7 + $0x20] sm:$0xf]
    %v5472 = vld [vmem:[%s7 + $0x24] sm:$0xf]
    %v5473 = vld [vmem:[%s7 + $0x28] sm:$0xf]
    %v5474 = vld [vmem:[%s7 + $0x2c] sm:$0xf]
    %v5475 = vld [vmem:[%s7 + $0x30] sm:$0xf]
    %v5476 = vld [vmem:[%s7 + $0x34] sm:$0xf]
    %v5477 = vld [vmem:[%s7 + $0x38] sm:$0xf]
    %v5478 = vld [vmem:[%s7 + $0x3c] sm:$0xf]
    %v5479 = vld [vmem:[%s7 + $0x40] sm:$0xf]
    %v5480 = vld [vmem:[%s7 + $0x44] sm:$0xf]
    %v5481 = vld [vmem:[%s7 + $0x48] sm:$0xf]
    %v5482 = vld [vmem:[%s7 + $0x4c] sm:$0xf]
    %v5483 = vld [vmem:[%s7 + $0x50] sm:$0xf]
    %v5484 = vld [vmem:[%s7 + $0x54] sm:$0xf]
    %v5485 = vld [vmem:[%s7 + $0x58] sm:$0xf]
    %v5486 = vld [vmem:[%s7 + $0x5c] sm:$0xf]
    %v5487 = vld [vmem:[%s7 + $0x60] sm:$0xf]
    %v5488 = vld [vmem:[%s7 + $0x64] sm:$0xf]
    %v5489 = vld [vmem:[%s7 + $0x68] sm:$0xf]
    %v5490 = vld [vmem:[%s7 + $0x6c] sm:$0xf]
    %v5491 = vld [vmem:[%s7 + $0x70] sm:$0xf]
    %v5492 = vld [vmem:[%s7 + $0x74] sm:$0xf]
    %v5493 = vld [vmem:[%s7 + $0x78] sm:$0xf]
    %v5494 = vld [vmem:[%s7 + $0x7c] sm:$0xf]
    %v5495 = vld [vmem:[%s7 + $0x80] sm:$0xf]
    %v5496 = vld [vmem:[%s7 + $0x84] sm:$0xf]
    %v5497 = vld [vmem:[%s7 + $0x88] sm:$0xf]
    %v5498 = vld [vmem:[%s7 + $0x8c] sm:$0xf]
    %v5499 = vld [vmem:[%s7 + $0x90] sm:$0xf]
    %v5500 = vld [vmem:[%s7 + $0x94] sm:$0xf]
    %v5501 = vld [vmem:[%s7 + $0x98] sm:$0xf]
    %v5502 = vld [vmem:[%s7 + $0x9c] sm:$0xf]
    %v5503 = vld [vmem:[%s7 + $0xa0] sm:$0xf]
    %v5504 = vld [vmem:[%s7 + $0xa4] sm:$0xf]
    %v5505 = vld [vmem:[%s7 + $0xa8] sm:$0xf]
    %v5506 = vld [vmem:[%s7 + $0xac] sm:$0xf]
    %v5507 = vld [vmem:[%s7 + $0xb0] sm:$0xf]
    %v5508 = vld [vmem:[%s7 + $0xb4] sm:$0xf]
    %v5509 = vld [vmem:[%s7 + $0xb8] sm:$0xf]
    %v5510 = vld [vmem:[%s7 + $0xbc] sm:$0xf]
    %v5511 = vld [vmem:[%s7 + $0xc0] sm:$0xf]
    %v5512 = vld [vmem:[%s7 + $0xc4] sm:$0xf]
    %v5513 = vld [vmem:[%s7 + $0xc8] sm:$0xf]
    %v5514 = vld [vmem:[%s7 + $0xcc] sm:$0xf]
    %v5515 = vld [vmem:[%s7 + $0xd0] sm:$0xf]
    %v5516 = vld [vmem:[%s7 + $0xd4] sm:$0xf]
    %v5517 = vld [vmem:[%s7 + $0xd8] sm:$0xf]
    %v5518 = vld [vmem:[%s7 + $0xdc] sm:$0xf]
    %v5519 = vld [vmem:[%s7 + $0xe0] sm:$0xf]
    %v5520 = vld [vmem:[%s7 + $0xe4] sm:$0xf]
    %v5521 = vld [vmem:[%s7 + $0xe8] sm:$0xf]
    %v5522 = vld [vmem:[%s7 + $0xec] sm:$0xf]
    %v5523 = vld [vmem:[%s7 + $0xf0] sm:$0xf]
    %v5524 = vld [vmem:[%s7 + $0xf4] sm:$0xf]
    %v5525 = vld [vmem:[%s7 + $0xf8] sm:$0xf]
    %v5526 = vld [vmem:[%s7 + $0xfc] sm:$0xf]
    %v5527 = vld [vmem:[%s7 + $0x100] sm:$0xf]
    %v5528 = vld [vmem:[%s7 + $0x104] sm:$0xf]
    %v5529 = vld [vmem:[%s7 + $0x108] sm:$0xf]
    %v5530 = vld [vmem:[%s7 + $0x10c] sm:$0xf]
    %v5531 = vld [vmem:[%s7 + $0x110] sm:$0xf]
    %v5532 = vld [vmem:[%s7 + $0x114] sm:$0xf]
    %v5533 = vld [vmem:[%s7 + $0x118] sm:$0xf]
    %v5534 = vld [vmem:[%s7 + $0x11c] sm:$0xf]
    %v5535 = vld [vmem:[%s7 + $0x120] sm:$0xf]
    %v5536 = vld [vmem:[%s7 + $0x124] sm:$0xf]
    %v5537 = vld [vmem:[%s7 + $0x128] sm:$0xf]
    %v5538 = vld [vmem:[%s7 + $0x12c] sm:$0xf]
    %v5539 = vld [vmem:[%s7 + $0x130] sm:$0xf]
    %v5540 = vld [vmem:[%s7 + $0x134] sm:$0xf]
    %v5541 = vld [vmem:[%s7 + $0x138] sm:$0xf]
    %v5542 = vld [vmem:[%s7 + $0x13c] sm:$0xf]
    %v5543 = vld [vmem:[%s7 + $0x140] sm:$0xf]
    %v5544 = vld [vmem:[%s7 + $0x144] sm:$0xf]
    %v5545 = vld [vmem:[%s7 + $0x148] sm:$0xf]
    %v5546 = vld [vmem:[%s7 + $0x14c] sm:$0xf]
    %v5547 = vld [vmem:[%s7 + $0x150] sm:$0xf]
    %v5548 = vld [vmem:[%s7 + $0x154] sm:$0xf]
    %v5549 = vld [vmem:[%s7 + $0x158] sm:$0xf]
    %v5550 = vld [vmem:[%s7 + $0x15c] sm:$0xf]
    %v5551 = vld [vmem:[%s7 + $0x160] sm:$0xf]
    %v5552 = vld [vmem:[%s7 + $0x164] sm:$0xf]
    %v5553 = vld [vmem:[%s7 + $0x168] sm:$0xf]
    %v5554 = vld [vmem:[%s7 + $0x16c] sm:$0xf]
    %v5555 = vld [vmem:[%s7 + $0x170] sm:$0xf]
    %v5556 = vld [vmem:[%s7 + $0x174] sm:$0xf]
    %v5557 = vld [vmem:[%s7 + $0x178] sm:$0xf]
    %v5558 = vld [vmem:[%s7 + $0x17c] sm:$0xf]
    %v5559 = vld [vmem:[%s7 + $0x180] sm:$0xf]
    %v5560 = vld [vmem:[%s7 + $0x184] sm:$0xf]
    %v5561 = vld [vmem:[%s7 + $0x188] sm:$0xf]
    %v5562 = vld [vmem:[%s7 + $0x18c] sm:$0xf]
    %v5563 = vld [vmem:[%s7 + $0x190] sm:$0xf]
    %v5564 = vld [vmem:[%s7 + $0x194] sm:$0xf]
    %v5565 = vld [vmem:[%s7 + $0x198] sm:$0xf]
    %v5566 = vld [vmem:[%s7 + $0x19c] sm:$0xf]
    %v5567 = vld [vmem:[%s7 + $0x1a0] sm:$0xf]
    %v5568 = vld [vmem:[%s7 + $0x1a4] sm:$0xf]
    %v5569 = vld [vmem:[%s7 + $0x1a8] sm:$0xf]
    %v5570 = vld [vmem:[%s7 + $0x1ac] sm:$0xf]
    %v5571 = vld [vmem:[%s7 + $0x1b0] sm:$0xf]
    %v5572 = vld [vmem:[%s7 + $0x1b4] sm:$0xf]
    %v5573 = vld [vmem:[%s7 + $0x1b8] sm:$0xf]
    %v5574 = vld [vmem:[%s7 + $0x1bc] sm:$0xf]
    %v5575 = vld [vmem:[%s7 + $0x1c0] sm:$0xf]
    %v5576 = vld [vmem:[%s7 + $0x1c4] sm:$0xf]
    %v5577 = vld [vmem:[%s7 + $0x1c8] sm:$0xf]
    %v5578 = vld [vmem:[%s7 + $0x1cc] sm:$0xf]
    %v5579 = vld [vmem:[%s7 + $0x1d0] sm:$0xf]
    %v5580 = vld [vmem:[%s7 + $0x1d4] sm:$0xf]
    %v5581 = vld [vmem:[%s7 + $0x1d8] sm:$0xf]
    %v5582 = vld [vmem:[%s7 + $0x1dc] sm:$0xf]
    %v5583 = vld [vmem:[%s7 + $0x1e0] sm:$0xf]
    %v5584 = vld [vmem:[%s7 + $0x1e4] sm:$0xf]
    %v5585 = vld [vmem:[%s7 + $0x1e8] sm:$0xf]
    %v5586 = vld [vmem:[%s7 + $0x1ec] sm:$0xf]
    %v5587 = vld [vmem:[%s7 + $0x1f0] sm:$0xf]
    %v5588 = vld [vmem:[%s7 + $0x1f4] sm:$0xf]
    %v5589 = vld [vmem:[%s7 + $0x1f8] sm:$0xf]
    %v5590 = vld [vmem:[%s7 + $0x1fc] sm:$0xf]
    %v5591 = vld [vmem:[%s7 + $0x200] sm:$0xf]
    %v5592 = vld [vmem:[%s7 + $0x204] sm:$0xf]
    %v5593 = vld [vmem:[%s7 + $0x208] sm:$0xf]
    %v5594 = vld [vmem:[%s7 + $0x20c] sm:$0xf]
    %v5595 = vld [vmem:[%s7 + $0x210] sm:$0xf]
    %v5596 = vld [vmem:[%s7 + $0x214] sm:$0xf]
    %v5597 = vld [vmem:[%s7 + $0x218] sm:$0xf]
    %v5598 = vld [vmem:[%s7 + $0x21c] sm:$0xf]
    %v5599 = vld [vmem:[%s7 + $0x220] sm:$0xf]
    %v5600 = vld [vmem:[%s7 + $0x224] sm:$0xf]
    %v5601 = vld [vmem:[%s7 + $0x228] sm:$0xf]
    %v5602 = vld [vmem:[%s7 + $0x22c] sm:$0xf]
    %v5603 = vld [vmem:[%s7 + $0x230] sm:$0xf]
    %v5604 = vld [vmem:[%s7 + $0x234] sm:$0xf]
    %v5605 = vld [vmem:[%s7 + $0x238] sm:$0xf]
    %v5606 = vld [vmem:[%s7 + $0x23c] sm:$0xf]
    %v5607 = vld [vmem:[%s7 + $0x240] sm:$0xf]
    %v5608 = vld [vmem:[%s7 + $0x244] sm:$0xf]
    %v5609 = vld [vmem:[%s7 + $0x248] sm:$0xf]
    %v5610 = vld [vmem:[%s7 + $0x24c] sm:$0xf]
    %v5611 = vld [vmem:[%s7 + $0x250] sm:$0xf]
    %v5612 = vld [vmem:[%s7 + $0x254] sm:$0xf]
    %v5613 = vld [vmem:[%s7 + $0x258] sm:$0xf]
    %v5614 = vld [vmem:[%s7 + $0x25c] sm:$0xf]
    %v5615 = vld [vmem:[%s7 + $0x260] sm:$0xf]
    %v5616 = vld [vmem:[%s7 + $0x264] sm:$0xf]
    %v5617 = vld [vmem:[%s7 + $0x268] sm:$0xf]
    %v5618 = vld [vmem:[%s7 + $0x26c] sm:$0xf]
    %v5619 = vld [vmem:[%s7 + $0x270] sm:$0xf]
    %v5620 = vld [vmem:[%s7 + $0x274] sm:$0xf]
    %v5621 = vld [vmem:[%s7 + $0x278] sm:$0xf]
    %v5622 = vld [vmem:[%s7 + $0x27c] sm:$0xf]
    %v5623 = vld [vmem:[%s7 + $0x280] sm:$0xf]
    %v5624 = vld [vmem:[%s7 + $0x284] sm:$0xf]
    %v5625 = vld [vmem:[%s7 + $0x288] sm:$0xf]
    %v5626 = vld [vmem:[%s7 + $0x28c] sm:$0xf]
    %v5627 = vld [vmem:[%s7 + $0x290] sm:$0xf]
    %v5628 = vld [vmem:[%s7 + $0x294] sm:$0xf]
    %v5629 = vld [vmem:[%s7 + $0x298] sm:$0xf]
    %v5630 = vld [vmem:[%s7 + $0x29c] sm:$0xf]
    %v5631 = vld [vmem:[%s7 + $0x2a0] sm:$0xf]
    %v5632 = vld [vmem:[%s7 + $0x2a4] sm:$0xf]
    %v5633 = vld [vmem:[%s7 + $0x2a8] sm:$0xf]
    %v5634 = vld [vmem:[%s7 + $0x2ac] sm:$0xf]
    %v5635 = vld [vmem:[%s7 + $0x2b0] sm:$0xf]
    %v5636 = vld [vmem:[%s7 + $0x2b4] sm:$0xf]
    %v5637 = vld [vmem:[%s7 + $0x2b8] sm:$0xf]
    %v5638 = vld [vmem:[%s7 + $0x2bc] sm:$0xf]
    %v5639 = vld [vmem:[%s7 + $0x2c0] sm:$0xf]
    %v5640 = vld [vmem:[%s7 + $0x2c4] sm:$0xf]
    %v5641 = vld [vmem:[%s7 + $0x2c8] sm:$0xf]
    %v5642 = vld [vmem:[%s7 + $0x2cc] sm:$0xf]
    %v5643 = vld [vmem:[%s7 + $0x2d0] sm:$0xf]
    %v5644 = vld [vmem:[%s7 + $0x2d4] sm:$0xf]
    %v5645 = vld [vmem:[%s7 + $0x2d8] sm:$0xf]
    %v5646 = vld [vmem:[%s7 + $0x2dc] sm:$0xf]
    %v5647 = vld [vmem:[%s7 + $0x2e0] sm:$0xf]
    %v5648 = vld [vmem:[%s7 + $0x2e4] sm:$0xf]
    %v5649 = vld [vmem:[%s7 + $0x2e8] sm:$0xf]
    %v5650 = vld [vmem:[%s7 + $0x2ec] sm:$0xf]
    %v5651 = vld [vmem:[%s7 + $0x2f0] sm:$0xf]
    %v5652 = vld [vmem:[%s7 + $0x2f4] sm:$0xf]
    %v5653 = vld [vmem:[%s7 + $0x2f8] sm:$0xf]
    %v5654 = vld [vmem:[%s7 + $0x2fc] sm:$0xf]
    %v5655 = vld [vmem:[%s7 + $0x300] sm:$0xf]
    %v5656 = vld [vmem:[%s7 + $0x304] sm:$0xf]
    %v5657 = vld [vmem:[%s7 + $0x308] sm:$0xf]
    %v5658 = vld [vmem:[%s7 + $0x30c] sm:$0xf]
    %v5659 = vld [vmem:[%s7 + $0x310] sm:$0xf]
    %v5660 = vld [vmem:[%s7 + $0x314] sm:$0xf]
    %v5661 = vld [vmem:[%s7 + $0x318] sm:$0xf]
    %v5662 = vld [vmem:[%s7 + $0x31c] sm:$0xf]
    %v5663 = vld [vmem:[%s7 + $0x320] sm:$0xf]
    %v5664 = vld [vmem:[%s7 + $0x324] sm:$0xf]
    %v5665 = vld [vmem:[%s7 + $0x328] sm:$0xf]
    %v5666 = vld [vmem:[%s7 + $0x32c] sm:$0xf]
    %v5667 = vld [vmem:[%s7 + $0x330] sm:$0xf]
    %v5668 = vld [vmem:[%s7 + $0x334] sm:$0xf]
    %v5669 = vld [vmem:[%s7 + $0x338] sm:$0xf]
    %v5670 = vld [vmem:[%s7 + $0x33c] sm:$0xf]
    %v5671 = vld [vmem:[%s7 + $0x340] sm:$0xf]
    %v5672 = vld [vmem:[%s7 + $0x344] sm:$0xf]
    %v5673 = vld [vmem:[%s7 + $0x348] sm:$0xf]
    %v5674 = vld [vmem:[%s7 + $0x34c] sm:$0xf]
    %v5675 = vld [vmem:[%s7 + $0x350] sm:$0xf]
    %v5676 = vld [vmem:[%s7 + $0x354] sm:$0xf]
    %v5677 = vld [vmem:[%s7 + $0x358] sm:$0xf]
    %v5678 = vld [vmem:[%s7 + $0x35c] sm:$0xf]
    %v5679 = vld [vmem:[%s7 + $0x360] sm:$0xf]
    %v5680 = vld [vmem:[%s7 + $0x364] sm:$0xf]
    %v5681 = vld [vmem:[%s7 + $0x368] sm:$0xf]
    %v5682 = vld [vmem:[%s7 + $0x36c] sm:$0xf]
    %v5683 = vld [vmem:[%s7 + $0x370] sm:$0xf]
    %v5684 = vld [vmem:[%s7 + $0x374] sm:$0xf]
    %v5685 = vld [vmem:[%s7 + $0x378] sm:$0xf]
    %v5686 = vld [vmem:[%s7 + $0x37c] sm:$0xf]
    %v5687 = vld [vmem:[%s7 + $0x380] sm:$0xf]
    %v5688 = vld [vmem:[%s7 + $0x384] sm:$0xf]
    %v5689 = vld [vmem:[%s7 + $0x388] sm:$0xf]
    %v5690 = vld [vmem:[%s7 + $0x38c] sm:$0xf]
    %v5691 = vld [vmem:[%s7 + $0x390] sm:$0xf]
    %v5692 = vld [vmem:[%s7 + $0x394] sm:$0xf]
    %v5693 = vld [vmem:[%s7 + $0x398] sm:$0xf]
    %v5694 = vld [vmem:[%s7 + $0x39c] sm:$0xf]
    %v5695 = vld [vmem:[%s7 + $0x3a0] sm:$0xf]
    %v5696 = vld [vmem:[%s7 + $0x3a4] sm:$0xf]
    %v5697 = vld [vmem:[%s7 + $0x3a8] sm:$0xf]
    %v5698 = vld [vmem:[%s7 + $0x3ac] sm:$0xf]
    %v5699 = vld [vmem:[%s7 + $0x3b0] sm:$0xf]
    %v5700 = vld [vmem:[%s7 + $0x3b4] sm:$0xf]
    %v5701 = vld [vmem:[%s7 + $0x3b8] sm:$0xf]
    %v5702 = vld [vmem:[%s7 + $0x3bc] sm:$0xf]
    %v5703 = vld [vmem:[%s7 + $0x3c0] sm:$0xf]
    %v5704 = vld [vmem:[%s7 + $0x3c4] sm:$0xf]
    %v5705 = vld [vmem:[%s7 + $0x3c8] sm:$0xf]
    %v5706 = vld [vmem:[%s7 + $0x3cc] sm:$0xf]
    %v5707 = vld [vmem:[%s7 + $0x3d0] sm:$0xf]
    %v5708 = vld [vmem:[%s7 + $0x3d4] sm:$0xf]
    %v5709 = vld [vmem:[%s7 + $0x3d8] sm:$0xf]
    %v5710 = vld [vmem:[%s7 + $0x3dc] sm:$0xf]
    %v5711 = vld [vmem:[%s7 + $0x3e0] sm:$0xf]
    %v5712 = vld [vmem:[%s7 + $0x3e4] sm:$0xf]
    %v5713 = vld [vmem:[%s7 + $0x3e8] sm:$0xf]
    %v5714 = vld [vmem:[%s7 + $0x3ec] sm:$0xf]
    %v5715 = vld [vmem:[%s7 + $0x3f0] sm:$0xf]
    %v5716 = vld [vmem:[%s7 + $0x3f4] sm:$0xf]
    %v5717 = vld [vmem:[%s7 + $0x3f8] sm:$0xf]
    %v5718 = vld [vmem:[%s7 + $0x3fc] sm:$0xf]
    %v5719 = vld [vmem:[#allocation14] sm:$0x1]
    %v5720 = vpack.c.bf16 %v5447, %v5447
    %v5721 = vpack.c.bf16 %v5448, %v5448
    %v5722 = vpack.c.bf16 %v5449, %v5449
    %v5723 = vpack.c.bf16 %v5450, %v5450
    %v5724 = vpack.c.bf16 %v5451, %v5451
    %v5725 = vpack.c.bf16 %v5452, %v5452
    %v5726 = vpack.c.bf16 %v5453, %v5453
    %v5727 = vpack.c.bf16 %v5454, %v5454
    %v5728 = vpack.c.bf16 %v5455, %v5455
    %v5729 = vpack.c.bf16 %v5456, %v5456
    %v5730 = vpack.c.bf16 %v5457, %v5457
    %v5731 = vpack.c.bf16 %v5458, %v5458
    %v5732 = vpack.c.bf16 %v5459, %v5459
    %v5733 = vpack.c.bf16 %v5460, %v5460
    %v5734 = vpack.c.bf16 %v5461, %v5461
    %v5735 = vpack.c.bf16 %v5462, %v5462
    %v5737 = vperm.slane %v5719, 0
    %v5995 = vunpack.c.l.b16 %v5463
    %v5996 = vunpack.c.l.b16 %v5464
    %v5997 = vunpack.c.l.b16 %v5465
    %v5998 = vunpack.c.l.b16 %v5466
    %v5999 = vunpack.c.l.b16 %v5467
    %v6000 = vunpack.c.l.b16 %v5468
    %v6001 = vunpack.c.l.b16 %v5469
    %v6002 = vunpack.c.l.b16 %v5470
    %v6003 = vunpack.c.l.b16 %v5471
    %v6004 = vunpack.c.l.b16 %v5472
    %v6005 = vunpack.c.l.b16 %v5473
    %v6006 = vunpack.c.l.b16 %v5474
    %v6007 = vunpack.c.l.b16 %v5475
    %v6008 = vunpack.c.l.b16 %v5476
    %v6009 = vunpack.c.l.b16 %v5477
    %v6010 = vunpack.c.l.b16 %v5478
    %v6011 = vunpack.c.l.b16 %v5479
    %v6012 = vunpack.c.l.b16 %v5480
    %v6013 = vunpack.c.l.b16 %v5481
    %v6014 = vunpack.c.l.b16 %v5482
    %v6015 = vunpack.c.l.b16 %v5483
    %v6016 = vunpack.c.l.b16 %v5484
    %v6017 = vunpack.c.l.b16 %v5485
    %v6018 = vunpack.c.l.b16 %v5486
    %v6019 = vunpack.c.l.b16 %v5487
    %v6020 = vunpack.c.l.b16 %v5488
    %v6021 = vunpack.c.l.b16 %v5489
    %v6022 = vunpack.c.l.b16 %v5490
    %v6023 = vunpack.c.l.b16 %v5491
    %v6024 = vunpack.c.l.b16 %v5492
    %v6025 = vunpack.c.l.b16 %v5493
    %v6026 = vunpack.c.l.b16 %v5494
    %v6027 = vunpack.c.l.b16 %v5495
    %v6028 = vunpack.c.l.b16 %v5496
    %v6029 = vunpack.c.l.b16 %v5497
    %v6030 = vunpack.c.l.b16 %v5498
    %v6031 = vunpack.c.l.b16 %v5499
    %v6032 = vunpack.c.l.b16 %v5500
    %v6033 = vunpack.c.l.b16 %v5501
    %v6034 = vunpack.c.l.b16 %v5502
    %v6035 = vunpack.c.l.b16 %v5503
    %v6036 = vunpack.c.l.b16 %v5504
    %v6037 = vunpack.c.l.b16 %v5505
    %v6038 = vunpack.c.l.b16 %v5506
    %v6039 = vunpack.c.l.b16 %v5507
    %v6040 = vunpack.c.l.b16 %v5508
    %v6041 = vunpack.c.l.b16 %v5509
    %v6042 = vunpack.c.l.b16 %v5510
    %v6043 = vunpack.c.l.b16 %v5511
    %v6044 = vunpack.c.l.b16 %v5512
    %v6045 = vunpack.c.l.b16 %v5513
    %v6046 = vunpack.c.l.b16 %v5514
    %v6047 = vunpack.c.l.b16 %v5515
    %v6048 = vunpack.c.l.b16 %v5516
    %v6049 = vunpack.c.l.b16 %v5517
    %v6050 = vunpack.c.l.b16 %v5518
    %v6051 = vunpack.c.l.b16 %v5519
    %v6052 = vunpack.c.l.b16 %v5520
    %v6053 = vunpack.c.l.b16 %v5521
    %v6054 = vunpack.c.l.b16 %v5522
    %v6055 = vunpack.c.l.b16 %v5523
    %v6056 = vunpack.c.l.b16 %v5524
    %v6057 = vunpack.c.l.b16 %v5525
    %v6058 = vunpack.c.l.b16 %v5526
    %v6059 = vunpack.c.l.b16 %v5527
    %v6060 = vunpack.c.l.b16 %v5528
    %v6061 = vunpack.c.l.b16 %v5529
    %v6062 = vunpack.c.l.b16 %v5530
    %v6063 = vunpack.c.l.b16 %v5531
    %v6064 = vunpack.c.l.b16 %v5532
    %v6065 = vunpack.c.l.b16 %v5533
    %v6066 = vunpack.c.l.b16 %v5534
    %v6067 = vunpack.c.l.b16 %v5535
    %v6068 = vunpack.c.l.b16 %v5536
    %v6069 = vunpack.c.l.b16 %v5537
    %v6070 = vunpack.c.l.b16 %v5538
    %v6071 = vunpack.c.l.b16 %v5539
    %v6072 = vunpack.c.l.b16 %v5540
    %v6073 = vunpack.c.l.b16 %v5541
    %v6074 = vunpack.c.l.b16 %v5542
    %v6075 = vunpack.c.l.b16 %v5543
    %v6076 = vunpack.c.l.b16 %v5544
    %v6077 = vunpack.c.l.b16 %v5545
    %v6078 = vunpack.c.l.b16 %v5546
    %v6079 = vunpack.c.l.b16 %v5547
    %v6080 = vunpack.c.l.b16 %v5548
    %v6081 = vunpack.c.l.b16 %v5549
    %v6082 = vunpack.c.l.b16 %v5550
    %v6083 = vunpack.c.l.b16 %v5551
    %v6084 = vunpack.c.l.b16 %v5552
    %v6085 = vunpack.c.l.b16 %v5553
    %v6086 = vunpack.c.l.b16 %v5554
    %v6087 = vunpack.c.l.b16 %v5555
    %v6088 = vunpack.c.l.b16 %v5556
    %v6089 = vunpack.c.l.b16 %v5557
    %v6090 = vunpack.c.l.b16 %v5558
    %v6091 = vunpack.c.l.b16 %v5559
    %v6092 = vunpack.c.l.b16 %v5560
    %v6093 = vunpack.c.l.b16 %v5561
    %v6094 = vunpack.c.l.b16 %v5562
    %v6095 = vunpack.c.l.b16 %v5563
    %v6096 = vunpack.c.l.b16 %v5564
    %v6097 = vunpack.c.l.b16 %v5565
    %v6098 = vunpack.c.l.b16 %v5566
    %v6099 = vunpack.c.l.b16 %v5567
    %v6100 = vunpack.c.l.b16 %v5568
    %v6101 = vunpack.c.l.b16 %v5569
    %v6102 = vunpack.c.l.b16 %v5570
    %v6103 = vunpack.c.l.b16 %v5571
    %v6104 = vunpack.c.l.b16 %v5572
    %v6105 = vunpack.c.l.b16 %v5573
    %v6106 = vunpack.c.l.b16 %v5574
    %v6107 = vunpack.c.l.b16 %v5575
    %v6108 = vunpack.c.l.b16 %v5576
    %v6109 = vunpack.c.l.b16 %v5577
    %v6110 = vunpack.c.l.b16 %v5578
    %v6111 = vunpack.c.l.b16 %v5579
    %v6112 = vunpack.c.l.b16 %v5580
    %v6113 = vunpack.c.l.b16 %v5581
    %v6114 = vunpack.c.l.b16 %v5582
    %v6115 = vunpack.c.l.b16 %v5583
    %v6116 = vunpack.c.l.b16 %v5584
    %v6117 = vunpack.c.l.b16 %v5585
    %v6118 = vunpack.c.l.b16 %v5586
    %v6119 = vunpack.c.l.b16 %v5587
    %v6120 = vunpack.c.l.b16 %v5588
    %v6121 = vunpack.c.l.b16 %v5589
    %v6122 = vunpack.c.l.b16 %v5590
    %v6123 = vunpack.c.l.b16 %v5591
    %v6124 = vunpack.c.l.b16 %v5592
    %v6125 = vunpack.c.l.b16 %v5593
    %v6126 = vunpack.c.l.b16 %v5594
    %v6127 = vunpack.c.l.b16 %v5595
    %v6128 = vunpack.c.l.b16 %v5596
    %v6129 = vunpack.c.l.b16 %v5597
    %v6130 = vunpack.c.l.b16 %v5598
    %v6131 = vunpack.c.l.b16 %v5599
    %v6132 = vunpack.c.l.b16 %v5600
    %v6133 = vunpack.c.l.b16 %v5601
    %v6134 = vunpack.c.l.b16 %v5602
    %v6135 = vunpack.c.l.b16 %v5603
    %v6136 = vunpack.c.l.b16 %v5604
    %v6137 = vunpack.c.l.b16 %v5605
    %v6138 = vunpack.c.l.b16 %v5606
    %v6139 = vunpack.c.l.b16 %v5607
    %v6140 = vunpack.c.l.b16 %v5608
    %v6141 = vunpack.c.l.b16 %v5609
    %v6142 = vunpack.c.l.b16 %v5610
    %v6143 = vunpack.c.l.b16 %v5611
    %v6144 = vunpack.c.l.b16 %v5612
    %v6145 = vunpack.c.l.b16 %v5613
    %v6146 = vunpack.c.l.b16 %v5614
    %v6147 = vunpack.c.l.b16 %v5615
    %v6148 = vunpack.c.l.b16 %v5616
    %v6149 = vunpack.c.l.b16 %v5617
    %v6150 = vunpack.c.l.b16 %v5618
    %v6151 = vunpack.c.l.b16 %v5619
    %v6152 = vunpack.c.l.b16 %v5620
    %v6153 = vunpack.c.l.b16 %v5621
    %v6154 = vunpack.c.l.b16 %v5622
    %v6155 = vunpack.c.l.b16 %v5623
    %v6156 = vunpack.c.l.b16 %v5624
    %v6157 = vunpack.c.l.b16 %v5625
    %v6158 = vunpack.c.l.b16 %v5626
    %v6159 = vunpack.c.l.b16 %v5627
    %v6160 = vunpack.c.l.b16 %v5628
    %v6161 = vunpack.c.l.b16 %v5629
    %v6162 = vunpack.c.l.b16 %v5630
    %v6163 = vunpack.c.l.b16 %v5631
    %v6164 = vunpack.c.l.b16 %v5632
    %v6165 = vunpack.c.l.b16 %v5633
    %v6166 = vunpack.c.l.b16 %v5634
    %v6167 = vunpack.c.l.b16 %v5635
    %v6168 = vunpack.c.l.b16 %v5636
    %v6169 = vunpack.c.l.b16 %v5637
    %v6170 = vunpack.c.l.b16 %v5638
    %v6171 = vunpack.c.l.b16 %v5639
    %v6172 = vunpack.c.l.b16 %v5640
    %v6173 = vunpack.c.l.b16 %v5641
    %v6174 = vunpack.c.l.b16 %v5642
    %v6175 = vunpack.c.l.b16 %v5643
    %v6176 = vunpack.c.l.b16 %v5644
    %v6177 = vunpack.c.l.b16 %v5645
    %v6178 = vunpack.c.l.b16 %v5646
    %v6179 = vunpack.c.l.b16 %v5647
    %v6180 = vunpack.c.l.b16 %v5648
    %v6181 = vunpack.c.l.b16 %v5649
    %v6182 = vunpack.c.l.b16 %v5650
    %v6183 = vunpack.c.l.b16 %v5651
    %v6184 = vunpack.c.l.b16 %v5652
    %v6185 = vunpack.c.l.b16 %v5653
    %v6186 = vunpack.c.l.b16 %v5654
    %v6187 = vunpack.c.l.b16 %v5655
    %v6188 = vunpack.c.l.b16 %v5656
    %v6189 = vunpack.c.l.b16 %v5657
    %v6190 = vunpack.c.l.b16 %v5658
    %v6191 = vunpack.c.l.b16 %v5659
    %v6192 = vunpack.c.l.b16 %v5660
    %v6193 = vunpack.c.l.b16 %v5661
    %v6194 = vunpack.c.l.b16 %v5662
    %v6195 = vunpack.c.l.b16 %v5663
    %v6196 = vunpack.c.l.b16 %v5664
    %v6197 = vunpack.c.l.b16 %v5665
    %v6198 = vunpack.c.l.b16 %v5666
    %v6199 = vunpack.c.l.b16 %v5667
    %v6200 = vunpack.c.l.b16 %v5668
    %v6201 = vunpack.c.l.b16 %v5669
    %v6202 = vunpack.c.l.b16 %v5670
    %v6203 = vunpack.c.l.b16 %v5671
    %v6204 = vunpack.c.l.b16 %v5672
    %v6205 = vunpack.c.l.b16 %v5673
    %v6206 = vunpack.c.l.b16 %v5674
    %v6207 = vunpack.c.l.b16 %v5675
    %v6208 = vunpack.c.l.b16 %v5676
    %v6209 = vunpack.c.l.b16 %v5677
    %v6210 = vunpack.c.l.b16 %v5678
    %v6211 = vunpack.c.l.b16 %v5679
    %v6212 = vunpack.c.l.b16 %v5680
    %v6213 = vunpack.c.l.b16 %v5681
    %v6214 = vunpack.c.l.b16 %v5682
    %v6215 = vunpack.c.l.b16 %v5683
    %v6216 = vunpack.c.l.b16 %v5684
    %v6217 = vunpack.c.l.b16 %v5685
    %v6218 = vunpack.c.l.b16 %v5686
    %v6219 = vunpack.c.l.b16 %v5687
    %v6220 = vunpack.c.l.b16 %v5688
    %v6221 = vunpack.c.l.b16 %v5689
    %v6222 = vunpack.c.l.b16 %v5690
    %v6223 = vunpack.c.l.b16 %v5691
    %v6224 = vunpack.c.l.b16 %v5692
    %v6225 = vunpack.c.l.b16 %v5693
    %v6226 = vunpack.c.l.b16 %v5694
    %v6227 = vunpack.c.l.b16 %v5695
    %v6228 = vunpack.c.l.b16 %v5696
    %v6229 = vunpack.c.l.b16 %v5697
    %v6230 = vunpack.c.l.b16 %v5698
    %v6231 = vunpack.c.l.b16 %v5699
    %v6232 = vunpack.c.l.b16 %v5700
    %v6233 = vunpack.c.l.b16 %v5701
    %v6234 = vunpack.c.l.b16 %v5702
    %v6235 = vunpack.c.l.b16 %v5703
    %v6236 = vunpack.c.l.b16 %v5704
    %v6237 = vunpack.c.l.b16 %v5705
    %v6238 = vunpack.c.l.b16 %v5706
    %v6239 = vunpack.c.l.b16 %v5707
    %v6240 = vunpack.c.l.b16 %v5708
    %v6241 = vunpack.c.l.b16 %v5709
    %v6242 = vunpack.c.l.b16 %v5710
    %v6243 = vunpack.c.l.b16 %v5711
    %v6244 = vunpack.c.l.b16 %v5712
    %v6245 = vunpack.c.l.b16 %v5713
    %v6246 = vunpack.c.l.b16 %v5714
    %v6247 = vunpack.c.l.b16 %v5715
    %v6248 = vunpack.c.l.b16 %v5716
    %v6249 = vunpack.c.l.b16 %v5717
    %v6250 = vunpack.c.l.b16 %v5718
    %v6251 = vpack.c.b16 %v5996, %v5995
    %v6252 = vpack.c.b16 %v5998, %v5997
    %v6253 = vpack.c.b16 %v6000, %v5999
    %v6254 = vpack.c.b16 %v6002, %v6001
    %v6255 = vpack.c.b16 %v6004, %v6003
    %v6256 = vpack.c.b16 %v6006, %v6005
    %v6257 = vpack.c.b16 %v6008, %v6007
    %v6258 = vpack.c.b16 %v6010, %v6009
    %v6259 = vpack.c.b16 %v6012, %v6011
    %v6260 = vpack.c.b16 %v6014, %v6013
    %v6261 = vpack.c.b16 %v6016, %v6015
    %v6262 = vpack.c.b16 %v6018, %v6017
    %v6263 = vpack.c.b16 %v6020, %v6019
    %v6264 = vpack.c.b16 %v6022, %v6021
    %v6265 = vpack.c.b16 %v6024, %v6023
    %v6266 = vpack.c.b16 %v6026, %v6025
    %v6267 = vpack.c.b16 %v6028, %v6027
    %v6268 = vpack.c.b16 %v6030, %v6029
    %v6269 = vpack.c.b16 %v6032, %v6031
    %v6270 = vpack.c.b16 %v6034, %v6033
    %v6271 = vpack.c.b16 %v6036, %v6035
    %v6272 = vpack.c.b16 %v6038, %v6037
    %v6273 = vpack.c.b16 %v6040, %v6039
    %v6274 = vpack.c.b16 %v6042, %v6041
    %v6275 = vpack.c.b16 %v6044, %v6043
    %v6276 = vpack.c.b16 %v6046, %v6045
    %v6277 = vpack.c.b16 %v6048, %v6047
    %v6278 = vpack.c.b16 %v6050, %v6049
    %v6279 = vpack.c.b16 %v6052, %v6051
    %v6280 = vpack.c.b16 %v6054, %v6053
    %v6281 = vpack.c.b16 %v6056, %v6055
    %v6282 = vpack.c.b16 %v6058, %v6057
    %v6283 = vpack.c.b16 %v6060, %v6059
    %v6284 = vpack.c.b16 %v6062, %v6061
    %v6285 = vpack.c.b16 %v6064, %v6063
    %v6286 = vpack.c.b16 %v6066, %v6065
    %v6287 = vpack.c.b16 %v6068, %v6067
    %v6288 = vpack.c.b16 %v6070, %v6069
    %v6289 = vpack.c.b16 %v6072, %v6071
    %v6290 = vpack.c.b16 %v6074, %v6073
    %v6291 = vpack.c.b16 %v6076, %v6075
    %v6292 = vpack.c.b16 %v6078, %v6077
    %v6293 = vpack.c.b16 %v6080, %v6079
    %v6294 = vpack.c.b16 %v6082, %v6081
    %v6295 = vpack.c.b16 %v6084, %v6083
    %v6296 = vpack.c.b16 %v6086, %v6085
    %v6297 = vpack.c.b16 %v6088, %v6087
    %v6298 = vpack.c.b16 %v6090, %v6089
    %v6299 = vpack.c.b16 %v6092, %v6091
    %v6300 = vpack.c.b16 %v6094, %v6093
    %v6301 = vpack.c.b16 %v6096, %v6095
    %v6302 = vpack.c.b16 %v6098, %v6097
    %v6303 = vpack.c.b16 %v6100, %v6099
    %v6304 = vpack.c.b16 %v6102, %v6101
    %v6305 = vpack.c.b16 %v6104, %v6103
    %v6306 = vpack.c.b16 %v6106, %v6105
    %v6307 = vpack.c.b16 %v6108, %v6107
    %v6308 = vpack.c.b16 %v6110, %v6109
    %v6309 = vpack.c.b16 %v6112, %v6111
    %v6310 = vpack.c.b16 %v6114, %v6113
    %v6311 = vpack.c.b16 %v6116, %v6115
    %v6312 = vpack.c.b16 %v6118, %v6117
    %v6313 = vpack.c.b16 %v6120, %v6119
    %v6314 = vpack.c.b16 %v6122, %v6121
    %v6315 = vpack.c.b16 %v6124, %v6123
    %v6316 = vpack.c.b16 %v6126, %v6125
    %v6317 = vpack.c.b16 %v6128, %v6127
    %v6318 = vpack.c.b16 %v6130, %v6129
    %v6319 = vpack.c.b16 %v6132, %v6131
    %v6320 = vpack.c.b16 %v6134, %v6133
    %v6321 = vpack.c.b16 %v6136, %v6135
    %v6322 = vpack.c.b16 %v6138, %v6137
    %v6323 = vpack.c.b16 %v6140, %v6139
    %v6324 = vpack.c.b16 %v6142, %v6141
    %v6325 = vpack.c.b16 %v6144, %v6143
    %v6326 = vpack.c.b16 %v6146, %v6145
    %v6327 = vpack.c.b16 %v6148, %v6147
    %v6328 = vpack.c.b16 %v6150, %v6149
    %v6329 = vpack.c.b16 %v6152, %v6151
    %v6330 = vpack.c.b16 %v6154, %v6153
    %v6331 = vpack.c.b16 %v6156, %v6155
    %v6332 = vpack.c.b16 %v6158, %v6157
    %v6333 = vpack.c.b16 %v6160, %v6159
    %v6334 = vpack.c.b16 %v6162, %v6161
    %v6335 = vpack.c.b16 %v6164, %v6163
    %v6336 = vpack.c.b16 %v6166, %v6165
    %v6337 = vpack.c.b16 %v6168, %v6167
    %v6338 = vpack.c.b16 %v6170, %v6169
    %v6339 = vpack.c.b16 %v6172, %v6171
    %v6340 = vpack.c.b16 %v6174, %v6173
    %v6341 = vpack.c.b16 %v6176, %v6175
    %v6342 = vpack.c.b16 %v6178, %v6177
    %v6343 = vpack.c.b16 %v6180, %v6179
    %v6344 = vpack.c.b16 %v6182, %v6181
    %v6345 = vpack.c.b16 %v6184, %v6183
    %v6346 = vpack.c.b16 %v6186, %v6185
    %v6347 = vpack.c.b16 %v6188, %v6187
    %v6348 = vpack.c.b16 %v6190, %v6189
    %v6349 = vpack.c.b16 %v6192, %v6191
    %v6350 = vpack.c.b16 %v6194, %v6193
    %v6351 = vpack.c.b16 %v6196, %v6195
    %v6352 = vpack.c.b16 %v6198, %v6197
    %v6353 = vpack.c.b16 %v6200, %v6199
    %v6354 = vpack.c.b16 %v6202, %v6201
    %v6355 = vpack.c.b16 %v6204, %v6203
    %v6356 = vpack.c.b16 %v6206, %v6205
    %v6357 = vpack.c.b16 %v6208, %v6207
    %v6358 = vpack.c.b16 %v6210, %v6209
    %v6359 = vpack.c.b16 %v6212, %v6211
    %v6360 = vpack.c.b16 %v6214, %v6213
    %v6361 = vpack.c.b16 %v6216, %v6215
    %v6362 = vpack.c.b16 %v6218, %v6217
    %v6363 = vpack.c.b16 %v6220, %v6219
    %v6364 = vpack.c.b16 %v6222, %v6221
    %v6365 = vpack.c.b16 %v6224, %v6223
    %v6366 = vpack.c.b16 %v6226, %v6225
    %v6367 = vpack.c.b16 %v6228, %v6227
    %v6368 = vpack.c.b16 %v6230, %v6229
    %v6369 = vpack.c.b16 %v6232, %v6231
    %v6370 = vpack.c.b16 %v6234, %v6233
    %v6371 = vpack.c.b16 %v6236, %v6235
    %v6372 = vpack.c.b16 %v6238, %v6237
    %v6373 = vpack.c.b16 %v6240, %v6239
    %v6374 = vpack.c.b16 %v6242, %v6241
    %v6375 = vpack.c.b16 %v6244, %v6243
    %v6376 = vpack.c.b16 %v6246, %v6245
    %v6377 = vpack.c.b16 %v6248, %v6247
    %v6378 = vpack.c.b16 %v6250, %v6249
    %6507 = vmatpush.bf16.msra.mxu0 %v6258
    %6508 = vmatpush.bf16.msra.mxu0 %v6257
    %6509 = vmatpush.bf16.msra.mxu0 %v6256
    %6510 = vmatpush.bf16.msra.mxu0 %v6255
    %6511 = vmatpush.bf16.msra.mxu0 %v6254
    %6512 = vmatpush.bf16.msra.mxu0 %v6253
    %6513 = vmatpush.bf16.msra.mxu0 %v6252
    %6514 = vmatpush.bf16.msra.mxu0 %v6251
    %6515 = vmatmul.bf16.gmra.mxu0 %v5720
    %v6516 = vpop.f32.mrf.mxu0
    %v6517 = vadd.f32 %v5737, %v6516
    %v6518 = vpop.f32.mrf.mxu0
    %6519 = vdwg.mxu0
    %6520 = vmatpush.bf16.msra.mxu0 %v6266
    %6521 = vmatpush.bf16.msra.mxu0 %v6265
    %6522 = vmatpush.bf16.msra.mxu0 %v6264
    %6523 = vmatpush.bf16.msra.mxu0 %v6263
    %6524 = vmatpush.bf16.msra.mxu0 %v6262
    %6525 = vmatpush.bf16.msra.mxu0 %v6261
    %6526 = vmatpush.bf16.msra.mxu0 %v6260
    %6527 = vmatpush.bf16.msra.mxu0 %v6259
    %6528 = vmatmul.bf16.gmra.mxu0 %v5721
    %v6529 = vpop.f32.mrf.mxu0
    %v6530 = vadd.f32 %v6517, %v6529
    %v6531 = vpop.f32.mrf.mxu0
    %6532 = vdwg.mxu0
    %6533 = vmatpush.bf16.msra.mxu0 %v6274
    %6534 = vmatpush.bf16.msra.mxu0 %v6273
    %6535 = vmatpush.bf16.msra.mxu0 %v6272
    %6536 = vmatpush.bf16.msra.mxu0 %v6271
    %6537 = vmatpush.bf16.msra.mxu0 %v6270
    %6538 = vmatpush.bf16.msra.mxu0 %v6269
    %6539 = vmatpush.bf16.msra.mxu0 %v6268
    %6540 = vmatpush.bf16.msra.mxu0 %v6267
    %6541 = vmatmul.bf16.gmra.mxu0 %v5722
    %v6542 = vpop.f32.mrf.mxu0
    %v6543 = vadd.f32 %v6530, %v6542
    %v6544 = vpop.f32.mrf.mxu0
    %6545 = vdwg.mxu0
    %6546 = vmatpush.bf16.msra.mxu0 %v6282
    %6547 = vmatpush.bf16.msra.mxu0 %v6281
    %6548 = vmatpush.bf16.msra.mxu0 %v6280
    %6549 = vmatpush.bf16.msra.mxu0 %v6279
    %6550 = vmatpush.bf16.msra.mxu0 %v6278
    %6551 = vmatpush.bf16.msra.mxu0 %v6277
    %6552 = vmatpush.bf16.msra.mxu0 %v6276
    %6553 = vmatpush.bf16.msra.mxu0 %v6275
    %6554 = vmatmul.bf16.gmra.mxu0 %v5723
    %v6555 = vpop.f32.mrf.mxu0
    %v6556 = vadd.f32 %v6543, %v6555
    %v6557 = vpop.f32.mrf.mxu0
    %6558 = vdwg.mxu0
    %6559 = vmatpush.bf16.msra.mxu0 %v6290
    %6560 = vmatpush.bf16.msra.mxu0 %v6289
    %6561 = vmatpush.bf16.msra.mxu0 %v6288
    %6562 = vmatpush.bf16.msra.mxu0 %v6287
    %6563 = vmatpush.bf16.msra.mxu0 %v6286
    %6564 = vmatpush.bf16.msra.mxu0 %v6285
    %6565 = vmatpush.bf16.msra.mxu0 %v6284
    %6566 = vmatpush.bf16.msra.mxu0 %v6283
    %6567 = vmatmul.bf16.gmra.mxu0 %v5724
    %v6568 = vpop.f32.mrf.mxu0
    %v6569 = vadd.f32 %v6556, %v6568
    %v6570 = vpop.f32.mrf.mxu0
    %6571 = vdwg.mxu0
    %6572 = vmatpush.bf16.msra.mxu0 %v6298
    %6573 = vmatpush.bf16.msra.mxu0 %v6297
    %6574 = vmatpush.bf16.msra.mxu0 %v6296
    %6575 = vmatpush.bf16.msra.mxu0 %v6295
    %6576 = vmatpush.bf16.msra.mxu0 %v6294
    %6577 = vmatpush.bf16.msra.mxu0 %v6293
    %6578 = vmatpush.bf16.msra.mxu0 %v6292
    %6579 = vmatpush.bf16.msra.mxu0 %v6291
    %6580 = vmatmul.bf16.gmra.mxu0 %v5725
    %v6581 = vpop.f32.mrf.mxu0
    %v6582 = vadd.f32 %v6569, %v6581
    %v6583 = vpop.f32.mrf.mxu0
    %6584 = vdwg.mxu0
    %6585 = vmatpush.bf16.msra.mxu0 %v6306
    %6586 = vmatpush.bf16.msra.mxu0 %v6305
    %6587 = vmatpush.bf16.msra.mxu0 %v6304
    %6588 = vmatpush.bf16.msra.mxu0 %v6303
    %6589 = vmatpush.bf16.msra.mxu0 %v6302
    %6590 = vmatpush.bf16.msra.mxu0 %v6301
    %6591 = vmatpush.bf16.msra.mxu0 %v6300
    %6592 = vmatpush.bf16.msra.mxu0 %v6299
    %6593 = vmatmul.bf16.gmra.mxu0 %v5726
    %v6594 = vpop.f32.mrf.mxu0
    %v6595 = vadd.f32 %v6582, %v6594
    %v6596 = vpop.f32.mrf.mxu0
    %6597 = vdwg.mxu0
    %6598 = vmatpush.bf16.msra.mxu0 %v6314
    %6599 = vmatpush.bf16.msra.mxu0 %v6313
    %6600 = vmatpush.bf16.msra.mxu0 %v6312
    %6601 = vmatpush.bf16.msra.mxu0 %v6311
    %6602 = vmatpush.bf16.msra.mxu0 %v6310
    %6603 = vmatpush.bf16.msra.mxu0 %v6309
    %6604 = vmatpush.bf16.msra.mxu0 %v6308
    %6605 = vmatpush.bf16.msra.mxu0 %v6307
    %6606 = vmatmul.bf16.gmra.mxu0 %v5727
    %v6607 = vpop.f32.mrf.mxu0
    %v6608 = vadd.f32 %v6595, %v6607
    %v6609 = vpop.f32.mrf.mxu0
    %6610 = vdwg.mxu0
    %6611 = vmatpush.bf16.msra.mxu0 %v6322
    %6612 = vmatpush.bf16.msra.mxu0 %v6321
    %6613 = vmatpush.bf16.msra.mxu0 %v6320
    %6614 = vmatpush.bf16.msra.mxu0 %v6319
    %6615 = vmatpush.bf16.msra.mxu0 %v6318
    %6616 = vmatpush.bf16.msra.mxu0 %v6317
    %6617 = vmatpush.bf16.msra.mxu0 %v6316
    %6618 = vmatpush.bf16.msra.mxu0 %v6315
    %6619 = vmatmul.bf16.gmra.mxu0 %v5728
    %v6620 = vpop.f32.mrf.mxu0
    %v6621 = vadd.f32 %v6608, %v6620
    %v6622 = vpop.f32.mrf.mxu0
    %6623 = vdwg.mxu0
    %6624 = vmatpush.bf16.msra.mxu0 %v6330
    %6625 = vmatpush.bf16.msra.mxu0 %v6329
    %6626 = vmatpush.bf16.msra.mxu0 %v6328
    %6627 = vmatpush.bf16.msra.mxu0 %v6327
    %6628 = vmatpush.bf16.msra.mxu0 %v6326
    %6629 = vmatpush.bf16.msra.mxu0 %v6325
    %6630 = vmatpush.bf16.msra.mxu0 %v6324
    %6631 = vmatpush.bf16.msra.mxu0 %v6323
    %6632 = vmatmul.bf16.gmra.mxu0 %v5729
    %v6633 = vpop.f32.mrf.mxu0
    %v6634 = vadd.f32 %v6621, %v6633
    %v6635 = vpop.f32.mrf.mxu0
    %6636 = vdwg.mxu0
    %6637 = vmatpush.bf16.msra.mxu0 %v6338
    %6638 = vmatpush.bf16.msra.mxu0 %v6337
    %6639 = vmatpush.bf16.msra.mxu0 %v6336
    %6640 = vmatpush.bf16.msra.mxu0 %v6335
    %6641 = vmatpush.bf16.msra.mxu0 %v6334
    %6642 = vmatpush.bf16.msra.mxu0 %v6333
    %6643 = vmatpush.bf16.msra.mxu0 %v6332
    %6644 = vmatpush.bf16.msra.mxu0 %v6331
    %6645 = vmatmul.bf16.gmra.mxu0 %v5730
    %v6646 = vpop.f32.mrf.mxu0
    %v6647 = vadd.f32 %v6634, %v6646
    %v6648 = vpop.f32.mrf.mxu0
    %6649 = vdwg.mxu0
    %6650 = vmatpush.bf16.msra.mxu0 %v6346
    %6651 = vmatpush.bf16.msra.mxu0 %v6345
    %6652 = vmatpush.bf16.msra.mxu0 %v6344
    %6653 = vmatpush.bf16.msra.mxu0 %v6343
    %6654 = vmatpush.bf16.msra.mxu0 %v6342
    %6655 = vmatpush.bf16.msra.mxu0 %v6341
    %6656 = vmatpush.bf16.msra.mxu0 %v6340
    %6657 = vmatpush.bf16.msra.mxu0 %v6339
    %6658 = vmatmul.bf16.gmra.mxu0 %v5731
    %v6659 = vpop.f32.mrf.mxu0
    %v6660 = vadd.f32 %v6647, %v6659
    %v6661 = vpop.f32.mrf.mxu0
    %6662 = vdwg.mxu0
    %6663 = vmatpush.bf16.msra.mxu0 %v6354
    %6664 = vmatpush.bf16.msra.mxu0 %v6353
    %6665 = vmatpush.bf16.msra.mxu0 %v6352
    %6666 = vmatpush.bf16.msra.mxu0 %v6351
    %6667 = vmatpush.bf16.msra.mxu0 %v6350
    %6668 = vmatpush.bf16.msra.mxu0 %v6349
    %6669 = vmatpush.bf16.msra.mxu0 %v6348
    %6670 = vmatpush.bf16.msra.mxu0 %v6347
    %6671 = vmatmul.bf16.gmra.mxu0 %v5732
    %v6672 = vpop.f32.mrf.mxu0
    %v6673 = vadd.f32 %v6660, %v6672
    %v6674 = vpop.f32.mrf.mxu0
    %6675 = vdwg.mxu0
    %6676 = vmatpush.bf16.msra.mxu0 %v6362
    %6677 = vmatpush.bf16.msra.mxu0 %v6361
    %6678 = vmatpush.bf16.msra.mxu0 %v6360
    %6679 = vmatpush.bf16.msra.mxu0 %v6359
    %6680 = vmatpush.bf16.msra.mxu0 %v6358
    %6681 = vmatpush.bf16.msra.mxu0 %v6357
    %6682 = vmatpush.bf16.msra.mxu0 %v6356
    %6683 = vmatpush.bf16.msra.mxu0 %v6355
    %6684 = vmatmul.bf16.gmra.mxu0 %v5733
    %v6685 = vpop.f32.mrf.mxu0
    %v6686 = vadd.f32 %v6673, %v6685
    %v6687 = vpop.f32.mrf.mxu0
    %6688 = vdwg.mxu0
    %6689 = vmatpush.bf16.msra.mxu0 %v6370
    %6690 = vmatpush.bf16.msra.mxu0 %v6369
    %6691 = vmatpush.bf16.msra.mxu0 %v6368
    %6692 = vmatpush.bf16.msra.mxu0 %v6367
    %6693 = vmatpush.bf16.msra.mxu0 %v6366
    %6694 = vmatpush.bf16.msra.mxu0 %v6365
    %6695 = vmatpush.bf16.msra.mxu0 %v6364
    %6696 = vmatpush.bf16.msra.mxu0 %v6363
    %6697 = vmatmul.bf16.gmra.mxu0 %v5734
    %v6698 = vpop.f32.mrf.mxu0
    %v6699 = vadd.f32 %v6686, %v6698
    %v6700 = vpop.f32.mrf.mxu0
    %6701 = vdwg.mxu0
    %6702 = vmatpush.bf16.msra.mxu0 %v6378
    %6703 = vmatpush.bf16.msra.mxu0 %v6377
    %6704 = vmatpush.bf16.msra.mxu0 %v6376
    %6705 = vmatpush.bf16.msra.mxu0 %v6375
    %6706 = vmatpush.bf16.msra.mxu0 %v6374
    %6707 = vmatpush.bf16.msra.mxu0 %v6373
    %6708 = vmatpush.bf16.msra.mxu0 %v6372
    %6709 = vmatpush.bf16.msra.mxu0 %v6371
    %6710 = vmatmul.bf16.gmra.mxu0 %v5735
    %v6711 = vpop.f32.mrf.mxu0
    %v6712 = vadd.f32 %v6699, %v6711
    %v6713 = vpop.f32.mrf.mxu0
    %6714 = vdwg.mxu0
    %vm6715 = vcmask 130048
    %6716 = vst.msk [vmem:[#allocation16] sm:$0xff] %vm6715, %v6712
    // Predicated region
    $region70: #{tpu_custom_call.1} parent=1 // pred_check
      _
    $region71: #{tpu_custom_call.1} parent=1 // pred_check_branch
      %6718 = sbr.rel (0) target = $region73
    $region72: #{tpu_custom_call.1} parent=1 // pred_region
      %6720 = vsyncadd [#allocation4], 0
      %s6722 = sshll.u32 [#allocation16], 4
      %s6723 = int_to_ptr.vmem [resolvable:$true] %s6722
      %s6724 = sshll.u32 %s9, 4
      %s6725 = int_to_ptr.hbm [resolvable:$true] %s6724
      %6727 = dma.vmem_to_hbm [thread:$0]  %s6723, 128, %s6725, [#allocation4]
    $region73: #{tpu_custom_call.1} parent=1 // pred_fallthru
      _
    // Predicated region
    $region74: #{tpu_custom_call.1} parent=1 // pred_check
      _
    $region75: #{tpu_custom_call.1} parent=1 // pred_check_branch
      %6729 = sbr.rel (0) target = $region77
    $region76: #{tpu_custom_call.1} parent=1 // pred_region
      %6731 = dma.done [#allocation4], 128
    $region77: #{tpu_custom_call.1} parent=1 // pred_fallthru
      _
    %6732 = vsyncpa [#allocation3], 1
    %6733 = vsyncpa [#allocation6], 1
    %6734 = vsyncpa [#allocation9], 1
    %6735 = vsyncpa [#allocation12], 1
    %6736 = vsyncpa [#allocation15], 1
    %6737 = vsyncpa [#allocation4], 1

</llo_original>
